<compile_context>
chip_gen: v5e
topology: v5e:2x2
jax: 0.10.0
libtpu: 0.0.40
codegen_flags: <defaults>
</compile_context>

<pallas_src>
import functools

import jax
import jax.numpy as jnp
import numpy as np
from jax.experimental import pallas as pl
from jax.experimental.pallas import tpu as pltpu


def _round_up(a, b):
    return (a + b - 1) // b * b


def _spatial_attention_kernel(x_ref, w_ref, o_ref, pad_ref, shift_ref, *, ksize, pad):
    # x_ref    : (TB, C, H, W)   VMEM - TB batch elements of the NCHW input
    # w_ref    : (2*K*K,)        SMEM - flattened conv weight, order [c, dy, dx]
    # o_ref    : (TB, H, W)      VMEM - TB batch elements of the (N,1,H,W) output
    # pad_ref  : (2, TB, Hp, Wc) VMEM - zero-padded avg/max canvases (lane-dense)
    # shift_ref: (2, TB, Hp, Wc) VMEM - dx-shifted canvases, rewritten per dx
    TB, C, H, W = x_ref.shape
    _, _, Hp, Wc = pad_ref.shape

    x = x_ref[...]
    # Channel mean (accumulated in f32) and channel max (exact in native dtype).
    avg = jnp.mean(x, axis=1, dtype=jnp.float32)              # (TB, H, W)
    mx = jnp.max(x, axis=1).astype(jnp.float32)               # (TB, H, W)

    # Zero the canvases, then write the two descriptor maps into the interior:
    # rows [pad, pad+H) hold data columns [0, W); everything else stays zero, so
    # the canvas *is* the vertically padded map. Horizontal padding is realized by
    # the lane roll below, whose wrap-around lands in guaranteed-zero columns.
    pad_ref[...] = jnp.zeros(pad_ref.shape, jnp.float32)
    pad_ref[0, :, pad:pad + H, 0:W] = avg
    pad_ref[1, :, pad:pad + H, 0:W] = mx

    # Load both canvases once (layout-preserving collapse of the leading dims).
    can = pad_ref[...].reshape(2 * TB * Hp, Wc)

    acc = jnp.zeros((TB, H, Wc), jnp.float32)
    for dx in range(ksize):
        # rolled[., x] == padded_map[., x + dx]; wrap-around only touches columns
        # that are zero for the x < W region (guaranteed since Wc >= W + 2*pad).
        s = (pad - dx) % Wc
        rolled = can if s == 0 else pltpu.roll(can, shift=s, axis=1)
        shift_ref[...] = rolled.reshape(2, TB, Hp, Wc)
        for dy in range(ksize):
            w_avg = w_ref[(0 * ksize + dy) * ksize + dx]      # channel 0 = avg
            w_max = w_ref[(1 * ksize + dy) * ksize + dx]      # channel 1 = max
            a = shift_ref[0, :, dy:dy + H, :]                 # (TB, H, Wc)
            m = shift_ref[1, :, dy:dy + H, :]
            acc = acc + (w_avg * a + w_max * m)               # fused 2-channel MAC

    o_ref[...] = jax.nn.sigmoid(acc[:, :, 0:W]).astype(o_ref.dtype)


def spatial_attention(x, weight, kernel_size=7):
    """x: (N, C, H, W); weight: (1, 2, K, K); returns (N, 1, H, W)."""
    assert kernel_size in (3, 7), "kernel size must be 3 or 7"
    pad = 3 if kernel_size == 7 else 1
    N, C, H, W = x.shape
    K = kernel_size

    # Lane-dense padded canvas: sublane dim rounded to 8, lane dim to 128.
    Hp = _round_up(H + 2 * pad, 8)
    Wc = _round_up(W + 2 * pad, 128)
    # TODO(synk): for very large C*H*W (v7x's 64 MiB VMEM) add a C-tile grid axis
    # with running mean/max accumulators instead of loading the full channel block.

    # Batch tile: as many images per grid step as fit a conservative VMEM budget
    # (input/output blocks are double-buffered by the pipeline; canvases are scratch).
    itemsize = jnp.dtype(x.dtype).itemsize
    per_image = (2 * C * H * W * itemsize          # double-buffered input block
                 + 2 * H * W * itemsize            # double-buffered output block
                 + 2 * 2 * Hp * Wc * 4)            # pad + shift f32 canvases
    budget = 16 * 1024 * 1024
    tb = max(1, min(N, budget // max(per_image, 1)))
    while N % tb:
        tb -= 1

    w_flat = weight.reshape(-1).astype(jnp.float32)           # (2*K*K,)
    kernel = functools.partial(_spatial_attention_kernel, ksize=K, pad=pad)

    return pl.pallas_call(
        kernel,
        out_shape=jax.ShapeDtypeStruct((N, 1, H, W), x.dtype),
        grid=(N // tb,),
        in_specs=[
            # TB batch elements per grid step, full (C, H, W) block each.
            pl.BlockSpec((tb, C, H, W), lambda i: (i, 0, 0, 0)),
            # Flattened conv weights live in SMEM (cheap scalar reads).
            pl.BlockSpec(memory_space=pltpu.MemorySpace.SMEM),
        ],
        out_specs=pl.BlockSpec((tb, None, H, W), lambda i: (i, 0, 0, 0)),
        scratch_shapes=[
            pltpu.VMEM((2, tb, Hp, Wc), jnp.float32),   # padded avg/max canvases
            pltpu.VMEM((2, tb, Hp, Wc), jnp.float32),   # dx-shifted canvases
        ],
        compiler_params=pltpu.CompilerParams(
            dimension_semantics=("parallel",),
            vmem_limit_bytes=32 * 1024 * 1024,
        ),
    )(x, w_flat)


if __name__ == "__main__":
    key = jax.random.PRNGKey(0)
    kx, kw = jax.random.split(key)

    N, C, H, W = 2, 4, 16, 16
    K = 7
    x = jax.random.normal(kx, (N, C, H, W), dtype=jnp.float32)

    # Deterministic init mimicking PyTorch Conv2d default (kaiming-uniform bound).
    fan_in = 2 * K * K
    bound = 1.0 / np.sqrt(fan_in)
    weight = jax.random.uniform(kw, (1, 2, K, K), jnp.float32, -bound, bound)

    out = spatial_attention(x, weight, kernel_size=K)
    out = jax.block_until_ready(out)

    # Pure-JAX reference for validation.
    avg = jnp.mean(x, axis=1, keepdims=True)
    mx = jnp.max(x, axis=1, keepdims=True)
    inp = jnp.concatenate([avg, mx], axis=1)
    ref = jax.lax.conv_general_dilated(
        inp, weight, window_strides=(1, 1), padding=[(3, 3), (3, 3)],
        dimension_numbers=("NCHW", "OIHW", "NCHW"))
    ref = jax.nn.sigmoid(ref)

    assert out.shape == (N, 1, H, W)
    if not np.allclose(np.asarray(out), np.asarray(ref), atol=1e-5, rtol=1e-5):
        raise SystemExit("mismatch between Pallas kernel and JAX reference")

    print("KERNEL_OK")
</pallas_src>

<mosaic_0001>
module attributes {stable_mosaic.version = 11 : i64} {
  func.func @_spatial_attention_kernel(%arg0: i32, %arg1: memref<2x4x16x16xf32, #tpu.memory_space<vmem>>, %arg2: memref<98xf32, #tpu.memory_space<smem>>, %arg3: memref<2x1x16x16xf32, #tpu.memory_space<vmem>>, %arg4: memref<2x2x24x128xf32, #tpu.memory_space<vmem>>, %arg5: memref<2x2x24x128xf32, #tpu.memory_space<vmem>>) attributes {dimension_semantics = [#tpu.dimension_semantics<parallel>], iteration_bounds = array<i64: 1>, scalar_prefetch = 0 : i64, scratch_operands = 2 : i64, tpu.core_type = #tpu.core_type<tc>, window_params = [{transform_indices = @transform_0, window_bounds = array<i64: 2, 4, 16, 16>}, {transform_indices = @transform_1, window_bounds = array<i64: 98>}, {transform_indices = @transform_2, window_bounds = array<i64: 2, 1, 16, 16>}]} {
    %c0 = arith.constant 0 : index
    %c0_0 = arith.constant 0 : index
    %c0_1 = arith.constant 0 : index
    %c0_2 = arith.constant 0 : index
    %0 = vector.load %arg1[%c0, %c0_0, %c0_1, %c0_2] : memref<2x4x16x16xf32, #tpu.memory_space<vmem>>, vector<2x4x16x16xf32>
    %cst = arith.constant dense<0.000000e+00> : vector<2x16x16xf32>
    %1 = vector.multi_reduction <add>, %0, %cst [1] : vector<2x4x16x16xf32> to vector<2x16x16xf32>
    %cst_3 = arith.constant 4.000000e+00 : f32
    %2 = vector.broadcast %cst_3 : f32 to vector<2x16x16xf32>
    %3 = arith.divf %1, %2 : vector<2x16x16xf32>
    %cst_4 = arith.constant dense<0xFF800000> : vector<2x16x16xf32>
    %4 = vector.multi_reduction <maximumf>, %0, %cst_4 [1] : vector<2x4x16x16xf32> to vector<2x16x16xf32>
    %cst_5 = arith.constant 0.000000e+00 : f32
    %5 = vector.broadcast %cst_5 : f32 to vector<2x2x24x128xf32>
    %c0_6 = arith.constant 0 : index
    %c0_7 = arith.constant 0 : index
    %c0_8 = arith.constant 0 : index
    %c0_9 = arith.constant 0 : index
    %6 = vector.load %arg4[%c0_6, %c0_7, %c0_8, %c0_9] : memref<2x2x24x128xf32, #tpu.memory_space<vmem>>, vector<2x2x24x128xf32>
    tpu.vector_store %arg4[%c0_6, %c0_7, %c0_8, %c0_9], %5 {strides = array<i32>} : memref<2x2x24x128xf32, #tpu.memory_space<vmem>>, vector<2x2x24x128xf32>,
    %c0_10 = arith.constant 0 : index
    %c0_11 = arith.constant 0 : index
    %c3 = arith.constant 3 : index
    %c0_12 = arith.constant 0 : index
    %7 = vector.load %arg4[%c0_10, %c0_11, %c3, %c0_12] : memref<2x2x24x128xf32, #tpu.memory_space<vmem>>, vector<1x2x16x16xf32>
    %8 = vector.shape_cast %7 : vector<1x2x16x16xf32> to vector<2x16x16xf32>
    %9 = vector.shape_cast %3 : vector<2x16x16xf32> to vector<1x2x16x16xf32>
    tpu.vector_store %arg4[%c0_10, %c0_11, %c3, %c0_12], %9 {strides = array<i32>} : memref<2x2x24x128xf32, #tpu.memory_space<vmem>>, vector<1x2x16x16xf32>,
    %c1 = arith.constant 1 : index
    %c0_13 = arith.constant 0 : index
    %c3_14 = arith.constant 3 : index
    %c0_15 = arith.constant 0 : index
    %10 = vector.load %arg4[%c1, %c0_13, %c3_14, %c0_15] : memref<2x2x24x128xf32, #tpu.memory_space<vmem>>, vector<1x2x16x16xf32>
    %11 = vector.shape_cast %10 : vector<1x2x16x16xf32> to vector<2x16x16xf32>
    %12 = vector.shape_cast %4 : vector<2x16x16xf32> to vector<1x2x16x16xf32>
    tpu.vector_store %arg4[%c1, %c0_13, %c3_14, %c0_15], %12 {strides = array<i32>} : memref<2x2x24x128xf32, #tpu.memory_space<vmem>>, vector<1x2x16x16xf32>,
    %c0_16 = arith.constant 0 : index
    %c0_17 = arith.constant 0 : index
    %c0_18 = arith.constant 0 : index
    %c0_19 = arith.constant 0 : index
    %13 = vector.load %arg4[%c0_16, %c0_17, %c0_18, %c0_19] : memref<2x2x24x128xf32, #tpu.memory_space<vmem>>, vector<2x2x24x128xf32>
    %14 = vector.shape_cast %13 : vector<2x2x24x128xf32> to vector<96x128xf32>
    %cst_20 = arith.constant 0.000000e+00 : f32
    %15 = vector.broadcast %cst_20 : f32 to vector<2x16x128xf32>
    %c3_i32 = arith.constant 3 : i32
    %16 = tpu.dynamic_rotate %14 by %c3_i32 dim 1 : vector<96x128xf32>, i32 -> vector<96x128xf32>
    %17 = vector.shape_cast %16 : vector<96x128xf32> to vector<2x2x24x128xf32>
    %c0_21 = arith.constant 0 : index
    %c0_22 = arith.constant 0 : index
    %c0_23 = arith.constant 0 : index
    %c0_24 = arith.constant 0 : index
    %18 = vector.load %arg5[%c0_21, %c0_22, %c0_23, %c0_24] : memref<2x2x24x128xf32, #tpu.memory_space<vmem>>, vector<2x2x24x128xf32>
    tpu.vector_store %arg5[%c0_21, %c0_22, %c0_23, %c0_24], %17 {strides = array<i32>} : memref<2x2x24x128xf32, #tpu.memory_space<vmem>>, vector<2x2x24x128xf32>,
    %c0_25 = arith.constant 0 : index
    %19 = memref.load %arg2[%c0_25] : memref<98xf32, #tpu.memory_space<smem>>
    %c49 = arith.constant 49 : index
    %20 = memref.load %arg2[%c49] : memref<98xf32, #tpu.memory_space<smem>>
    %c0_26 = arith.constant 0 : index
    %c0_27 = arith.constant 0 : index
    %c0_28 = arith.constant 0 : index
    %c0_29 = arith.constant 0 : index
    %21 = vector.load %arg5[%c0_26, %c0_27, %c0_28, %c0_29] : memref<2x2x24x128xf32, #tpu.memory_space<vmem>>, vector<1x2x16x128xf32>
    %22 = vector.shape_cast %21 : vector<1x2x16x128xf32> to vector<2x16x128xf32>
    %c1_30 = arith.constant 1 : index
    %c0_31 = arith.constant 0 : index
    %c0_32 = arith.constant 0 : index
    %c0_33 = arith.constant 0 : index
    %23 = vector.load %arg5[%c1_30, %c0_31, %c0_32, %c0_33] : memref<2x2x24x128xf32, #tpu.memory_space<vmem>>, vector<1x2x16x128xf32>
    %24 = vector.shape_cast %23 : vector<1x2x16x128xf32> to vector<2x16x128xf32>
    %25 = vector.broadcast %19 : f32 to vector<2x16x128xf32>
    %26 = arith.mulf %25, %22 : vector<2x16x128xf32>
    %27 = vector.broadcast %20 : f32 to vector<2x16x128xf32>
    %28 = arith.mulf %27, %24 : vector<2x16x128xf32>
    %29 = arith.addf %26, %28 : vector<2x16x128xf32>
    %30 = arith.addf %15, %29 : vector<2x16x128xf32>
    %c7 = arith.constant 7 : index
    %31 = memref.load %arg2[%c7] : memref<98xf32, #tpu.memory_space<smem>>
    %c56 = arith.constant 56 : index
    %32 = memref.load %arg2[%c56] : memref<98xf32, #tpu.memory_space<smem>>
    %c0_34 = arith.constant 0 : index
    %c0_35 = arith.constant 0 : index
    %c1_36 = arith.constant 1 : index
    %c0_37 = arith.constant 0 : index
    %33 = vector.load %arg5[%c0_34, %c0_35, %c1_36, %c0_37] : memref<2x2x24x128xf32, #tpu.memory_space<vmem>>, vector<1x2x16x128xf32>
    %34 = vector.shape_cast %33 : vector<1x2x16x128xf32> to vector<2x16x128xf32>
    %c1_38 = arith.constant 1 : index
    %c0_39 = arith.constant 0 : index
    %c1_40 = arith.constant 1 : index
    %c0_41 = arith.constant 0 : index
    %35 = vector.load %arg5[%c1_38, %c0_39, %c1_40, %c0_41] : memref<2x2x24x128xf32, #tpu.memory_space<vmem>>, vector<1x2x16x128xf32>
    %36 = vector.shape_cast %35 : vector<1x2x16x128xf32> to vector<2x16x128xf32>
    %37 = vector.broadcast %31 : f32 to vector<2x16x128xf32>
    %38 = arith.mulf %37, %34 : vector<2x16x128xf32>
    %39 = vector.broadcast %32 : f32 to vector<2x16x128xf32>
    %40 = arith.mulf %39, %36 : vector<2x16x128xf32>
    %41 = arith.addf %38, %40 : vector<2x16x128xf32>
    %42 = arith.addf %30, %41 : vector<2x16x128xf32>
    %c14 = arith.constant 14 : index
    %43 = memref.load %arg2[%c14] : memref<98xf32, #tpu.memory_space<smem>>
    %c63 = arith.constant 63 : index
    %44 = memref.load %arg2[%c63] : memref<98xf32, #tpu.memory_space<smem>>
    %c0_42 = arith.constant 0 : index
    %c0_43 = arith.constant 0 : index
    %c2 = arith.constant 2 : index
    %c0_44 = arith.constant 0 : index
    %45 = vector.load %arg5[%c0_42, %c0_43, %c2, %c0_44] : memref<2x2x24x128xf32, #tpu.memory_space<vmem>>, vector<1x2x16x128xf32>
    %46 = vector.shape_cast %45 : vector<1x2x16x128xf32> to vector<2x16x128xf32>
    %c1_45 = arith.constant 1 : index
    %c0_46 = arith.constant 0 : index
    %c2_47 = arith.constant 2 : index
    %c0_48 = arith.constant 0 : index
    %47 = vector.load %arg5[%c1_45, %c0_46, %c2_47, %c0_48] : memref<2x2x24x128xf32, #tpu.memory_space<vmem>>, vector<1x2x16x128xf32>
    %48 = vector.shape_cast %47 : vector<1x2x16x128xf32> to vector<2x16x128xf32>
    %49 = vector.broadcast %43 : f32 to vector<2x16x128xf32>
    %50 = arith.mulf %49, %46 : vector<2x16x128xf32>
    %51 = vector.broadcast %44 : f32 to vector<2x16x128xf32>
    %52 = arith.mulf %51, %48 : vector<2x16x128xf32>
    %53 = arith.addf %50, %52 : vector<2x16x128xf32>
    %54 = arith.addf %42, %53 : vector<2x16x128xf32>
    %c21 = arith.constant 21 : index
    %55 = memref.load %arg2[%c21] : memref<98xf32, #tpu.memory_space<smem>>
    %c70 = arith.constant 70 : index
    %56 = memref.load %arg2[%c70] : memref<98xf32, #tpu.memory_space<smem>>
    %c0_49 = arith.constant 0 : index
    %c0_50 = arith.constant 0 : index
    %c3_51 = arith.constant 3 : index
    %c0_52 = arith.constant 0 : index
    %57 = vector.load %arg5[%c0_49, %c0_50, %c3_51, %c0_52] : memref<2x2x24x128xf32, #tpu.memory_space<vmem>>, vector<1x2x16x128xf32>
    %58 = vector.shape_cast %57 : vector<1x2x16x128xf32> to vector<2x16x128xf32>
    %c1_53 = arith.constant 1 : index
    %c0_54 = arith.constant 0 : index
    %c3_55 = arith.constant 3 : index
    %c0_56 = arith.constant 0 : index
    %59 = vector.load %arg5[%c1_53, %c0_54, %c3_55, %c0_56] : memref<2x2x24x128xf32, #tpu.memory_space<vmem>>, vector<1x2x16x128xf32>
    %60 = vector.shape_cast %59 : vector<1x2x16x128xf32> to vector<2x16x128xf32>
    %61 = vector.broadcast %55 : f32 to vector<2x16x128xf32>
    %62 = arith.mulf %61, %58 : vector<2x16x128xf32>
    %63 = vector.broadcast %56 : f32 to vector<2x16x128xf32>
    %64 = arith.mulf %63, %60 : vector<2x16x128xf32>
    %65 = arith.addf %62, %64 : vector<2x16x128xf32>
    %66 = arith.addf %54, %65 : vector<2x16x128xf32>
    %c28 = arith.constant 28 : index
    %67 = memref.load %arg2[%c28] : memref<98xf32, #tpu.memory_space<smem>>
    %c77 = arith.constant 77 : index
    %68 = memref.load %arg2[%c77] : memref<98xf32, #tpu.memory_space<smem>>
    %c0_57 = arith.constant 0 : index
    %c0_58 = arith.constant 0 : index
    %c4 = arith.constant 4 : index
    %c0_59 = arith.constant 0 : index
    %69 = vector.load %arg5[%c0_57, %c0_58, %c4, %c0_59] : memref<2x2x24x128xf32, #tpu.memory_space<vmem>>, vector<1x2x16x128xf32>
    %70 = vector.shape_cast %69 : vector<1x2x16x128xf32> to vector<2x16x128xf32>
    %c1_60 = arith.constant 1 : index
    %c0_61 = arith.constant 0 : index
    %c4_62 = arith.constant 4 : index
    %c0_63 = arith.constant 0 : index
    %71 = vector.load %arg5[%c1_60, %c0_61, %c4_62, %c0_63] : memref<2x2x24x128xf32, #tpu.memory_space<vmem>>, vector<1x2x16x128xf32>
    %72 = vector.shape_cast %71 : vector<1x2x16x128xf32> to vector<2x16x128xf32>
    %73 = vector.broadcast %67 : f32 to vector<2x16x128xf32>
    %74 = arith.mulf %73, %70 : vector<2x16x128xf32>
    %75 = vector.broadcast %68 : f32 to vector<2x16x128xf32>
    %76 = arith.mulf %75, %72 : vector<2x16x128xf32>
    %77 = arith.addf %74, %76 : vector<2x16x128xf32>
    %78 = arith.addf %66, %77 : vector<2x16x128xf32>
    %c35 = arith.constant 35 : index
    %79 = memref.load %arg2[%c35] : memref<98xf32, #tpu.memory_space<smem>>
    %c84 = arith.constant 84 : index
    %80 = memref.load %arg2[%c84] : memref<98xf32, #tpu.memory_space<smem>>
    %c0_64 = arith.constant 0 : index
    %c0_65 = arith.constant 0 : index
    %c5 = arith.constant 5 : index
    %c0_66 = arith.constant 0 : index
    %81 = vector.load %arg5[%c0_64, %c0_65, %c5, %c0_66] : memref<2x2x24x128xf32, #tpu.memory_space<vmem>>, vector<1x2x16x128xf32>
    %82 = vector.shape_cast %81 : vector<1x2x16x128xf32> to vector<2x16x128xf32>
    %c1_67 = arith.constant 1 : index
    %c0_68 = arith.constant 0 : index
    %c5_69 = arith.constant 5 : index
    %c0_70 = arith.constant 0 : index
    %83 = vector.load %arg5[%c1_67, %c0_68, %c5_69, %c0_70] : memref<2x2x24x128xf32, #tpu.memory_space<vmem>>, vector<1x2x16x128xf32>
    %84 = vector.shape_cast %83 : vector<1x2x16x128xf32> to vector<2x16x128xf32>
    %85 = vector.broadcast %79 : f32 to vector<2x16x128xf32>
    %86 = arith.mulf %85, %82 : vector<2x16x128xf32>
    %87 = vector.broadcast %80 : f32 to vector<2x16x128xf32>
    %88 = arith.mulf %87, %84 : vector<2x16x128xf32>
    %89 = arith.addf %86, %88 : vector<2x16x128xf32>
    %90 = arith.addf %78, %89 : vector<2x16x128xf32>
    %c42 = arith.constant 42 : index
    %91 = memref.load %arg2[%c42] : memref<98xf32, #tpu.memory_space<smem>>
    %c91 = arith.constant 91 : index
    %92 = memref.load %arg2[%c91] : memref<98xf32, #tpu.memory_space<smem>>
    %c0_71 = arith.constant 0 : index
    %c0_72 = arith.constant 0 : index
    %c6 = arith.constant 6 : index
    %c0_73 = arith.constant 0 : index
    %93 = vector.load %arg5[%c0_71, %c0_72, %c6, %c0_73] : memref<2x2x24x128xf32, #tpu.memory_space<vmem>>, vector<1x2x16x128xf32>
    %94 = vector.shape_cast %93 : vector<1x2x16x128xf32> to vector<2x16x128xf32>
    %c1_74 = arith.constant 1 : index
    %c0_75 = arith.constant 0 : index
    %c6_76 = arith.constant 6 : index
    %c0_77 = arith.constant 0 : index
    %95 = vector.load %arg5[%c1_74, %c0_75, %c6_76, %c0_77] : memref<2x2x24x128xf32, #tpu.memory_space<vmem>>, vector<1x2x16x128xf32>
    %96 = vector.shape_cast %95 : vector<1x2x16x128xf32> to vector<2x16x128xf32>
    %97 = vector.broadcast %91 : f32 to vector<2x16x128xf32>
    %98 = arith.mulf %97, %94 : vector<2x16x128xf32>
    %99 = vector.broadcast %92 : f32 to vector<2x16x128xf32>
    %100 = arith.mulf %99, %96 : vector<2x16x128xf32>
    %101 = arith.addf %98, %100 : vector<2x16x128xf32>
    %102 = arith.addf %90, %101 : vector<2x16x128xf32>
    %c2_i32 = arith.constant 2 : i32
    %103 = tpu.dynamic_rotate %14 by %c2_i32 dim 1 : vector<96x128xf32>, i32 -> vector<96x128xf32>
    %104 = vector.shape_cast %103 : vector<96x128xf32> to vector<2x2x24x128xf32>
    %c0_78 = arith.constant 0 : index
    %c0_79 = arith.constant 0 : index
    %c0_80 = arith.constant 0 : index
    %c0_81 = arith.constant 0 : index
    %105 = vector.load %arg5[%c0_78, %c0_79, %c0_80, %c0_81] : memref<2x2x24x128xf32, #tpu.memory_space<vmem>>, vector<2x2x24x128xf32>
    tpu.vector_store %arg5[%c0_78, %c0_79, %c0_80, %c0_81], %104 {strides = array<i32>} : memref<2x2x24x128xf32, #tpu.memory_space<vmem>>, vector<2x2x24x128xf32>,
    %c1_82 = arith.constant 1 : index
    %106 = memref.load %arg2[%c1_82] : memref<98xf32, #tpu.memory_space<smem>>
    %c50 = arith.constant 50 : index
    %107 = memref.load %arg2[%c50] : memref<98xf32, #tpu.memory_space<smem>>
    %c0_83 = arith.constant 0 : index
    %c0_84 = arith.constant 0 : index
    %c0_85 = arith.constant 0 : index
    %c0_86 = arith.constant 0 : index
    %108 = vector.load %arg5[%c0_83, %c0_84, %c0_85, %c0_86] : memref<2x2x24x128xf32, #tpu.memory_space<vmem>>, vector<1x2x16x128xf32>
    %109 = vector.shape_cast %108 : vector<1x2x16x128xf32> to vector<2x16x128xf32>
    %c1_87 = arith.constant 1 : index
    %c0_88 = arith.constant 0 : index
    %c0_89 = arith.constant 0 : index
    %c0_90 = arith.constant 0 : index
    %110 = vector.load %arg5[%c1_87, %c0_88, %c0_89, %c0_90] : memref<2x2x24x128xf32, #tpu.memory_space<vmem>>, vector<1x2x16x128xf32>
    %111 = vector.shape_cast %110 : vector<1x2x16x128xf32> to vector<2x16x128xf32>
    %112 = vector.broadcast %106 : f32 to vector<2x16x128xf32>
    %113 = arith.mulf %112, %109 : vector<2x16x128xf32>
    %114 = vector.broadcast %107 : f32 to vector<2x16x128xf32>
    %115 = arith.mulf %114, %111 : vector<2x16x128xf32>
    %116 = arith.addf %113, %115 : vector<2x16x128xf32>
    %117 = arith.addf %102, %116 : vector<2x16x128xf32>
    %c8 = arith.constant 8 : index
    %118 = memref.load %arg2[%c8] : memref<98xf32, #tpu.memory_space<smem>>
    %c57 = arith.constant 57 : index
    %119 = memref.load %arg2[%c57] : memref<98xf32, #tpu.memory_space<smem>>
    %c0_91 = arith.constant 0 : index
    %c0_92 = arith.constant 0 : index
    %c1_93 = arith.constant 1 : index
    %c0_94 = arith.constant 0 : index
    %120 = vector.load %arg5[%c0_91, %c0_92, %c1_93, %c0_94] : memref<2x2x24x128xf32, #tpu.memory_space<vmem>>, vector<1x2x16x128xf32>
    %121 = vector.shape_cast %120 : vector<1x2x16x128xf32> to vector<2x16x128xf32>
    %c1_95 = arith.constant 1 : index
    %c0_96 = arith.constant 0 : index
    %c1_97 = arith.constant 1 : index
    %c0_98 = arith.constant 0 : index
    %122 = vector.load %arg5[%c1_95, %c0_96, %c1_97, %c0_98] : memref<2x2x24x128xf32, #tpu.memory_space<vmem>>, vector<1x2x16x128xf32>
    %123 = vector.shape_cast %122 : vector<1x2x16x128xf32> to vector<2x16x128xf32>
    %124 = vector.broadcast %118 : f32 to vector<2x16x128xf32>
    %125 = arith.mulf %124, %121 : vector<2x16x128xf32>
    %126 = vector.broadcast %119 : f32 to vector<2x16x128xf32>
    %127 = arith.mulf %126, %123 : vector<2x16x128xf32>
    %128 = arith.addf %125, %127 : vector<2x16x128xf32>
    %129 = arith.addf %117, %128 : vector<2x16x128xf32>
    %c15 = arith.constant 15 : index
    %130 = memref.load %arg2[%c15] : memref<98xf32, #tpu.memory_space<smem>>
    %c64 = arith.constant 64 : index
    %131 = memref.load %arg2[%c64] : memref<98xf32, #tpu.memory_space<smem>>
    %c0_99 = arith.constant 0 : index
    %c0_100 = arith.constant 0 : index
    %c2_101 = arith.constant 2 : index
    %c0_102 = arith.constant 0 : index
    %132 = vector.load %arg5[%c0_99, %c0_100, %c2_101, %c0_102] : memref<2x2x24x128xf32, #tpu.memory_space<vmem>>, vector<1x2x16x128xf32>
    %133 = vector.shape_cast %132 : vector<1x2x16x128xf32> to vector<2x16x128xf32>
    %c1_103 = arith.constant 1 : index
    %c0_104 = arith.constant 0 : index
    %c2_105 = arith.constant 2 : index
    %c0_106 = arith.constant 0 : index
    %134 = vector.load %arg5[%c1_103, %c0_104, %c2_105, %c0_106] : memref<2x2x24x128xf32, #tpu.memory_space<vmem>>, vector<1x2x16x128xf32>
    %135 = vector.shape_cast %134 : vector<1x2x16x128xf32> to vector<2x16x128xf32>
    %136 = vector.broadcast %130 : f32 to vector<2x16x128xf32>
    %137 = arith.mulf %136, %133 : vector<2x16x128xf32>
    %138 = vector.broadcast %131 : f32 to vector<2x16x128xf32>
    %139 = arith.mulf %138, %135 : vector<2x16x128xf32>
    %140 = arith.addf %137, %139 : vector<2x16x128xf32>
    %141 = arith.addf %129, %140 : vector<2x16x128xf32>
    %c22 = arith.constant 22 : index
    %142 = memref.load %arg2[%c22] : memref<98xf32, #tpu.memory_space<smem>>
    %c71 = arith.constant 71 : index
    %143 = memref.load %arg2[%c71] : memref<98xf32, #tpu.memory_space<smem>>
    %c0_107 = arith.constant 0 : index
    %c0_108 = arith.constant 0 : index
    %c3_109 = arith.constant 3 : index
    %c0_110 = arith.constant 0 : index
    %144 = vector.load %arg5[%c0_107, %c0_108, %c3_109, %c0_110] : memref<2x2x24x128xf32, #tpu.memory_space<vmem>>, vector<1x2x16x128xf32>
    %145 = vector.shape_cast %144 : vector<1x2x16x128xf32> to vector<2x16x128xf32>
    %c1_111 = arith.constant 1 : index
    %c0_112 = arith.constant 0 : index
    %c3_113 = arith.constant 3 : index
    %c0_114 = arith.constant 0 : index
    %146 = vector.load %arg5[%c1_111, %c0_112, %c3_113, %c0_114] : memref<2x2x24x128xf32, #tpu.memory_space<vmem>>, vector<1x2x16x128xf32>
    %147 = vector.shape_cast %146 : vector<1x2x16x128xf32> to vector<2x16x128xf32>
    %148 = vector.broadcast %142 : f32 to vector<2x16x128xf32>
    %149 = arith.mulf %148, %145 : vector<2x16x128xf32>
    %150 = vector.broadcast %143 : f32 to vector<2x16x128xf32>
    %151 = arith.mulf %150, %147 : vector<2x16x128xf32>
    %152 = arith.addf %149, %151 : vector<2x16x128xf32>
    %153 = arith.addf %141, %152 : vector<2x16x128xf32>
    %c29 = arith.constant 29 : index
    %154 = memref.load %arg2[%c29] : memref<98xf32, #tpu.memory_space<smem>>
    %c78 = arith.constant 78 : index
    %155 = memref.load %arg2[%c78] : memref<98xf32, #tpu.memory_space<smem>>
    %c0_115 = arith.constant 0 : index
    %c0_116 = arith.constant 0 : index
    %c4_117 = arith.constant 4 : index
    %c0_118 = arith.constant 0 : index
    %156 = vector.load %arg5[%c0_115, %c0_116, %c4_117, %c0_118] : memref<2x2x24x128xf32, #tpu.memory_space<vmem>>, vector<1x2x16x128xf32>
    %157 = vector.shape_cast %156 : vector<1x2x16x128xf32> to vector<2x16x128xf32>
    %c1_119 = arith.constant 1 : index
    %c0_120 = arith.constant 0 : index
    %c4_121 = arith.constant 4 : index
    %c0_122 = arith.constant 0 : index
    %158 = vector.load %arg5[%c1_119, %c0_120, %c4_121, %c0_122] : memref<2x2x24x128xf32, #tpu.memory_space<vmem>>, vector<1x2x16x128xf32>
    %159 = vector.shape_cast %158 : vector<1x2x16x128xf32> to vector<2x16x128xf32>
    %160 = vector.broadcast %154 : f32 to vector<2x16x128xf32>
    %161 = arith.mulf %160, %157 : vector<2x16x128xf32>
    %162 = vector.broadcast %155 : f32 to vector<2x16x128xf32>
    %163 = arith.mulf %162, %159 : vector<2x16x128xf32>
    %164 = arith.addf %161, %163 : vector<2x16x128xf32>
    %165 = arith.addf %153, %164 : vector<2x16x128xf32>
    %c36 = arith.constant 36 : index
    %166 = memref.load %arg2[%c36] : memref<98xf32, #tpu.memory_space<smem>>
    %c85 = arith.constant 85 : index
    %167 = memref.load %arg2[%c85] : memref<98xf32, #tpu.memory_space<smem>>
    %c0_123 = arith.constant 0 : index
    %c0_124 = arith.constant 0 : index
    %c5_125 = arith.constant 5 : index
    %c0_126 = arith.constant 0 : index
    %168 = vector.load %arg5[%c0_123, %c0_124, %c5_125, %c0_126] : memref<2x2x24x128xf32, #tpu.memory_space<vmem>>, vector<1x2x16x128xf32>
    %169 = vector.shape_cast %168 : vector<1x2x16x128xf32> to vector<2x16x128xf32>
    %c1_127 = arith.constant 1 : index
    %c0_128 = arith.constant 0 : index
    %c5_129 = arith.constant 5 : index
    %c0_130 = arith.constant 0 : index
    %170 = vector.load %arg5[%c1_127, %c0_128, %c5_129, %c0_130] : memref<2x2x24x128xf32, #tpu.memory_space<vmem>>, vector<1x2x16x128xf32>
    %171 = vector.shape_cast %170 : vector<1x2x16x128xf32> to vector<2x16x128xf32>
    %172 = vector.broadcast %166 : f32 to vector<2x16x128xf32>
    %173 = arith.mulf %172, %169 : vector<2x16x128xf32>
    %174 = vector.broadcast %167 : f32 to vector<2x16x128xf32>
    %175 = arith.mulf %174, %171 : vector<2x16x128xf32>
    %176 = arith.addf %173, %175 : vector<2x16x128xf32>
    %177 = arith.addf %165, %176 : vector<2x16x128xf32>
    %c43 = arith.constant 43 : index
    %178 = memref.load %arg2[%c43] : memref<98xf32, #tpu.memory_space<smem>>
    %c92 = arith.constant 92 : index
    %179 = memref.load %arg2[%c92] : memref<98xf32, #tpu.memory_space<smem>>
    %c0_131 = arith.constant 0 : index
    %c0_132 = arith.constant 0 : index
    %c6_133 = arith.constant 6 : index
    %c0_134 = arith.constant 0 : index
    %180 = vector.load %arg5[%c0_131, %c0_132, %c6_133, %c0_134] : memref<2x2x24x128xf32, #tpu.memory_space<vmem>>, vector<1x2x16x128xf32>
    %181 = vector.shape_cast %180 : vector<1x2x16x128xf32> to vector<2x16x128xf32>
    %c1_135 = arith.constant 1 : index
    %c0_136 = arith.constant 0 : index
    %c6_137 = arith.constant 6 : index
    %c0_138 = arith.constant 0 : index
    %182 = vector.load %arg5[%c1_135, %c0_136, %c6_137, %c0_138] : memref<2x2x24x128xf32, #tpu.memory_space<vmem>>, vector<1x2x16x128xf32>
    %183 = vector.shape_cast %182 : vector<1x2x16x128xf32> to vector<2x16x128xf32>
    %184 = vector.broadcast %178 : f32 to vector<2x16x128xf32>
    %185 = arith.mulf %184, %181 : vector<2x16x128xf32>
    %186 = vector.broadcast %179 : f32 to vector<2x16x128xf32>
    %187 = arith.mulf %186, %183 : vector<2x16x128xf32>
    %188 = arith.addf %185, %187 : vector<2x16x128xf32>
    %189 = arith.addf %177, %188 : vector<2x16x128xf32>
    %c1_i32 = arith.constant 1 : i32
    %190 = tpu.dynamic_rotate %14 by %c1_i32 dim 1 : vector<96x128xf32>, i32 -> vector<96x128xf32>
    %191 = vector.shape_cast %190 : vector<96x128xf32> to vector<2x2x24x128xf32>
    %c0_139 = arith.constant 0 : index
    %c0_140 = arith.constant 0 : index
    %c0_141 = arith.constant 0 : index
    %c0_142 = arith.constant 0 : index
    %192 = vector.load %arg5[%c0_139, %c0_140, %c0_141, %c0_142] : memref<2x2x24x128xf32, #tpu.memory_space<vmem>>, vector<2x2x24x128xf32>
    tpu.vector_store %arg5[%c0_139, %c0_140, %c0_141, %c0_142], %191 {strides = array<i32>} : memref<2x2x24x128xf32, #tpu.memory_space<vmem>>, vector<2x2x24x128xf32>,
    %c2_143 = arith.constant 2 : index
    %193 = memref.load %arg2[%c2_143] : memref<98xf32, #tpu.memory_space<smem>>
    %c51 = arith.constant 51 : index
    %194 = memref.load %arg2[%c51] : memref<98xf32, #tpu.memory_space<smem>>
    %c0_144 = arith.constant 0 : index
    %c0_145 = arith.constant 0 : index
    %c0_146 = arith.constant 0 : index
    %c0_147 = arith.constant 0 : index
    %195 = vector.load %arg5[%c0_144, %c0_145, %c0_146, %c0_147] : memref<2x2x24x128xf32, #tpu.memory_space<vmem>>, vector<1x2x16x128xf32>
    %196 = vector.shape_cast %195 : vector<1x2x16x128xf32> to vector<2x16x128xf32>
    %c1_148 = arith.constant 1 : index
    %c0_149 = arith.constant 0 : index
    %c0_150 = arith.constant 0 : index
    %c0_151 = arith.constant 0 : index
    %197 = vector.load %arg5[%c1_148, %c0_149, %c0_150, %c0_151] : memref<2x2x24x128xf32, #tpu.memory_space<vmem>>, vector<1x2x16x128xf32>
    %198 = vector.shape_cast %197 : vector<1x2x16x128xf32> to vector<2x16x128xf32>
    %199 = vector.broadcast %193 : f32 to vector<2x16x128xf32>
    %200 = arith.mulf %199, %196 : vector<2x16x128xf32>
    %201 = vector.broadcast %194 : f32 to vector<2x16x128xf32>
    %202 = arith.mulf %201, %198 : vector<2x16x128xf32>
    %203 = arith.addf %200, %202 : vector<2x16x128xf32>
    %204 = arith.addf %189, %203 : vector<2x16x128xf32>
    %c9 = arith.constant 9 : index
    %205 = memref.load %arg2[%c9] : memref<98xf32, #tpu.memory_space<smem>>
    %c58 = arith.constant 58 : index
    %206 = memref.load %arg2[%c58] : memref<98xf32, #tpu.memory_space<smem>>
    %c0_152 = arith.constant 0 : index
    %c0_153 = arith.constant 0 : index
    %c1_154 = arith.constant 1 : index
    %c0_155 = arith.constant 0 : index
    %207 = vector.load %arg5[%c0_152, %c0_153, %c1_154, %c0_155] : memref<2x2x24x128xf32, #tpu.memory_space<vmem>>, vector<1x2x16x128xf32>
    %208 = vector.shape_cast %207 : vector<1x2x16x128xf32> to vector<2x16x128xf32>
    %c1_156 = arith.constant 1 : index
    %c0_157 = arith.constant 0 : index
    %c1_158 = arith.constant 1 : index
    %c0_159 = arith.constant 0 : index
    %209 = vector.load %arg5[%c1_156, %c0_157, %c1_158, %c0_159] : memref<2x2x24x128xf32, #tpu.memory_space<vmem>>, vector<1x2x16x128xf32>
    %210 = vector.shape_cast %209 : vector<1x2x16x128xf32> to vector<2x16x128xf32>
    %211 = vector.broadcast %205 : f32 to vector<2x16x128xf32>
    %212 = arith.mulf %211, %208 : vector<2x16x128xf32>
    %213 = vector.broadcast %206 : f32 to vector<2x16x128xf32>
    %214 = arith.mulf %213, %210 : vector<2x16x128xf32>
    %215 = arith.addf %212, %214 : vector<2x16x128xf32>
    %216 = arith.addf %204, %215 : vector<2x16x128xf32>
    %c16 = arith.constant 16 : index
    %217 = memref.load %arg2[%c16] : memref<98xf32, #tpu.memory_space<smem>>
    %c65 = arith.constant 65 : index
    %218 = memref.load %arg2[%c65] : memref<98xf32, #tpu.memory_space<smem>>
    %c0_160 = arith.constant 0 : index
    %c0_161 = arith.constant 0 : index
    %c2_162 = arith.constant 2 : index
    %c0_163 = arith.constant 0 : index
    %219 = vector.load %arg5[%c0_160, %c0_161, %c2_162, %c0_163] : memref<2x2x24x128xf32, #tpu.memory_space<vmem>>, vector<1x2x16x128xf32>
    %220 = vector.shape_cast %219 : vector<1x2x16x128xf32> to vector<2x16x128xf32>
    %c1_164 = arith.constant 1 : index
    %c0_165 = arith.constant 0 : index
    %c2_166 = arith.constant 2 : index
    %c0_167 = arith.constant 0 : index
    %221 = vector.load %arg5[%c1_164, %c0_165, %c2_166, %c0_167] : memref<2x2x24x128xf32, #tpu.memory_space<vmem>>, vector<1x2x16x128xf32>
    %222 = vector.shape_cast %221 : vector<1x2x16x128xf32> to vector<2x16x128xf32>
    %223 = vector.broadcast %217 : f32 to vector<2x16x128xf32>
    %224 = arith.mulf %223, %220 : vector<2x16x128xf32>
    %225 = vector.broadcast %218 : f32 to vector<2x16x128xf32>
    %226 = arith.mulf %225, %222 : vector<2x16x128xf32>
    %227 = arith.addf %224, %226 : vector<2x16x128xf32>
    %228 = arith.addf %216, %227 : vector<2x16x128xf32>
    %c23 = arith.constant 23 : index
    %229 = memref.load %arg2[%c23] : memref<98xf32, #tpu.memory_space<smem>>
    %c72 = arith.constant 72 : index
    %230 = memref.load %arg2[%c72] : memref<98xf32, #tpu.memory_space<smem>>
    %c0_168 = arith.constant 0 : index
    %c0_169 = arith.constant 0 : index
    %c3_170 = arith.constant 3 : index
    %c0_171 = arith.constant 0 : index
    %231 = vector.load %arg5[%c0_168, %c0_169, %c3_170, %c0_171] : memref<2x2x24x128xf32, #tpu.memory_space<vmem>>, vector<1x2x16x128xf32>
    %232 = vector.shape_cast %231 : vector<1x2x16x128xf32> to vector<2x16x128xf32>
    %c1_172 = arith.constant 1 : index
    %c0_173 = arith.constant 0 : index
    %c3_174 = arith.constant 3 : index
    %c0_175 = arith.constant 0 : index
    %233 = vector.load %arg5[%c1_172, %c0_173, %c3_174, %c0_175] : memref<2x2x24x128xf32, #tpu.memory_space<vmem>>, vector<1x2x16x128xf32>
    %234 = vector.shape_cast %233 : vector<1x2x16x128xf32> to vector<2x16x128xf32>
    %235 = vector.broadcast %229 : f32 to vector<2x16x128xf32>
    %236 = arith.mulf %235, %232 : vector<2x16x128xf32>
    %237 = vector.broadcast %230 : f32 to vector<2x16x128xf32>
    %238 = arith.mulf %237, %234 : vector<2x16x128xf32>
    %239 = arith.addf %236, %238 : vector<2x16x128xf32>
    %240 = arith.addf %228, %239 : vector<2x16x128xf32>
    %c30 = arith.constant 30 : index
    %241 = memref.load %arg2[%c30] : memref<98xf32, #tpu.memory_space<smem>>
    %c79 = arith.constant 79 : index
    %242 = memref.load %arg2[%c79] : memref<98xf32, #tpu.memory_space<smem>>
    %c0_176 = arith.constant 0 : index
    %c0_177 = arith.constant 0 : index
    %c4_178 = arith.constant 4 : index
    %c0_179 = arith.constant 0 : index
    %243 = vector.load %arg5[%c0_176, %c0_177, %c4_178, %c0_179] : memref<2x2x24x128xf32, #tpu.memory_space<vmem>>, vector<1x2x16x128xf32>
    %244 = vector.shape_cast %243 : vector<1x2x16x128xf32> to vector<2x16x128xf32>
    %c1_180 = arith.constant 1 : index
    %c0_181 = arith.constant 0 : index
    %c4_182 = arith.constant 4 : index
    %c0_183 = arith.constant 0 : index
    %245 = vector.load %arg5[%c1_180, %c0_181, %c4_182, %c0_183] : memref<2x2x24x128xf32, #tpu.memory_space<vmem>>, vector<1x2x16x128xf32>
    %246 = vector.shape_cast %245 : vector<1x2x16x128xf32> to vector<2x16x128xf32>
    %247 = vector.broadcast %241 : f32 to vector<2x16x128xf32>
    %248 = arith.mulf %247, %244 : vector<2x16x128xf32>
    %249 = vector.broadcast %242 : f32 to vector<2x16x128xf32>
    %250 = arith.mulf %249, %246 : vector<2x16x128xf32>
    %251 = arith.addf %248, %250 : vector<2x16x128xf32>
    %252 = arith.addf %240, %251 : vector<2x16x128xf32>
    %c37 = arith.constant 37 : index
    %253 = memref.load %arg2[%c37] : memref<98xf32, #tpu.memory_space<smem>>
    %c86 = arith.constant 86 : index
    %254 = memref.load %arg2[%c86] : memref<98xf32, #tpu.memory_space<smem>>
    %c0_184 = arith.constant 0 : index
    %c0_185 = arith.constant 0 : index
    %c5_186 = arith.constant 5 : index
    %c0_187 = arith.constant 0 : index
    %255 = vector.load %arg5[%c0_184, %c0_185, %c5_186, %c0_187] : memref<2x2x24x128xf32, #tpu.memory_space<vmem>>, vector<1x2x16x128xf32>
    %256 = vector.shape_cast %255 : vector<1x2x16x128xf32> to vector<2x16x128xf32>
    %c1_188 = arith.constant 1 : index
    %c0_189 = arith.constant 0 : index
    %c5_190 = arith.constant 5 : index
    %c0_191 = arith.constant 0 : index
    %257 = vector.load %arg5[%c1_188, %c0_189, %c5_190, %c0_191] : memref<2x2x24x128xf32, #tpu.memory_space<vmem>>, vector<1x2x16x128xf32>
    %258 = vector.shape_cast %257 : vector<1x2x16x128xf32> to vector<2x16x128xf32>
    %259 = vector.broadcast %253 : f32 to vector<2x16x128xf32>
    %260 = arith.mulf %259, %256 : vector<2x16x128xf32>
    %261 = vector.broadcast %254 : f32 to vector<2x16x128xf32>
    %262 = arith.mulf %261, %258 : vector<2x16x128xf32>
    %263 = arith.addf %260, %262 : vector<2x16x128xf32>
    %264 = arith.addf %252, %263 : vector<2x16x128xf32>
    %c44 = arith.constant 44 : index
    %265 = memref.load %arg2[%c44] : memref<98xf32, #tpu.memory_space<smem>>
    %c93 = arith.constant 93 : index
    %266 = memref.load %arg2[%c93] : memref<98xf32, #tpu.memory_space<smem>>
    %c0_192 = arith.constant 0 : index
    %c0_193 = arith.constant 0 : index
    %c6_194 = arith.constant 6 : index
    %c0_195 = arith.constant 0 : index
    %267 = vector.load %arg5[%c0_192, %c0_193, %c6_194, %c0_195] : memref<2x2x24x128xf32, #tpu.memory_space<vmem>>, vector<1x2x16x128xf32>
    %268 = vector.shape_cast %267 : vector<1x2x16x128xf32> to vector<2x16x128xf32>
    %c1_196 = arith.constant 1 : index
    %c0_197 = arith.constant 0 : index
    %c6_198 = arith.constant 6 : index
    %c0_199 = arith.constant 0 : index
    %269 = vector.load %arg5[%c1_196, %c0_197, %c6_198, %c0_199] : memref<2x2x24x128xf32, #tpu.memory_space<vmem>>, vector<1x2x16x128xf32>
    %270 = vector.shape_cast %269 : vector<1x2x16x128xf32> to vector<2x16x128xf32>
    %271 = vector.broadcast %265 : f32 to vector<2x16x128xf32>
    %272 = arith.mulf %271, %268 : vector<2x16x128xf32>
    %273 = vector.broadcast %266 : f32 to vector<2x16x128xf32>
    %274 = arith.mulf %273, %270 : vector<2x16x128xf32>
    %275 = arith.addf %272, %274 : vector<2x16x128xf32>
    %276 = arith.addf %264, %275 : vector<2x16x128xf32>
    %277 = vector.shape_cast %14 : vector<96x128xf32> to vector<2x2x24x128xf32>
    %c0_200 = arith.constant 0 : index
    %c0_201 = arith.constant 0 : index
    %c0_202 = arith.constant 0 : index
    %c0_203 = arith.constant 0 : index
    %278 = vector.load %arg5[%c0_200, %c0_201, %c0_202, %c0_203] : memref<2x2x24x128xf32, #tpu.memory_space<vmem>>, vector<2x2x24x128xf32>
    tpu.vector_store %arg5[%c0_200, %c0_201, %c0_202, %c0_203], %277 {strides = array<i32>} : memref<2x2x24x128xf32, #tpu.memory_space<vmem>>, vector<2x2x24x128xf32>,
    %c3_204 = arith.constant 3 : index
    %279 = memref.load %arg2[%c3_204] : memref<98xf32, #tpu.memory_space<smem>>
    %c52 = arith.constant 52 : index
    %280 = memref.load %arg2[%c52] : memref<98xf32, #tpu.memory_space<smem>>
    %c0_205 = arith.constant 0 : index
    %c0_206 = arith.constant 0 : index
    %c0_207 = arith.constant 0 : index
    %c0_208 = arith.constant 0 : index
    %281 = vector.load %arg5[%c0_205, %c0_206, %c0_207, %c0_208] : memref<2x2x24x128xf32, #tpu.memory_space<vmem>>, vector<1x2x16x128xf32>
    %282 = vector.shape_cast %281 : vector<1x2x16x128xf32> to vector<2x16x128xf32>
    %c1_209 = arith.constant 1 : index
    %c0_210 = arith.constant 0 : index
    %c0_211 = arith.constant 0 : index
    %c0_212 = arith.constant 0 : index
    %283 = vector.load %arg5[%c1_209, %c0_210, %c0_211, %c0_212] : memref<2x2x24x128xf32, #tpu.memory_space<vmem>>, vector<1x2x16x128xf32>
    %284 = vector.shape_cast %283 : vector<1x2x16x128xf32> to vector<2x16x128xf32>
    %285 = vector.broadcast %279 : f32 to vector<2x16x128xf32>
    %286 = arith.mulf %285, %282 : vector<2x16x128xf32>
    %287 = vector.broadcast %280 : f32 to vector<2x16x128xf32>
    %288 = arith.mulf %287, %284 : vector<2x16x128xf32>
    %289 = arith.addf %286, %288 : vector<2x16x128xf32>
    %290 = arith.addf %276, %289 : vector<2x16x128xf32>
    %c10 = arith.constant 10 : index
    %291 = memref.load %arg2[%c10] : memref<98xf32, #tpu.memory_space<smem>>
    %c59 = arith.constant 59 : index
    %292 = memref.load %arg2[%c59] : memref<98xf32, #tpu.memory_space<smem>>
    %c0_213 = arith.constant 0 : index
    %c0_214 = arith.constant 0 : index
    %c1_215 = arith.constant 1 : index
    %c0_216 = arith.constant 0 : index
    %293 = vector.load %arg5[%c0_213, %c0_214, %c1_215, %c0_216] : memref<2x2x24x128xf32, #tpu.memory_space<vmem>>, vector<1x2x16x128xf32>
    %294 = vector.shape_cast %293 : vector<1x2x16x128xf32> to vector<2x16x128xf32>
    %c1_217 = arith.constant 1 : index
    %c0_218 = arith.constant 0 : index
    %c1_219 = arith.constant 1 : index
    %c0_220 = arith.constant 0 : index
    %295 = vector.load %arg5[%c1_217, %c0_218, %c1_219, %c0_220] : memref<2x2x24x128xf32, #tpu.memory_space<vmem>>, vector<1x2x16x128xf32>
    %296 = vector.shape_cast %295 : vector<1x2x16x128xf32> to vector<2x16x128xf32>
    %297 = vector.broadcast %291 : f32 to vector<2x16x128xf32>
    %298 = arith.mulf %297, %294 : vector<2x16x128xf32>
    %299 = vector.broadcast %292 : f32 to vector<2x16x128xf32>
    %300 = arith.mulf %299, %296 : vector<2x16x128xf32>
    %301 = arith.addf %298, %300 : vector<2x16x128xf32>
    %302 = arith.addf %290, %301 : vector<2x16x128xf32>
    %c17 = arith.constant 17 : index
    %303 = memref.load %arg2[%c17] : memref<98xf32, #tpu.memory_space<smem>>
    %c66 = arith.constant 66 : index
    %304 = memref.load %arg2[%c66] : memref<98xf32, #tpu.memory_space<smem>>
    %c0_221 = arith.constant 0 : index
    %c0_222 = arith.constant 0 : index
    %c2_223 = arith.constant 2 : index
    %c0_224 = arith.constant 0 : index
    %305 = vector.load %arg5[%c0_221, %c0_222, %c2_223, %c0_224] : memref<2x2x24x128xf32, #tpu.memory_space<vmem>>, vector<1x2x16x128xf32>
    %306 = vector.shape_cast %305 : vector<1x2x16x128xf32> to vector<2x16x128xf32>
    %c1_225 = arith.constant 1 : index
    %c0_226 = arith.constant 0 : index
    %c2_227 = arith.constant 2 : index
    %c0_228 = arith.constant 0 : index
    %307 = vector.load %arg5[%c1_225, %c0_226, %c2_227, %c0_228] : memref<2x2x24x128xf32, #tpu.memory_space<vmem>>, vector<1x2x16x128xf32>
    %308 = vector.shape_cast %307 : vector<1x2x16x128xf32> to vector<2x16x128xf32>
    %309 = vector.broadcast %303 : f32 to vector<2x16x128xf32>
    %310 = arith.mulf %309, %306 : vector<2x16x128xf32>
    %311 = vector.broadcast %304 : f32 to vector<2x16x128xf32>
    %312 = arith.mulf %311, %308 : vector<2x16x128xf32>
    %313 = arith.addf %310, %312 : vector<2x16x128xf32>
    %314 = arith.addf %302, %313 : vector<2x16x128xf32>
    %c24 = arith.constant 24 : index
    %315 = memref.load %arg2[%c24] : memref<98xf32, #tpu.memory_space<smem>>
    %c73 = arith.constant 73 : index
    %316 = memref.load %arg2[%c73] : memref<98xf32, #tpu.memory_space<smem>>
    %c0_229 = arith.constant 0 : index
    %c0_230 = arith.constant 0 : index
    %c3_231 = arith.constant 3 : index
    %c0_232 = arith.constant 0 : index
    %317 = vector.load %arg5[%c0_229, %c0_230, %c3_231, %c0_232] : memref<2x2x24x128xf32, #tpu.memory_space<vmem>>, vector<1x2x16x128xf32>
    %318 = vector.shape_cast %317 : vector<1x2x16x128xf32> to vector<2x16x128xf32>
    %c1_233 = arith.constant 1 : index
    %c0_234 = arith.constant 0 : index
    %c3_235 = arith.constant 3 : index
    %c0_236 = arith.constant 0 : index
    %319 = vector.load %arg5[%c1_233, %c0_234, %c3_235, %c0_236] : memref<2x2x24x128xf32, #tpu.memory_space<vmem>>, vector<1x2x16x128xf32>
    %320 = vector.shape_cast %319 : vector<1x2x16x128xf32> to vector<2x16x128xf32>
    %321 = vector.broadcast %315 : f32 to vector<2x16x128xf32>
    %322 = arith.mulf %321, %318 : vector<2x16x128xf32>
    %323 = vector.broadcast %316 : f32 to vector<2x16x128xf32>
    %324 = arith.mulf %323, %320 : vector<2x16x128xf32>
    %325 = arith.addf %322, %324 : vector<2x16x128xf32>
    %326 = arith.addf %314, %325 : vector<2x16x128xf32>
    %c31 = arith.constant 31 : index
    %327 = memref.load %arg2[%c31] : memref<98xf32, #tpu.memory_space<smem>>
    %c80 = arith.constant 80 : index
    %328 = memref.load %arg2[%c80] : memref<98xf32, #tpu.memory_space<smem>>
    %c0_237 = arith.constant 0 : index
    %c0_238 = arith.constant 0 : index
    %c4_239 = arith.constant 4 : index
    %c0_240 = arith.constant 0 : index
    %329 = vector.load %arg5[%c0_237, %c0_238, %c4_239, %c0_240] : memref<2x2x24x128xf32, #tpu.memory_space<vmem>>, vector<1x2x16x128xf32>
    %330 = vector.shape_cast %329 : vector<1x2x16x128xf32> to vector<2x16x128xf32>
    %c1_241 = arith.constant 1 : index
    %c0_242 = arith.constant 0 : index
    %c4_243 = arith.constant 4 : index
    %c0_244 = arith.constant 0 : index
    %331 = vector.load %arg5[%c1_241, %c0_242, %c4_243, %c0_244] : memref<2x2x24x128xf32, #tpu.memory_space<vmem>>, vector<1x2x16x128xf32>
    %332 = vector.shape_cast %331 : vector<1x2x16x128xf32> to vector<2x16x128xf32>
    %333 = vector.broadcast %327 : f32 to vector<2x16x128xf32>
    %334 = arith.mulf %333, %330 : vector<2x16x128xf32>
    %335 = vector.broadcast %328 : f32 to vector<2x16x128xf32>
    %336 = arith.mulf %335, %332 : vector<2x16x128xf32>
    %337 = arith.addf %334, %336 : vector<2x16x128xf32>
    %338 = arith.addf %326, %337 : vector<2x16x128xf32>
    %c38 = arith.constant 38 : index
    %339 = memref.load %arg2[%c38] : memref<98xf32, #tpu.memory_space<smem>>
    %c87 = arith.constant 87 : index
    %340 = memref.load %arg2[%c87] : memref<98xf32, #tpu.memory_space<smem>>
    %c0_245 = arith.constant 0 : index
    %c0_246 = arith.constant 0 : index
    %c5_247 = arith.constant 5 : index
    %c0_248 = arith.constant 0 : index
    %341 = vector.load %arg5[%c0_245, %c0_246, %c5_247, %c0_248] : memref<2x2x24x128xf32, #tpu.memory_space<vmem>>, vector<1x2x16x128xf32>
    %342 = vector.shape_cast %341 : vector<1x2x16x128xf32> to vector<2x16x128xf32>
    %c1_249 = arith.constant 1 : index
    %c0_250 = arith.constant 0 : index
    %c5_251 = arith.constant 5 : index
    %c0_252 = arith.constant 0 : index
    %343 = vector.load %arg5[%c1_249, %c0_250, %c5_251, %c0_252] : memref<2x2x24x128xf32, #tpu.memory_space<vmem>>, vector<1x2x16x128xf32>
    %344 = vector.shape_cast %343 : vector<1x2x16x128xf32> to vector<2x16x128xf32>
    %345 = vector.broadcast %339 : f32 to vector<2x16x128xf32>
    %346 = arith.mulf %345, %342 : vector<2x16x128xf32>
    %347 = vector.broadcast %340 : f32 to vector<2x16x128xf32>
    %348 = arith.mulf %347, %344 : vector<2x16x128xf32>
    %349 = arith.addf %346, %348 : vector<2x16x128xf32>
    %350 = arith.addf %338, %349 : vector<2x16x128xf32>
    %c45 = arith.constant 45 : index
    %351 = memref.load %arg2[%c45] : memref<98xf32, #tpu.memory_space<smem>>
    %c94 = arith.constant 94 : index
    %352 = memref.load %arg2[%c94] : memref<98xf32, #tpu.memory_space<smem>>
    %c0_253 = arith.constant 0 : index
    %c0_254 = arith.constant 0 : index
    %c6_255 = arith.constant 6 : index
    %c0_256 = arith.constant 0 : index
    %353 = vector.load %arg5[%c0_253, %c0_254, %c6_255, %c0_256] : memref<2x2x24x128xf32, #tpu.memory_space<vmem>>, vector<1x2x16x128xf32>
    %354 = vector.shape_cast %353 : vector<1x2x16x128xf32> to vector<2x16x128xf32>
    %c1_257 = arith.constant 1 : index
    %c0_258 = arith.constant 0 : index
    %c6_259 = arith.constant 6 : index
    %c0_260 = arith.constant 0 : index
    %355 = vector.load %arg5[%c1_257, %c0_258, %c6_259, %c0_260] : memref<2x2x24x128xf32, #tpu.memory_space<vmem>>, vector<1x2x16x128xf32>
    %356 = vector.shape_cast %355 : vector<1x2x16x128xf32> to vector<2x16x128xf32>
    %357 = vector.broadcast %351 : f32 to vector<2x16x128xf32>
    %358 = arith.mulf %357, %354 : vector<2x16x128xf32>
    %359 = vector.broadcast %352 : f32 to vector<2x16x128xf32>
    %360 = arith.mulf %359, %356 : vector<2x16x128xf32>
    %361 = arith.addf %358, %360 : vector<2x16x128xf32>
    %362 = arith.addf %350, %361 : vector<2x16x128xf32>
    %c127_i32 = arith.constant 127 : i32
    %363 = tpu.dynamic_rotate %14 by %c127_i32 dim 1 : vector<96x128xf32>, i32 -> vector<96x128xf32>
    %364 = vector.shape_cast %363 : vector<96x128xf32> to vector<2x2x24x128xf32>
    %c0_261 = arith.constant 0 : index
    %c0_262 = arith.constant 0 : index
    %c0_263 = arith.constant 0 : index
    %c0_264 = arith.constant 0 : index
    %365 = vector.load %arg5[%c0_261, %c0_262, %c0_263, %c0_264] : memref<2x2x24x128xf32, #tpu.memory_space<vmem>>, vector<2x2x24x128xf32>
    tpu.vector_store %arg5[%c0_261, %c0_262, %c0_263, %c0_264], %364 {strides = array<i32>} : memref<2x2x24x128xf32, #tpu.memory_space<vmem>>, vector<2x2x24x128xf32>,
    %c4_265 = arith.constant 4 : index
    %366 = memref.load %arg2[%c4_265] : memref<98xf32, #tpu.memory_space<smem>>
    %c53 = arith.constant 53 : index
    %367 = memref.load %arg2[%c53] : memref<98xf32, #tpu.memory_space<smem>>
    %c0_266 = arith.constant 0 : index
    %c0_267 = arith.constant 0 : index
    %c0_268 = arith.constant 0 : index
    %c0_269 = arith.constant 0 : index
    %368 = vector.load %arg5[%c0_266, %c0_267, %c0_268, %c0_269] : memref<2x2x24x128xf32, #tpu.memory_space<vmem>>, vector<1x2x16x128xf32>
    %369 = vector.shape_cast %368 : vector<1x2x16x128xf32> to vector<2x16x128xf32>
    %c1_270 = arith.constant 1 : index
    %c0_271 = arith.constant 0 : index
    %c0_272 = arith.constant 0 : index
    %c0_273 = arith.constant 0 : index
    %370 = vector.load %arg5[%c1_270, %c0_271, %c0_272, %c0_273] : memref<2x2x24x128xf32, #tpu.memory_space<vmem>>, vector<1x2x16x128xf32>
    %371 = vector.shape_cast %370 : vector<1x2x16x128xf32> to vector<2x16x128xf32>
    %372 = vector.broadcast %366 : f32 to vector<2x16x128xf32>
    %373 = arith.mulf %372, %369 : vector<2x16x128xf32>
    %374 = vector.broadcast %367 : f32 to vector<2x16x128xf32>
    %375 = arith.mulf %374, %371 : vector<2x16x128xf32>
    %376 = arith.addf %373, %375 : vector<2x16x128xf32>
    %377 = arith.addf %362, %376 : vector<2x16x128xf32>
    %c11 = arith.constant 11 : index
    %378 = memref.load %arg2[%c11] : memref<98xf32, #tpu.memory_space<smem>>
    %c60 = arith.constant 60 : index
    %379 = memref.load %arg2[%c60] : memref<98xf32, #tpu.memory_space<smem>>
    %c0_274 = arith.constant 0 : index
    %c0_275 = arith.constant 0 : index
    %c1_276 = arith.constant 1 : index
    %c0_277 = arith.constant 0 : index
    %380 = vector.load %arg5[%c0_274, %c0_275, %c1_276, %c0_277] : memref<2x2x24x128xf32, #tpu.memory_space<vmem>>, vector<1x2x16x128xf32>
    %381 = vector.shape_cast %380 : vector<1x2x16x128xf32> to vector<2x16x128xf32>
    %c1_278 = arith.constant 1 : index
    %c0_279 = arith.constant 0 : index
    %c1_280 = arith.constant 1 : index
    %c0_281 = arith.constant 0 : index
    %382 = vector.load %arg5[%c1_278, %c0_279, %c1_280, %c0_281] : memref<2x2x24x128xf32, #tpu.memory_space<vmem>>, vector<1x2x16x128xf32>
    %383 = vector.shape_cast %382 : vector<1x2x16x128xf32> to vector<2x16x128xf32>
    %384 = vector.broadcast %378 : f32 to vector<2x16x128xf32>
    %385 = arith.mulf %384, %381 : vector<2x16x128xf32>
    %386 = vector.broadcast %379 : f32 to vector<2x16x128xf32>
    %387 = arith.mulf %386, %383 : vector<2x16x128xf32>
    %388 = arith.addf %385, %387 : vector<2x16x128xf32>
    %389 = arith.addf %377, %388 : vector<2x16x128xf32>
    %c18 = arith.constant 18 : index
    %390 = memref.load %arg2[%c18] : memref<98xf32, #tpu.memory_space<smem>>
    %c67 = arith.constant 67 : index
    %391 = memref.load %arg2[%c67] : memref<98xf32, #tpu.memory_space<smem>>
    %c0_282 = arith.constant 0 : index
    %c0_283 = arith.constant 0 : index
    %c2_284 = arith.constant 2 : index
    %c0_285 = arith.constant 0 : index
    %392 = vector.load %arg5[%c0_282, %c0_283, %c2_284, %c0_285] : memref<2x2x24x128xf32, #tpu.memory_space<vmem>>, vector<1x2x16x128xf32>
    %393 = vector.shape_cast %392 : vector<1x2x16x128xf32> to vector<2x16x128xf32>
    %c1_286 = arith.constant 1 : index
    %c0_287 = arith.constant 0 : index
    %c2_288 = arith.constant 2 : index
    %c0_289 = arith.constant 0 : index
    %394 = vector.load %arg5[%c1_286, %c0_287, %c2_288, %c0_289] : memref<2x2x24x128xf32, #tpu.memory_space<vmem>>, vector<1x2x16x128xf32>
    %395 = vector.shape_cast %394 : vector<1x2x16x128xf32> to vector<2x16x128xf32>
    %396 = vector.broadcast %390 : f32 to vector<2x16x128xf32>
    %397 = arith.mulf %396, %393 : vector<2x16x128xf32>
    %398 = vector.broadcast %391 : f32 to vector<2x16x128xf32>
    %399 = arith.mulf %398, %395 : vector<2x16x128xf32>
    %400 = arith.addf %397, %399 : vector<2x16x128xf32>
    %401 = arith.addf %389, %400 : vector<2x16x128xf32>
    %c25 = arith.constant 25 : index
    %402 = memref.load %arg2[%c25] : memref<98xf32, #tpu.memory_space<smem>>
    %c74 = arith.constant 74 : index
    %403 = memref.load %arg2[%c74] : memref<98xf32, #tpu.memory_space<smem>>
    %c0_290 = arith.constant 0 : index
    %c0_291 = arith.constant 0 : index
    %c3_292 = arith.constant 3 : index
    %c0_293 = arith.constant 0 : index
    %404 = vector.load %arg5[%c0_290, %c0_291, %c3_292, %c0_293] : memref<2x2x24x128xf32, #tpu.memory_space<vmem>>, vector<1x2x16x128xf32>
    %405 = vector.shape_cast %404 : vector<1x2x16x128xf32> to vector<2x16x128xf32>
    %c1_294 = arith.constant 1 : index
    %c0_295 = arith.constant 0 : index
    %c3_296 = arith.constant 3 : index
    %c0_297 = arith.constant 0 : index
    %406 = vector.load %arg5[%c1_294, %c0_295, %c3_296, %c0_297] : memref<2x2x24x128xf32, #tpu.memory_space<vmem>>, vector<1x2x16x128xf32>
    %407 = vector.shape_cast %406 : vector<1x2x16x128xf32> to vector<2x16x128xf32>
    %408 = vector.broadcast %402 : f32 to vector<2x16x128xf32>
    %409 = arith.mulf %408, %405 : vector<2x16x128xf32>
    %410 = vector.broadcast %403 : f32 to vector<2x16x128xf32>
    %411 = arith.mulf %410, %407 : vector<2x16x128xf32>
    %412 = arith.addf %409, %411 : vector<2x16x128xf32>
    %413 = arith.addf %401, %412 : vector<2x16x128xf32>
    %c32 = arith.constant 32 : index
    %414 = memref.load %arg2[%c32] : memref<98xf32, #tpu.memory_space<smem>>
    %c81 = arith.constant 81 : index
    %415 = memref.load %arg2[%c81] : memref<98xf32, #tpu.memory_space<smem>>
    %c0_298 = arith.constant 0 : index
    %c0_299 = arith.constant 0 : index
    %c4_300 = arith.constant 4 : index
    %c0_301 = arith.constant 0 : index
    %416 = vector.load %arg5[%c0_298, %c0_299, %c4_300, %c0_301] : memref<2x2x24x128xf32, #tpu.memory_space<vmem>>, vector<1x2x16x128xf32>
    %417 = vector.shape_cast %416 : vector<1x2x16x128xf32> to vector<2x16x128xf32>
    %c1_302 = arith.constant 1 : index
    %c0_303 = arith.constant 0 : index
    %c4_304 = arith.constant 4 : index
    %c0_305 = arith.constant 0 : index
    %418 = vector.load %arg5[%c1_302, %c0_303, %c4_304, %c0_305] : memref<2x2x24x128xf32, #tpu.memory_space<vmem>>, vector<1x2x16x128xf32>
    %419 = vector.shape_cast %418 : vector<1x2x16x128xf32> to vector<2x16x128xf32>
    %420 = vector.broadcast %414 : f32 to vector<2x16x128xf32>
    %421 = arith.mulf %420, %417 : vector<2x16x128xf32>
    %422 = vector.broadcast %415 : f32 to vector<2x16x128xf32>
    %423 = arith.mulf %422, %419 : vector<2x16x128xf32>
    %424 = arith.addf %421, %423 : vector<2x16x128xf32>
    %425 = arith.addf %413, %424 : vector<2x16x128xf32>
    %c39 = arith.constant 39 : index
    %426 = memref.load %arg2[%c39] : memref<98xf32, #tpu.memory_space<smem>>
    %c88 = arith.constant 88 : index
    %427 = memref.load %arg2[%c88] : memref<98xf32, #tpu.memory_space<smem>>
    %c0_306 = arith.constant 0 : index
    %c0_307 = arith.constant 0 : index
    %c5_308 = arith.constant 5 : index
    %c0_309 = arith.constant 0 : index
    %428 = vector.load %arg5[%c0_306, %c0_307, %c5_308, %c0_309] : memref<2x2x24x128xf32, #tpu.memory_space<vmem>>, vector<1x2x16x128xf32>
    %429 = vector.shape_cast %428 : vector<1x2x16x128xf32> to vector<2x16x128xf32>
    %c1_310 = arith.constant 1 : index
    %c0_311 = arith.constant 0 : index
    %c5_312 = arith.constant 5 : index
    %c0_313 = arith.constant 0 : index
    %430 = vector.load %arg5[%c1_310, %c0_311, %c5_312, %c0_313] : memref<2x2x24x128xf32, #tpu.memory_space<vmem>>, vector<1x2x16x128xf32>
    %431 = vector.shape_cast %430 : vector<1x2x16x128xf32> to vector<2x16x128xf32>
    %432 = vector.broadcast %426 : f32 to vector<2x16x128xf32>
    %433 = arith.mulf %432, %429 : vector<2x16x128xf32>
    %434 = vector.broadcast %427 : f32 to vector<2x16x128xf32>
    %435 = arith.mulf %434, %431 : vector<2x16x128xf32>
    %436 = arith.addf %433, %435 : vector<2x16x128xf32>
    %437 = arith.addf %425, %436 : vector<2x16x128xf32>
    %c46 = arith.constant 46 : index
    %438 = memref.load %arg2[%c46] : memref<98xf32, #tpu.memory_space<smem>>
    %c95 = arith.constant 95 : index
    %439 = memref.load %arg2[%c95] : memref<98xf32, #tpu.memory_space<smem>>
    %c0_314 = arith.constant 0 : index
    %c0_315 = arith.constant 0 : index
    %c6_316 = arith.constant 6 : index
    %c0_317 = arith.constant 0 : index
    %440 = vector.load %arg5[%c0_314, %c0_315, %c6_316, %c0_317] : memref<2x2x24x128xf32, #tpu.memory_space<vmem>>, vector<1x2x16x128xf32>
    %441 = vector.shape_cast %440 : vector<1x2x16x128xf32> to vector<2x16x128xf32>
    %c1_318 = arith.constant 1 : index
    %c0_319 = arith.constant 0 : index
    %c6_320 = arith.constant 6 : index
    %c0_321 = arith.constant 0 : index
    %442 = vector.load %arg5[%c1_318, %c0_319, %c6_320, %c0_321] : memref<2x2x24x128xf32, #tpu.memory_space<vmem>>, vector<1x2x16x128xf32>
    %443 = vector.shape_cast %442 : vector<1x2x16x128xf32> to vector<2x16x128xf32>
    %444 = vector.broadcast %438 : f32 to vector<2x16x128xf32>
    %445 = arith.mulf %444, %441 : vector<2x16x128xf32>
    %446 = vector.broadcast %439 : f32 to vector<2x16x128xf32>
    %447 = arith.mulf %446, %443 : vector<2x16x128xf32>
    %448 = arith.addf %445, %447 : vector<2x16x128xf32>
    %449 = arith.addf %437, %448 : vector<2x16x128xf32>
    %c126_i32 = arith.constant 126 : i32
    %450 = tpu.dynamic_rotate %14 by %c126_i32 dim 1 : vector<96x128xf32>, i32 -> vector<96x128xf32>
    %451 = vector.shape_cast %450 : vector<96x128xf32> to vector<2x2x24x128xf32>
    %c0_322 = arith.constant 0 : index
    %c0_323 = arith.constant 0 : index
    %c0_324 = arith.constant 0 : index
    %c0_325 = arith.constant 0 : index
    %452 = vector.load %arg5[%c0_322, %c0_323, %c0_324, %c0_325] : memref<2x2x24x128xf32, #tpu.memory_space<vmem>>, vector<2x2x24x128xf32>
    tpu.vector_store %arg5[%c0_322, %c0_323, %c0_324, %c0_325], %451 {strides = array<i32>} : memref<2x2x24x128xf32, #tpu.memory_space<vmem>>, vector<2x2x24x128xf32>,
    %c5_326 = arith.constant 5 : index
    %453 = memref.load %arg2[%c5_326] : memref<98xf32, #tpu.memory_space<smem>>
    %c54 = arith.constant 54 : index
    %454 = memref.load %arg2[%c54] : memref<98xf32, #tpu.memory_space<smem>>
    %c0_327 = arith.constant 0 : index
    %c0_328 = arith.constant 0 : index
    %c0_329 = arith.constant 0 : index
    %c0_330 = arith.constant 0 : index
    %455 = vector.load %arg5[%c0_327, %c0_328, %c0_329, %c0_330] : memref<2x2x24x128xf32, #tpu.memory_space<vmem>>, vector<1x2x16x128xf32>
    %456 = vector.shape_cast %455 : vector<1x2x16x128xf32> to vector<2x16x128xf32>
    %c1_331 = arith.constant 1 : index
    %c0_332 = arith.constant 0 : index
    %c0_333 = arith.constant 0 : index
    %c0_334 = arith.constant 0 : index
    %457 = vector.load %arg5[%c1_331, %c0_332, %c0_333, %c0_334] : memref<2x2x24x128xf32, #tpu.memory_space<vmem>>, vector<1x2x16x128xf32>
    %458 = vector.shape_cast %457 : vector<1x2x16x128xf32> to vector<2x16x128xf32>
    %459 = vector.broadcast %453 : f32 to vector<2x16x128xf32>
    %460 = arith.mulf %459, %456 : vector<2x16x128xf32>
    %461 = vector.broadcast %454 : f32 to vector<2x16x128xf32>
    %462 = arith.mulf %461, %458 : vector<2x16x128xf32>
    %463 = arith.addf %460, %462 : vector<2x16x128xf32>
    %464 = arith.addf %449, %463 : vector<2x16x128xf32>
    %c12 = arith.constant 12 : index
    %465 = memref.load %arg2[%c12] : memref<98xf32, #tpu.memory_space<smem>>
    %c61 = arith.constant 61 : index
    %466 = memref.load %arg2[%c61] : memref<98xf32, #tpu.memory_space<smem>>
    %c0_335 = arith.constant 0 : index
    %c0_336 = arith.constant 0 : index
    %c1_337 = arith.constant 1 : index
    %c0_338 = arith.constant 0 : index
    %467 = vector.load %arg5[%c0_335, %c0_336, %c1_337, %c0_338] : memref<2x2x24x128xf32, #tpu.memory_space<vmem>>, vector<1x2x16x128xf32>
    %468 = vector.shape_cast %467 : vector<1x2x16x128xf32> to vector<2x16x128xf32>
    %c1_339 = arith.constant 1 : index
    %c0_340 = arith.constant 0 : index
    %c1_341 = arith.constant 1 : index
    %c0_342 = arith.constant 0 : index
    %469 = vector.load %arg5[%c1_339, %c0_340, %c1_341, %c0_342] : memref<2x2x24x128xf32, #tpu.memory_space<vmem>>, vector<1x2x16x128xf32>
    %470 = vector.shape_cast %469 : vector<1x2x16x128xf32> to vector<2x16x128xf32>
    %471 = vector.broadcast %465 : f32 to vector<2x16x128xf32>
    %472 = arith.mulf %471, %468 : vector<2x16x128xf32>
    %473 = vector.broadcast %466 : f32 to vector<2x16x128xf32>
    %474 = arith.mulf %473, %470 : vector<2x16x128xf32>
    %475 = arith.addf %472, %474 : vector<2x16x128xf32>
    %476 = arith.addf %464, %475 : vector<2x16x128xf32>
    %c19 = arith.constant 19 : index
    %477 = memref.load %arg2[%c19] : memref<98xf32, #tpu.memory_space<smem>>
    %c68 = arith.constant 68 : index
    %478 = memref.load %arg2[%c68] : memref<98xf32, #tpu.memory_space<smem>>
    %c0_343 = arith.constant 0 : index
    %c0_344 = arith.constant 0 : index
    %c2_345 = arith.constant 2 : index
    %c0_346 = arith.constant 0 : index
    %479 = vector.load %arg5[%c0_343, %c0_344, %c2_345, %c0_346] : memref<2x2x24x128xf32, #tpu.memory_space<vmem>>, vector<1x2x16x128xf32>
    %480 = vector.shape_cast %479 : vector<1x2x16x128xf32> to vector<2x16x128xf32>
    %c1_347 = arith.constant 1 : index
    %c0_348 = arith.constant 0 : index
    %c2_349 = arith.constant 2 : index
    %c0_350 = arith.constant 0 : index
    %481 = vector.load %arg5[%c1_347, %c0_348, %c2_349, %c0_350] : memref<2x2x24x128xf32, #tpu.memory_space<vmem>>, vector<1x2x16x128xf32>
    %482 = vector.shape_cast %481 : vector<1x2x16x128xf32> to vector<2x16x128xf32>
    %483 = vector.broadcast %477 : f32 to vector<2x16x128xf32>
    %484 = arith.mulf %483, %480 : vector<2x16x128xf32>
    %485 = vector.broadcast %478 : f32 to vector<2x16x128xf32>
    %486 = arith.mulf %485, %482 : vector<2x16x128xf32>
    %487 = arith.addf %484, %486 : vector<2x16x128xf32>
    %488 = arith.addf %476, %487 : vector<2x16x128xf32>
    %c26 = arith.constant 26 : index
    %489 = memref.load %arg2[%c26] : memref<98xf32, #tpu.memory_space<smem>>
    %c75 = arith.constant 75 : index
    %490 = memref.load %arg2[%c75] : memref<98xf32, #tpu.memory_space<smem>>
    %c0_351 = arith.constant 0 : index
    %c0_352 = arith.constant 0 : index
    %c3_353 = arith.constant 3 : index
    %c0_354 = arith.constant 0 : index
    %491 = vector.load %arg5[%c0_351, %c0_352, %c3_353, %c0_354] : memref<2x2x24x128xf32, #tpu.memory_space<vmem>>, vector<1x2x16x128xf32>
    %492 = vector.shape_cast %491 : vector<1x2x16x128xf32> to vector<2x16x128xf32>
    %c1_355 = arith.constant 1 : index
    %c0_356 = arith.constant 0 : index
    %c3_357 = arith.constant 3 : index
    %c0_358 = arith.constant 0 : index
    %493 = vector.load %arg5[%c1_355, %c0_356, %c3_357, %c0_358] : memref<2x2x24x128xf32, #tpu.memory_space<vmem>>, vector<1x2x16x128xf32>
    %494 = vector.shape_cast %493 : vector<1x2x16x128xf32> to vector<2x16x128xf32>
    %495 = vector.broadcast %489 : f32 to vector<2x16x128xf32>
    %496 = arith.mulf %495, %492 : vector<2x16x128xf32>
    %497 = vector.broadcast %490 : f32 to vector<2x16x128xf32>
    %498 = arith.mulf %497, %494 : vector<2x16x128xf32>
    %499 = arith.addf %496, %498 : vector<2x16x128xf32>
    %500 = arith.addf %488, %499 : vector<2x16x128xf32>
    %c33 = arith.constant 33 : index
    %501 = memref.load %arg2[%c33] : memref<98xf32, #tpu.memory_space<smem>>
    %c82 = arith.constant 82 : index
    %502 = memref.load %arg2[%c82] : memref<98xf32, #tpu.memory_space<smem>>
    %c0_359 = arith.constant 0 : index
    %c0_360 = arith.constant 0 : index
    %c4_361 = arith.constant 4 : index
    %c0_362 = arith.constant 0 : index
    %503 = vector.load %arg5[%c0_359, %c0_360, %c4_361, %c0_362] : memref<2x2x24x128xf32, #tpu.memory_space<vmem>>, vector<1x2x16x128xf32>
    %504 = vector.shape_cast %503 : vector<1x2x16x128xf32> to vector<2x16x128xf32>
    %c1_363 = arith.constant 1 : index
    %c0_364 = arith.constant 0 : index
    %c4_365 = arith.constant 4 : index
    %c0_366 = arith.constant 0 : index
    %505 = vector.load %arg5[%c1_363, %c0_364, %c4_365, %c0_366] : memref<2x2x24x128xf32, #tpu.memory_space<vmem>>, vector<1x2x16x128xf32>
    %506 = vector.shape_cast %505 : vector<1x2x16x128xf32> to vector<2x16x128xf32>
    %507 = vector.broadcast %501 : f32 to vector<2x16x128xf32>
    %508 = arith.mulf %507, %504 : vector<2x16x128xf32>
    %509 = vector.broadcast %502 : f32 to vector<2x16x128xf32>
    %510 = arith.mulf %509, %506 : vector<2x16x128xf32>
    %511 = arith.addf %508, %510 : vector<2x16x128xf32>
    %512 = arith.addf %500, %511 : vector<2x16x128xf32>
    %c40 = arith.constant 40 : index
    %513 = memref.load %arg2[%c40] : memref<98xf32, #tpu.memory_space<smem>>
    %c89 = arith.constant 89 : index
    %514 = memref.load %arg2[%c89] : memref<98xf32, #tpu.memory_space<smem>>
    %c0_367 = arith.constant 0 : index
    %c0_368 = arith.constant 0 : index
    %c5_369 = arith.constant 5 : index
    %c0_370 = arith.constant 0 : index
    %515 = vector.load %arg5[%c0_367, %c0_368, %c5_369, %c0_370] : memref<2x2x24x128xf32, #tpu.memory_space<vmem>>, vector<1x2x16x128xf32>
    %516 = vector.shape_cast %515 : vector<1x2x16x128xf32> to vector<2x16x128xf32>
    %c1_371 = arith.constant 1 : index
    %c0_372 = arith.constant 0 : index
    %c5_373 = arith.constant 5 : index
    %c0_374 = arith.constant 0 : index
    %517 = vector.load %arg5[%c1_371, %c0_372, %c5_373, %c0_374] : memref<2x2x24x128xf32, #tpu.memory_space<vmem>>, vector<1x2x16x128xf32>
    %518 = vector.shape_cast %517 : vector<1x2x16x128xf32> to vector<2x16x128xf32>
    %519 = vector.broadcast %513 : f32 to vector<2x16x128xf32>
    %520 = arith.mulf %519, %516 : vector<2x16x128xf32>
    %521 = vector.broadcast %514 : f32 to vector<2x16x128xf32>
    %522 = arith.mulf %521, %518 : vector<2x16x128xf32>
    %523 = arith.addf %520, %522 : vector<2x16x128xf32>
    %524 = arith.addf %512, %523 : vector<2x16x128xf32>
    %c47 = arith.constant 47 : index
    %525 = memref.load %arg2[%c47] : memref<98xf32, #tpu.memory_space<smem>>
    %c96 = arith.constant 96 : index
    %526 = memref.load %arg2[%c96] : memref<98xf32, #tpu.memory_space<smem>>
    %c0_375 = arith.constant 0 : index
    %c0_376 = arith.constant 0 : index
    %c6_377 = arith.constant 6 : index
    %c0_378 = arith.constant 0 : index
    %527 = vector.load %arg5[%c0_375, %c0_376, %c6_377, %c0_378] : memref<2x2x24x128xf32, #tpu.memory_space<vmem>>, vector<1x2x16x128xf32>
    %528 = vector.shape_cast %527 : vector<1x2x16x128xf32> to vector<2x16x128xf32>
    %c1_379 = arith.constant 1 : index
    %c0_380 = arith.constant 0 : index
    %c6_381 = arith.constant 6 : index
    %c0_382 = arith.constant 0 : index
    %529 = vector.load %arg5[%c1_379, %c0_380, %c6_381, %c0_382] : memref<2x2x24x128xf32, #tpu.memory_space<vmem>>, vector<1x2x16x128xf32>
    %530 = vector.shape_cast %529 : vector<1x2x16x128xf32> to vector<2x16x128xf32>
    %531 = vector.broadcast %525 : f32 to vector<2x16x128xf32>
    %532 = arith.mulf %531, %528 : vector<2x16x128xf32>
    %533 = vector.broadcast %526 : f32 to vector<2x16x128xf32>
    %534 = arith.mulf %533, %530 : vector<2x16x128xf32>
    %535 = arith.addf %532, %534 : vector<2x16x128xf32>
    %536 = arith.addf %524, %535 : vector<2x16x128xf32>
    %c125_i32 = arith.constant 125 : i32
    %537 = tpu.dynamic_rotate %14 by %c125_i32 dim 1 : vector<96x128xf32>, i32 -> vector<96x128xf32>
    %538 = vector.shape_cast %537 : vector<96x128xf32> to vector<2x2x24x128xf32>
    %c0_383 = arith.constant 0 : index
    %c0_384 = arith.constant 0 : index
    %c0_385 = arith.constant 0 : index
    %c0_386 = arith.constant 0 : index
    %539 = vector.load %arg5[%c0_383, %c0_384, %c0_385, %c0_386] : memref<2x2x24x128xf32, #tpu.memory_space<vmem>>, vector<2x2x24x128xf32>
    tpu.vector_store %arg5[%c0_383, %c0_384, %c0_385, %c0_386], %538 {strides = array<i32>} : memref<2x2x24x128xf32, #tpu.memory_space<vmem>>, vector<2x2x24x128xf32>,
    %c6_387 = arith.constant 6 : index
    %540 = memref.load %arg2[%c6_387] : memref<98xf32, #tpu.memory_space<smem>>
    %c55 = arith.constant 55 : index
    %541 = memref.load %arg2[%c55] : memref<98xf32, #tpu.memory_space<smem>>
    %c0_388 = arith.constant 0 : index
    %c0_389 = arith.constant 0 : index
    %c0_390 = arith.constant 0 : index
    %c0_391 = arith.constant 0 : index
    %542 = vector.load %arg5[%c0_388, %c0_389, %c0_390, %c0_391] : memref<2x2x24x128xf32, #tpu.memory_space<vmem>>, vector<1x2x16x128xf32>
    %543 = vector.shape_cast %542 : vector<1x2x16x128xf32> to vector<2x16x128xf32>
    %c1_392 = arith.constant 1 : index
    %c0_393 = arith.constant 0 : index
    %c0_394 = arith.constant 0 : index
    %c0_395 = arith.constant 0 : index
    %544 = vector.load %arg5[%c1_392, %c0_393, %c0_394, %c0_395] : memref<2x2x24x128xf32, #tpu.memory_space<vmem>>, vector<1x2x16x128xf32>
    %545 = vector.shape_cast %544 : vector<1x2x16x128xf32> to vector<2x16x128xf32>
    %546 = vector.broadcast %540 : f32 to vector<2x16x128xf32>
    %547 = arith.mulf %546, %543 : vector<2x16x128xf32>
    %548 = vector.broadcast %541 : f32 to vector<2x16x128xf32>
    %549 = arith.mulf %548, %545 : vector<2x16x128xf32>
    %550 = arith.addf %547, %549 : vector<2x16x128xf32>
    %551 = arith.addf %536, %550 : vector<2x16x128xf32>
    %c13 = arith.constant 13 : index
    %552 = memref.load %arg2[%c13] : memref<98xf32, #tpu.memory_space<smem>>
    %c62 = arith.constant 62 : index
    %553 = memref.load %arg2[%c62] : memref<98xf32, #tpu.memory_space<smem>>
    %c0_396 = arith.constant 0 : index
    %c0_397 = arith.constant 0 : index
    %c1_398 = arith.constant 1 : index
    %c0_399 = arith.constant 0 : index
    %554 = vector.load %arg5[%c0_396, %c0_397, %c1_398, %c0_399] : memref<2x2x24x128xf32, #tpu.memory_space<vmem>>, vector<1x2x16x128xf32>
    %555 = vector.shape_cast %554 : vector<1x2x16x128xf32> to vector<2x16x128xf32>
    %c1_400 = arith.constant 1 : index
    %c0_401 = arith.constant 0 : index
    %c1_402 = arith.constant 1 : index
    %c0_403 = arith.constant 0 : index
    %556 = vector.load %arg5[%c1_400, %c0_401, %c1_402, %c0_403] : memref<2x2x24x128xf32, #tpu.memory_space<vmem>>, vector<1x2x16x128xf32>
    %557 = vector.shape_cast %556 : vector<1x2x16x128xf32> to vector<2x16x128xf32>
    %558 = vector.broadcast %552 : f32 to vector<2x16x128xf32>
    %559 = arith.mulf %558, %555 : vector<2x16x128xf32>
    %560 = vector.broadcast %553 : f32 to vector<2x16x128xf32>
    %561 = arith.mulf %560, %557 : vector<2x16x128xf32>
    %562 = arith.addf %559, %561 : vector<2x16x128xf32>
    %563 = arith.addf %551, %562 : vector<2x16x128xf32>
    %c20 = arith.constant 20 : index
    %564 = memref.load %arg2[%c20] : memref<98xf32, #tpu.memory_space<smem>>
    %c69 = arith.constant 69 : index
    %565 = memref.load %arg2[%c69] : memref<98xf32, #tpu.memory_space<smem>>
    %c0_404 = arith.constant 0 : index
    %c0_405 = arith.constant 0 : index
    %c2_406 = arith.constant 2 : index
    %c0_407 = arith.constant 0 : index
    %566 = vector.load %arg5[%c0_404, %c0_405, %c2_406, %c0_407] : memref<2x2x24x128xf32, #tpu.memory_space<vmem>>, vector<1x2x16x128xf32>
    %567 = vector.shape_cast %566 : vector<1x2x16x128xf32> to vector<2x16x128xf32>
    %c1_408 = arith.constant 1 : index
    %c0_409 = arith.constant 0 : index
    %c2_410 = arith.constant 2 : index
    %c0_411 = arith.constant 0 : index
    %568 = vector.load %arg5[%c1_408, %c0_409, %c2_410, %c0_411] : memref<2x2x24x128xf32, #tpu.memory_space<vmem>>, vector<1x2x16x128xf32>
    %569 = vector.shape_cast %568 : vector<1x2x16x128xf32> to vector<2x16x128xf32>
    %570 = vector.broadcast %564 : f32 to vector<2x16x128xf32>
    %571 = arith.mulf %570, %567 : vector<2x16x128xf32>
    %572 = vector.broadcast %565 : f32 to vector<2x16x128xf32>
    %573 = arith.mulf %572, %569 : vector<2x16x128xf32>
    %574 = arith.addf %571, %573 : vector<2x16x128xf32>
    %575 = arith.addf %563, %574 : vector<2x16x128xf32>
    %c27 = arith.constant 27 : index
    %576 = memref.load %arg2[%c27] : memref<98xf32, #tpu.memory_space<smem>>
    %c76 = arith.constant 76 : index
    %577 = memref.load %arg2[%c76] : memref<98xf32, #tpu.memory_space<smem>>
    %c0_412 = arith.constant 0 : index
    %c0_413 = arith.constant 0 : index
    %c3_414 = arith.constant 3 : index
    %c0_415 = arith.constant 0 : index
    %578 = vector.load %arg5[%c0_412, %c0_413, %c3_414, %c0_415] : memref<2x2x24x128xf32, #tpu.memory_space<vmem>>, vector<1x2x16x128xf32>
    %579 = vector.shape_cast %578 : vector<1x2x16x128xf32> to vector<2x16x128xf32>
    %c1_416 = arith.constant 1 : index
    %c0_417 = arith.constant 0 : index
    %c3_418 = arith.constant 3 : index
    %c0_419 = arith.constant 0 : index
    %580 = vector.load %arg5[%c1_416, %c0_417, %c3_418, %c0_419] : memref<2x2x24x128xf32, #tpu.memory_space<vmem>>, vector<1x2x16x128xf32>
    %581 = vector.shape_cast %580 : vector<1x2x16x128xf32> to vector<2x16x128xf32>
    %582 = vector.broadcast %576 : f32 to vector<2x16x128xf32>
    %583 = arith.mulf %582, %579 : vector<2x16x128xf32>
    %584 = vector.broadcast %577 : f32 to vector<2x16x128xf32>
    %585 = arith.mulf %584, %581 : vector<2x16x128xf32>
    %586 = arith.addf %583, %585 : vector<2x16x128xf32>
    %587 = arith.addf %575, %586 : vector<2x16x128xf32>
    %c34 = arith.constant 34 : index
    %588 = memref.load %arg2[%c34] : memref<98xf32, #tpu.memory_space<smem>>
    %c83 = arith.constant 83 : index
    %589 = memref.load %arg2[%c83] : memref<98xf32, #tpu.memory_space<smem>>
    %c0_420 = arith.constant 0 : index
    %c0_421 = arith.constant 0 : index
    %c4_422 = arith.constant 4 : index
    %c0_423 = arith.constant 0 : index
    %590 = vector.load %arg5[%c0_420, %c0_421, %c4_422, %c0_423] : memref<2x2x24x128xf32, #tpu.memory_space<vmem>>, vector<1x2x16x128xf32>
    %591 = vector.shape_cast %590 : vector<1x2x16x128xf32> to vector<2x16x128xf32>
    %c1_424 = arith.constant 1 : index
    %c0_425 = arith.constant 0 : index
    %c4_426 = arith.constant 4 : index
    %c0_427 = arith.constant 0 : index
    %592 = vector.load %arg5[%c1_424, %c0_425, %c4_426, %c0_427] : memref<2x2x24x128xf32, #tpu.memory_space<vmem>>, vector<1x2x16x128xf32>
    %593 = vector.shape_cast %592 : vector<1x2x16x128xf32> to vector<2x16x128xf32>
    %594 = vector.broadcast %588 : f32 to vector<2x16x128xf32>
    %595 = arith.mulf %594, %591 : vector<2x16x128xf32>
    %596 = vector.broadcast %589 : f32 to vector<2x16x128xf32>
    %597 = arith.mulf %596, %593 : vector<2x16x128xf32>
    %598 = arith.addf %595, %597 : vector<2x16x128xf32>
    %599 = arith.addf %587, %598 : vector<2x16x128xf32>
    %c41 = arith.constant 41 : index
    %600 = memref.load %arg2[%c41] : memref<98xf32, #tpu.memory_space<smem>>
    %c90 = arith.constant 90 : index
    %601 = memref.load %arg2[%c90] : memref<98xf32, #tpu.memory_space<smem>>
    %c0_428 = arith.constant 0 : index
    %c0_429 = arith.constant 0 : index
    %c5_430 = arith.constant 5 : index
    %c0_431 = arith.constant 0 : index
    %602 = vector.load %arg5[%c0_428, %c0_429, %c5_430, %c0_431] : memref<2x2x24x128xf32, #tpu.memory_space<vmem>>, vector<1x2x16x128xf32>
    %603 = vector.shape_cast %602 : vector<1x2x16x128xf32> to vector<2x16x128xf32>
    %c1_432 = arith.constant 1 : index
    %c0_433 = arith.constant 0 : index
    %c5_434 = arith.constant 5 : index
    %c0_435 = arith.constant 0 : index
    %604 = vector.load %arg5[%c1_432, %c0_433, %c5_434, %c0_435] : memref<2x2x24x128xf32, #tpu.memory_space<vmem>>, vector<1x2x16x128xf32>
    %605 = vector.shape_cast %604 : vector<1x2x16x128xf32> to vector<2x16x128xf32>
    %606 = vector.broadcast %600 : f32 to vector<2x16x128xf32>
    %607 = arith.mulf %606, %603 : vector<2x16x128xf32>
    %608 = vector.broadcast %601 : f32 to vector<2x16x128xf32>
    %609 = arith.mulf %608, %605 : vector<2x16x128xf32>
    %610 = arith.addf %607, %609 : vector<2x16x128xf32>
    %611 = arith.addf %599, %610 : vector<2x16x128xf32>
    %c48 = arith.constant 48 : index
    %612 = memref.load %arg2[%c48] : memref<98xf32, #tpu.memory_space<smem>>
    %c97 = arith.constant 97 : index
    %613 = memref.load %arg2[%c97] : memref<98xf32, #tpu.memory_space<smem>>
    %c0_436 = arith.constant 0 : index
    %c0_437 = arith.constant 0 : index
    %c6_438 = arith.constant 6 : index
    %c0_439 = arith.constant 0 : index
    %614 = vector.load %arg5[%c0_436, %c0_437, %c6_438, %c0_439] : memref<2x2x24x128xf32, #tpu.memory_space<vmem>>, vector<1x2x16x128xf32>
    %615 = vector.shape_cast %614 : vector<1x2x16x128xf32> to vector<2x16x128xf32>
    %c1_440 = arith.constant 1 : index
    %c0_441 = arith.constant 0 : index
    %c6_442 = arith.constant 6 : index
    %c0_443 = arith.constant 0 : index
    %616 = vector.load %arg5[%c1_440, %c0_441, %c6_442, %c0_443] : memref<2x2x24x128xf32, #tpu.memory_space<vmem>>, vector<1x2x16x128xf32>
    %617 = vector.shape_cast %616 : vector<1x2x16x128xf32> to vector<2x16x128xf32>
    %618 = vector.broadcast %612 : f32 to vector<2x16x128xf32>
    %619 = arith.mulf %618, %615 : vector<2x16x128xf32>
    %620 = vector.broadcast %613 : f32 to vector<2x16x128xf32>
    %621 = arith.mulf %620, %617 : vector<2x16x128xf32>
    %622 = arith.addf %619, %621 : vector<2x16x128xf32>
    %623 = arith.addf %611, %622 : vector<2x16x128xf32>
    %624 = vector.extract_strided_slice %623 {offsets = [0, 0, 0], sizes = [2, 16, 16], strides = [1, 1, 1]} : vector<2x16x128xf32> to vector<2x16x16xf32>
    %625 = arith.negf %624 : vector<2x16x16xf32>
    %626 = math.exp %625 : vector<2x16x16xf32>
    %cst_444 = arith.constant 1.000000e+00 : f32
    %627 = vector.broadcast %cst_444 : f32 to vector<2x16x16xf32>
    %628 = arith.addf %627, %626 : vector<2x16x16xf32>
    %629 = arith.divf %627, %628 : vector<2x16x16xf32>
    %c0_445 = arith.constant 0 : index
    %c0_446 = arith.constant 0 : index
    %c0_447 = arith.constant 0 : index
    %c0_448 = arith.constant 0 : index
    %630 = vector.load %arg3[%c0_445, %c0_446, %c0_447, %c0_448] : memref<2x1x16x16xf32, #tpu.memory_space<vmem>>, vector<2x1x16x16xf32>
    %631 = vector.shape_cast %630 : vector<2x1x16x16xf32> to vector<2x16x16xf32>
    %632 = vector.shape_cast %629 : vector<2x16x16xf32> to vector<2x1x16x16xf32>
    tpu.vector_store %arg3[%c0_445, %c0_446, %c0_447, %c0_448], %632 {strides = array<i32>} : memref<2x1x16x16xf32, #tpu.memory_space<vmem>>, vector<2x1x16x16xf32>,
    return
  }
  func.func @transform_0(%arg0: i32) -> (i32, i32, i32, i32) {
    %c0_i32 = arith.constant 0 : i32
    %c0_i32_0 = arith.constant 0 : i32
    %c0_i32_1 = arith.constant 0 : i32
    %c0_i32_2 = arith.constant 0 : i32
    return %arg0, %c0_i32, %c0_i32_0, %c0_i32_1 : i32, i32, i32, i32
  }
  func.func @transform_1(%arg0: i32) -> i32 {
    %c0_i32 = arith.constant 0 : i32
    %c0_i32_0 = arith.constant 0 : i32
    return %c0_i32 : i32
  }
  func.func @transform_2(%arg0: i32) -> (i32, i32, i32, i32) {
    %c0_i32 = arith.constant 0 : i32
    %c0_i32_0 = arith.constant 0 : i32
    %c0_i32_1 = arith.constant 0 : i32
    %c0_i32_2 = arith.constant 0 : i32
    return %arg0, %c0_i32, %c0_i32_0, %c0_i32_1 : i32, i32, i32, i32
  }
}

</mosaic_0001>

<llo_original>
// kernel: tpu_custom_call.1
$region0: #{tpu_custom_call.1}
  #allocation0 [shape = 'u32[]', space=smem, size = 0x4, offset = 0x4, fixed_abs, tag = 'smem constant byte address 0x4 - core index']
  #allocation1 [shape = 'u32[72,128]{1,0:T(1,128)}', space=vmem, size = 0x9000, scoped, tag = 'internal scratch']
  #allocation2 [shape = 'f32[2,2,24,128]{3,2,1,0:T(8,128)}', space=vmem, size = 0xc000, scoped, tag = 'scratch operand']
  #allocation3 [shape = 'f32[2,2,24,128]{3,2,1,0:T(8,128)}', space=vmem, size = 0xc000, scoped, tag = 'scratch operand']
  %s0 = inlined_call_operand.hbm [shape: f32[2,4,16,16], index: 0, kind: input, shape index: {}]
  %s1 = inlined_call_operand.hbm [shape: f32[98], index: 1, kind: input, shape index: {}]
  %s2 = inlined_call_operand.hbm [shape: f32[2,1,16,16], index: 2, kind: output, shape index: {}]
  %s3 = sld [smem:[#allocation0]]
  $region26: #{tpu_custom_call.1} parent=0
    _
  %s5 = ssub.s32 1, %s3
  %s6 = scalar_select 0, %s5, %s3
  $region1: #{tpu_custom_call.1} parent=0
    #allocation4 [shape = 'u8[65536]{0}', space=vmem, size = 0x10000, scoped, tag = 'input window, operand 0, single buffered']
    #allocation5 [shape = 's32[1]{0}', space=sflag, size = 0x4, scoped, tag = 'scoped memory for tpu_custom_call.1']
    #allocation6 [shape = 's32[1]{0}', space=sflag, size = 0x4, scoped, tag = 'scoped memory for tpu_custom_call.1']
    #allocation7 [shape = 's32[1]{0}', space=sflag, size = 0x4, scoped, tag = 'scoped memory for tpu_custom_call.1']
    #allocation8 [shape = 'u8[512]{0}', space=smem, size = 0x200, scoped, tag = 'input window, operand 1, single buffered']
    #allocation9 [shape = 'u8[16384]{0}', space=vmem, size = 0x4000, scoped, tag = 'output window, operand 0, single buffered']
    %7 = vsyncpa [#allocation5], 0
    %8 = vsyncpa [#allocation7], 0
    %9 = vsyncpa [#allocation6], 0
    // Predicated region
    $region2: #{tpu_custom_call.1} parent=1 // pred_check
      _
    $region3: #{tpu_custom_call.1} parent=1 // pred_check_branch
      %11 = sbr.rel (0) target = $region5
    $region4: #{tpu_custom_call.1} parent=1 // pred_region
      %13 = vsyncadd [#allocation5], 0
      %s14 = sshll.u32 %s0, 4
      %s15 = int_to_ptr.hbm [resolvable:$true] %s14
      %s16 = sshll.u32 [#allocation4], 4
      %s17 = int_to_ptr.vmem [resolvable:$true] %s16
      %22 = dma.hbm_to_vmem [thread:$0]  %s15, 2048, %s17, [#allocation5], 128, 128, 8
    $region5: #{tpu_custom_call.1} parent=1 // pred_fallthru
      _
    // Predicated region
    $region6: #{tpu_custom_call.1} parent=1 // pred_check
      _
    $region7: #{tpu_custom_call.1} parent=1 // pred_check_branch
      %24 = sbr.rel (0) target = $region9
    $region8: #{tpu_custom_call.1} parent=1 // pred_region
      %26 = vsyncadd [#allocation7], 0
      %s28 = sshll.u32 %s1, 4
      %s29 = int_to_ptr.hbm [resolvable:$true] %s28
      %31 = dma.hbm_to_smem %s29, 16, [#allocation8], [#allocation7]
    $region9: #{tpu_custom_call.1} parent=1 // pred_fallthru
      _
    // Predicated region
    $region10: #{tpu_custom_call.1} parent=1 // pred_check
      _
    $region11: #{tpu_custom_call.1} parent=1 // pred_check_branch
      %33 = sbr.rel (0) target = $region13
    $region12: #{tpu_custom_call.1} parent=1 // pred_region
      %35 = dma.done [#allocation5], 2048
    $region13: #{tpu_custom_call.1} parent=1 // pred_fallthru
      _
    // Predicated region
    $region14: #{tpu_custom_call.1} parent=1 // pred_check
      _
    $region15: #{tpu_custom_call.1} parent=1 // pred_check_branch
      %37 = sbr.rel (0) target = $region17
    $region16: #{tpu_custom_call.1} parent=1 // pred_region
      %39 = dma.done [#allocation7], 16
    $region17: #{tpu_custom_call.1} parent=1 // pred_fallthru
      _
    %40 = sfence
    %v41 = vld [vmem:[#allocation4] sm:$0xff]
    %v42 = vld [vmem:[#allocation4 + $0x8] sm:$0xff]
    %v43 = vld [vmem:[#allocation4 + $0x10] sm:$0xff]
    %v44 = vld [vmem:[#allocation4 + $0x18] sm:$0xff]
    %v45 = vld [vmem:[#allocation4 + $0x20] sm:$0xff]
    %v46 = vld [vmem:[#allocation4 + $0x28] sm:$0xff]
    %v47 = vld [vmem:[#allocation4 + $0x30] sm:$0xff]
    %v48 = vld [vmem:[#allocation4 + $0x38] sm:$0xff]
    %v49 = vld [vmem:[#allocation4 + $0x40] sm:$0xff]
    %v50 = vld [vmem:[#allocation4 + $0x48] sm:$0xff]
    %v51 = vld [vmem:[#allocation4 + $0x50] sm:$0xff]
    %v52 = vld [vmem:[#allocation4 + $0x58] sm:$0xff]
    %v53 = vld [vmem:[#allocation4 + $0x60] sm:$0xff]
    %v54 = vld [vmem:[#allocation4 + $0x68] sm:$0xff]
    %v55 = vld [vmem:[#allocation4 + $0x70] sm:$0xff]
    %v56 = vld [vmem:[#allocation4 + $0x78] sm:$0xff]
    %vm57 = vcmask 130048
    %v58 = vsel %vm57, %v41, 0.0
    %v59 = vsel %vm57, %v43, 0.0
    %v60 = vadd.f32 %v58, %v59
    %v61 = vsel %vm57, %v45, 0.0
    %v62 = vadd.f32 %v60, %v61
    %v63 = vsel %vm57, %v47, 0.0
    %v64 = vadd.f32 %v62, %v63
    %v65 = vsel %vm57, %v42, 0.0
    %v66 = vsel %vm57, %v44, 0.0
    %v67 = vadd.f32 %v65, %v66
    %v68 = vsel %vm57, %v46, 0.0
    %v69 = vadd.f32 %v67, %v68
    %v70 = vsel %vm57, %v48, 0.0
    %v71 = vadd.f32 %v69, %v70
    %v72 = vsel %vm57, %v49, 0.0
    %v73 = vsel %vm57, %v51, 0.0
    %v74 = vadd.f32 %v72, %v73
    %v75 = vsel %vm57, %v53, 0.0
    %v76 = vadd.f32 %v74, %v75
    %v77 = vsel %vm57, %v55, 0.0
    %v78 = vadd.f32 %v76, %v77
    %v79 = vsel %vm57, %v50, 0.0
    %v80 = vsel %vm57, %v52, 0.0
    %v81 = vadd.f32 %v79, %v80
    %v82 = vsel %vm57, %v54, 0.0
    %v83 = vadd.f32 %v81, %v82
    %v84 = vsel %vm57, %v56, 0.0
    %v85 = vadd.f32 %v83, %v84
    %v86 = vrcp.pop 4.0
    %v87 = vmul.f32 4.0, %v86
    %v88 = vsub.f32 1.0, %v87
    %v89 = vmul.f32 %v86, %v88
    %v90 = vadd.f32 %v86, %v89
    %vm91 = vweird.f32 %v86
    %v92 = vsel %vm91, %v86, %v90
    %v93 = vmul.f32 %v64, %v92
    %v94 = vmul.f32 %v71, %v92
    %v95 = vmul.f32 %v78, %v92
    %v96 = vmul.f32 %v85, %v92
    %v97 = vsel %vm57, %v41, -inf
    %v98 = vsel %vm57, %v43, -inf
    %v99 = vmax.f32 %v97, %v98
    %v100 = vsel %vm57, %v45, -inf
    %v101 = vmax.f32 %v99, %v100
    %v102 = vsel %vm57, %v47, -inf
    %v103 = vmax.f32 %v101, %v102
    %v104 = vsel %vm57, %v42, -inf
    %v105 = vsel %vm57, %v44, -inf
    %v106 = vmax.f32 %v104, %v105
    %v107 = vsel %vm57, %v46, -inf
    %v108 = vmax.f32 %v106, %v107
    %v109 = vsel %vm57, %v48, -inf
    %v110 = vmax.f32 %v108, %v109
    %v111 = vsel %vm57, %v49, -inf
    %v112 = vsel %vm57, %v51, -inf
    %v113 = vmax.f32 %v111, %v112
    %v114 = vsel %vm57, %v53, -inf
    %v115 = vmax.f32 %v113, %v114
    %v116 = vsel %vm57, %v55, -inf
    %v117 = vmax.f32 %v115, %v116
    %v118 = vsel %vm57, %v50, -inf
    %v119 = vsel %vm57, %v52, -inf
    %v120 = vmax.f32 %v118, %v119
    %v121 = vsel %vm57, %v54, -inf
    %v122 = vmax.f32 %v120, %v121
    %v123 = vsel %vm57, %v56, -inf
    %v124 = vmax.f32 %v122, %v123
    %125 = vst [vmem:[#allocation2] sm:$0xff] 0.0
    %126 = vst [vmem:[#allocation2 + $0x8] sm:$0xff] 0.0
    %127 = vst [vmem:[#allocation2 + $0x10] sm:$0xff] 0.0
    %128 = vst [vmem:[#allocation2 + $0x18] sm:$0xff] 0.0
    %129 = vst [vmem:[#allocation2 + $0x20] sm:$0xff] 0.0
    %130 = vst [vmem:[#allocation2 + $0x28] sm:$0xff] 0.0
    %131 = vst [vmem:[#allocation2 + $0x30] sm:$0xff] 0.0
    %132 = vst [vmem:[#allocation2 + $0x38] sm:$0xff] 0.0
    %133 = vst [vmem:[#allocation2 + $0x40] sm:$0xff] 0.0
    %134 = vst [vmem:[#allocation2 + $0x48] sm:$0xff] 0.0
    %135 = vst [vmem:[#allocation2 + $0x50] sm:$0xff] 0.0
    %136 = vst [vmem:[#allocation2 + $0x58] sm:$0xff] 0.0
    %137 = vst.msk [vmem:[#allocation2 + $0x3] sm:$0xff] %vm57, %v93
    %138 = vst.msk [vmem:[#allocation2 + $0xb] sm:$0xff] %vm57, %v94
    %139 = vst.msk [vmem:[#allocation2 + $0x1b] sm:$0xff] %vm57, %v95
    %140 = vst.msk [vmem:[#allocation2 + $0x23] sm:$0xff] %vm57, %v96
    %s141 = scalar_lea.vmem [#allocation2], 48
    %142 = vst.msk [vmem:[%s141 + $0x3] sm:$0xff] %vm57, %v103
    %143 = vst.msk [vmem:[%s141 + $0xb] sm:$0xff] %vm57, %v110
    %144 = vst.msk [vmem:[%s141 + $0x1b] sm:$0xff] %vm57, %v117
    %145 = vst.msk [vmem:[%s141 + $0x23] sm:$0xff] %vm57, %v124
    %v146 = vld [vmem:[#allocation2] sm:$0xff]
    %v147 = vld [vmem:[#allocation2 + $0x8] sm:$0xff]
    %v148 = vld [vmem:[#allocation2 + $0x10] sm:$0xff]
    %v149 = vld [vmem:[#allocation2 + $0x18] sm:$0xff]
    %v150 = vld [vmem:[#allocation2 + $0x20] sm:$0xff]
    %v151 = vld [vmem:[#allocation2 + $0x28] sm:$0xff]
    %v152 = vld [vmem:[#allocation2 + $0x30] sm:$0xff]
    %v153 = vld [vmem:[#allocation2 + $0x38] sm:$0xff]
    %v154 = vld [vmem:[#allocation2 + $0x40] sm:$0xff]
    %v155 = vld [vmem:[#allocation2 + $0x48] sm:$0xff]
    %v156 = vld [vmem:[#allocation2 + $0x50] sm:$0xff]
    %v157 = vld [vmem:[#allocation2 + $0x58] sm:$0xff]
    %158 = vrot.lane.b32.xlu0 %v146, 3
    %v159 = vpop.permute.xlu0 %158
    %160 = vrot.lane.b32.xlu0 %v147, 3
    %v161 = vpop.permute.xlu0 %160
    %162 = vrot.lane.b32.xlu0 %v148, 3
    %v163 = vpop.permute.xlu0 %162
    %164 = vrot.lane.b32.xlu0 %v149, 3
    %v165 = vpop.permute.xlu0 %164
    %166 = vrot.lane.b32.xlu0 %v150, 3
    %v167 = vpop.permute.xlu0 %166
    %168 = vrot.lane.b32.xlu0 %v151, 3
    %v169 = vpop.permute.xlu0 %168
    %170 = vrot.lane.b32.xlu0 %v152, 3
    %v171 = vpop.permute.xlu0 %170
    %172 = vrot.lane.b32.xlu0 %v153, 3
    %v173 = vpop.permute.xlu0 %172
    %174 = vrot.lane.b32.xlu0 %v154, 3
    %v175 = vpop.permute.xlu0 %174
    %176 = vrot.lane.b32.xlu0 %v155, 3
    %v177 = vpop.permute.xlu0 %176
    %178 = vrot.lane.b32.xlu0 %v156, 3
    %v179 = vpop.permute.xlu0 %178
    %180 = vrot.lane.b32.xlu0 %v157, 3
    %v181 = vpop.permute.xlu0 %180
    %182 = vst [vmem:[#allocation3] sm:$0xff] %v159
    %183 = vst [vmem:[#allocation3 + $0x8] sm:$0xff] %v161
    %184 = vst [vmem:[#allocation3 + $0x10] sm:$0xff] %v163
    %185 = vst [vmem:[#allocation3 + $0x18] sm:$0xff] %v165
    %186 = vst [vmem:[#allocation3 + $0x20] sm:$0xff] %v167
    %187 = vst [vmem:[#allocation3 + $0x28] sm:$0xff] %v169
    %188 = vst [vmem:[#allocation3 + $0x30] sm:$0xff] %v171
    %189 = vst [vmem:[#allocation3 + $0x38] sm:$0xff] %v173
    %190 = vst [vmem:[#allocation3 + $0x40] sm:$0xff] %v175
    %191 = vst [vmem:[#allocation3 + $0x48] sm:$0xff] %v177
    %192 = vst [vmem:[#allocation3 + $0x50] sm:$0xff] %v179
    %193 = vst [vmem:[#allocation3 + $0x58] sm:$0xff] %v181
    %s194 = sld [smem:[#allocation8]]
    %s195 = sld [smem:[#allocation8 + $0x31]]
    %v196 = vld [vmem:[#allocation3] sm:$0xff]
    %v197 = vld [vmem:[#allocation3 + $0x8] sm:$0xff]
    %v198 = vld [vmem:[#allocation3 + $0x18] sm:$0xff]
    %v199 = vld [vmem:[#allocation3 + $0x20] sm:$0xff]
    %s200 = scalar_lea.vmem [#allocation3], 48
    %v201 = vld [vmem:[%s200] sm:$0xff]
    %v202 = vld [vmem:[%s200 + $0x8] sm:$0xff]
    %v203 = vld [vmem:[%s200 + $0x18] sm:$0xff]
    %v204 = vld [vmem:[%s200 + $0x20] sm:$0xff]
    %v205 = vstv %s194
    %v206 = vmul.f32 %v205, %v196
    %v207 = vmul.f32 %v205, %v197
    %v208 = vmul.f32 %v205, %v198
    %v209 = vmul.f32 %v205, %v199
    %v210 = vstv %s195
    %v211 = vmul.f32 %v210, %v201
    %v212 = vmul.f32 %v210, %v202
    %v213 = vmul.f32 %v210, %v203
    %v214 = vmul.f32 %v210, %v204
    %v215 = vadd.f32 %v206, %v211
    %v216 = vadd.f32 %v207, %v212
    %v217 = vadd.f32 %v208, %v213
    %v218 = vadd.f32 %v209, %v214
    %v219 = vadd.f32 %v215, 0.0
    %v220 = vadd.f32 %v216, 0.0
    %v221 = vadd.f32 %v217, 0.0
    %v222 = vadd.f32 %v218, 0.0
    %s223 = sld [smem:[#allocation8 + $0x7]]
    %s224 = sld [smem:[#allocation8 + $0x38]]
    %v225 = vld [vmem:[#allocation3 + $0x1] sm:$0xff]
    %v226 = vld [vmem:[#allocation3 + $0x9] sm:$0xff]
    %v227 = vld [vmem:[#allocation3 + $0x19] sm:$0xff]
    %v228 = vld [vmem:[#allocation3 + $0x21] sm:$0xff]
    %v229 = vld [vmem:[%s200 + $0x1] sm:$0xff]
    %v230 = vld [vmem:[%s200 + $0x9] sm:$0xff]
    %v231 = vld [vmem:[%s200 + $0x19] sm:$0xff]
    %v232 = vld [vmem:[%s200 + $0x21] sm:$0xff]
    %v233 = vstv %s223
    %v234 = vmul.f32 %v233, %v225
    %v235 = vmul.f32 %v233, %v226
    %v236 = vmul.f32 %v233, %v227
    %v237 = vmul.f32 %v233, %v228
    %v238 = vstv %s224
    %v239 = vmul.f32 %v238, %v229
    %v240 = vmul.f32 %v238, %v230
    %v241 = vmul.f32 %v238, %v231
    %v242 = vmul.f32 %v238, %v232
    %v243 = vadd.f32 %v234, %v239
    %v244 = vadd.f32 %v235, %v240
    %v245 = vadd.f32 %v236, %v241
    %v246 = vadd.f32 %v237, %v242
    %v247 = vadd.f32 %v219, %v243
    %v248 = vadd.f32 %v220, %v244
    %v249 = vadd.f32 %v221, %v245
    %v250 = vadd.f32 %v222, %v246
    %s251 = sld [smem:[#allocation8 + $0xe]]
    %s252 = sld [smem:[#allocation8 + $0x3f]]
    %v253 = vld [vmem:[#allocation3 + $0x2] sm:$0xff]
    %v254 = vld [vmem:[#allocation3 + $0xa] sm:$0xff]
    %v255 = vld [vmem:[#allocation3 + $0x1a] sm:$0xff]
    %v256 = vld [vmem:[#allocation3 + $0x22] sm:$0xff]
    %v257 = vld [vmem:[%s200 + $0x2] sm:$0xff]
    %v258 = vld [vmem:[%s200 + $0xa] sm:$0xff]
    %v259 = vld [vmem:[%s200 + $0x1a] sm:$0xff]
    %v260 = vld [vmem:[%s200 + $0x22] sm:$0xff]
    %v261 = vstv %s251
    %v262 = vmul.f32 %v261, %v253
    %v263 = vmul.f32 %v261, %v254
    %v264 = vmul.f32 %v261, %v255
    %v265 = vmul.f32 %v261, %v256
    %v266 = vstv %s252
    %v267 = vmul.f32 %v266, %v257
    %v268 = vmul.f32 %v266, %v258
    %v269 = vmul.f32 %v266, %v259
    %v270 = vmul.f32 %v266, %v260
    %v271 = vadd.f32 %v262, %v267
    %v272 = vadd.f32 %v263, %v268
    %v273 = vadd.f32 %v264, %v269
    %v274 = vadd.f32 %v265, %v270
    %v275 = vadd.f32 %v247, %v271
    %v276 = vadd.f32 %v248, %v272
    %v277 = vadd.f32 %v249, %v273
    %v278 = vadd.f32 %v250, %v274
    %s279 = sld [smem:[#allocation8 + $0x15]]
    %s280 = sld [smem:[#allocation8 + $0x46]]
    %v281 = vld [vmem:[#allocation3 + $0x3] sm:$0xff]
    %v282 = vld [vmem:[#allocation3 + $0xb] sm:$0xff]
    %v283 = vld [vmem:[#allocation3 + $0x1b] sm:$0xff]
    %v284 = vld [vmem:[#allocation3 + $0x23] sm:$0xff]
    %v285 = vld [vmem:[%s200 + $0x3] sm:$0xff]
    %v286 = vld [vmem:[%s200 + $0xb] sm:$0xff]
    %v287 = vld [vmem:[%s200 + $0x1b] sm:$0xff]
    %v288 = vld [vmem:[%s200 + $0x23] sm:$0xff]
    %v289 = vstv %s279
    %v290 = vmul.f32 %v289, %v281
    %v291 = vmul.f32 %v289, %v282
    %v292 = vmul.f32 %v289, %v283
    %v293 = vmul.f32 %v289, %v284
    %v294 = vstv %s280
    %v295 = vmul.f32 %v294, %v285
    %v296 = vmul.f32 %v294, %v286
    %v297 = vmul.f32 %v294, %v287
    %v298 = vmul.f32 %v294, %v288
    %v299 = vadd.f32 %v290, %v295
    %v300 = vadd.f32 %v291, %v296
    %v301 = vadd.f32 %v292, %v297
    %v302 = vadd.f32 %v293, %v298
    %v303 = vadd.f32 %v275, %v299
    %v304 = vadd.f32 %v276, %v300
    %v305 = vadd.f32 %v277, %v301
    %v306 = vadd.f32 %v278, %v302
    %s307 = sld [smem:[#allocation8 + $0x1c]]
    %s308 = sld [smem:[#allocation8 + $0x4d]]
    %v309 = vld [vmem:[#allocation3 + $0x4] sm:$0xff]
    %v310 = vld [vmem:[#allocation3 + $0xc] sm:$0xff]
    %v311 = vld [vmem:[#allocation3 + $0x1c] sm:$0xff]
    %v312 = vld [vmem:[#allocation3 + $0x24] sm:$0xff]
    %v313 = vld [vmem:[%s200 + $0x4] sm:$0xff]
    %v314 = vld [vmem:[%s200 + $0xc] sm:$0xff]
    %v315 = vld [vmem:[%s200 + $0x1c] sm:$0xff]
    %v316 = vld [vmem:[%s200 + $0x24] sm:$0xff]
    %v317 = vstv %s307
    %v318 = vmul.f32 %v317, %v309
    %v319 = vmul.f32 %v317, %v310
    %v320 = vmul.f32 %v317, %v311
    %v321 = vmul.f32 %v317, %v312
    %v322 = vstv %s308
    %v323 = vmul.f32 %v322, %v313
    %v324 = vmul.f32 %v322, %v314
    %v325 = vmul.f32 %v322, %v315
    %v326 = vmul.f32 %v322, %v316
    %v327 = vadd.f32 %v318, %v323
    %v328 = vadd.f32 %v319, %v324
    %v329 = vadd.f32 %v320, %v325
    %v330 = vadd.f32 %v321, %v326
    %v331 = vadd.f32 %v303, %v327
    %v332 = vadd.f32 %v304, %v328
    %v333 = vadd.f32 %v305, %v329
    %v334 = vadd.f32 %v306, %v330
    %s335 = sld [smem:[#allocation8 + $0x23]]
    %s336 = sld [smem:[#allocation8 + $0x54]]
    %v337 = vld [vmem:[#allocation3 + $0x5] sm:$0xff]
    %v338 = vld [vmem:[#allocation3 + $0xd] sm:$0xff]
    %v339 = vld [vmem:[#allocation3 + $0x1d] sm:$0xff]
    %v340 = vld [vmem:[#allocation3 + $0x25] sm:$0xff]
    %v341 = vld [vmem:[%s200 + $0x5] sm:$0xff]
    %v342 = vld [vmem:[%s200 + $0xd] sm:$0xff]
    %v343 = vld [vmem:[%s200 + $0x1d] sm:$0xff]
    %v344 = vld [vmem:[%s200 + $0x25] sm:$0xff]
    %v345 = vstv %s335
    %v346 = vmul.f32 %v345, %v337
    %v347 = vmul.f32 %v345, %v338
    %v348 = vmul.f32 %v345, %v339
    %v349 = vmul.f32 %v345, %v340
    %v350 = vstv %s336
    %v351 = vmul.f32 %v350, %v341
    %v352 = vmul.f32 %v350, %v342
    %v353 = vmul.f32 %v350, %v343
    %v354 = vmul.f32 %v350, %v344
    %v355 = vadd.f32 %v346, %v351
    %v356 = vadd.f32 %v347, %v352
    %v357 = vadd.f32 %v348, %v353
    %v358 = vadd.f32 %v349, %v354
    %v359 = vadd.f32 %v331, %v355
    %v360 = vadd.f32 %v332, %v356
    %v361 = vadd.f32 %v333, %v357
    %v362 = vadd.f32 %v334, %v358
    %s363 = sld [smem:[#allocation8 + $0x2a]]
    %s364 = sld [smem:[#allocation8 + $0x5b]]
    %v365 = vld [vmem:[#allocation3 + $0x6] sm:$0xff]
    %v366 = vld [vmem:[#allocation3 + $0xe] sm:$0xff]
    %v367 = vld [vmem:[#allocation3 + $0x1e] sm:$0xff]
    %v368 = vld [vmem:[#allocation3 + $0x26] sm:$0xff]
    %v369 = vld [vmem:[%s200 + $0x6] sm:$0xff]
    %v370 = vld [vmem:[%s200 + $0xe] sm:$0xff]
    %v371 = vld [vmem:[%s200 + $0x1e] sm:$0xff]
    %v372 = vld [vmem:[%s200 + $0x26] sm:$0xff]
    %v373 = vstv %s363
    %v374 = vmul.f32 %v373, %v365
    %v375 = vmul.f32 %v373, %v366
    %v376 = vmul.f32 %v373, %v367
    %v377 = vmul.f32 %v373, %v368
    %v378 = vstv %s364
    %v379 = vmul.f32 %v378, %v369
    %v380 = vmul.f32 %v378, %v370
    %v381 = vmul.f32 %v378, %v371
    %v382 = vmul.f32 %v378, %v372
    %v383 = vadd.f32 %v374, %v379
    %v384 = vadd.f32 %v375, %v380
    %v385 = vadd.f32 %v376, %v381
    %v386 = vadd.f32 %v377, %v382
    %v387 = vadd.f32 %v359, %v383
    %v388 = vadd.f32 %v360, %v384
    %v389 = vadd.f32 %v361, %v385
    %v390 = vadd.f32 %v362, %v386
    %391 = vrot.lane.b32.xlu0 %v146, 2
    %v392 = vpop.permute.xlu0 %391
    %393 = vrot.lane.b32.xlu0 %v147, 2
    %v394 = vpop.permute.xlu0 %393
    %395 = vrot.lane.b32.xlu0 %v148, 2
    %v396 = vpop.permute.xlu0 %395
    %397 = vrot.lane.b32.xlu0 %v149, 2
    %v398 = vpop.permute.xlu0 %397
    %399 = vrot.lane.b32.xlu0 %v150, 2
    %v400 = vpop.permute.xlu0 %399
    %401 = vrot.lane.b32.xlu0 %v151, 2
    %v402 = vpop.permute.xlu0 %401
    %403 = vrot.lane.b32.xlu0 %v152, 2
    %v404 = vpop.permute.xlu0 %403
    %405 = vrot.lane.b32.xlu0 %v153, 2
    %v406 = vpop.permute.xlu0 %405
    %407 = vrot.lane.b32.xlu0 %v154, 2
    %v408 = vpop.permute.xlu0 %407
    %409 = vrot.lane.b32.xlu0 %v155, 2
    %v410 = vpop.permute.xlu0 %409
    %411 = vrot.lane.b32.xlu0 %v156, 2
    %v412 = vpop.permute.xlu0 %411
    %413 = vrot.lane.b32.xlu0 %v157, 2
    %v414 = vpop.permute.xlu0 %413
    %415 = vst [vmem:[#allocation3] sm:$0xff] %v392
    %416 = vst [vmem:[#allocation3 + $0x8] sm:$0xff] %v394
    %417 = vst [vmem:[#allocation3 + $0x10] sm:$0xff] %v396
    %418 = vst [vmem:[#allocation3 + $0x18] sm:$0xff] %v398
    %419 = vst [vmem:[#allocation3 + $0x20] sm:$0xff] %v400
    %420 = vst [vmem:[#allocation3 + $0x28] sm:$0xff] %v402
    %421 = vst [vmem:[#allocation3 + $0x30] sm:$0xff] %v404
    %422 = vst [vmem:[#allocation3 + $0x38] sm:$0xff] %v406
    %423 = vst [vmem:[#allocation3 + $0x40] sm:$0xff] %v408
    %424 = vst [vmem:[#allocation3 + $0x48] sm:$0xff] %v410
    %425 = vst [vmem:[#allocation3 + $0x50] sm:$0xff] %v412
    %426 = vst [vmem:[#allocation3 + $0x58] sm:$0xff] %v414
    %s427 = sld [smem:[#allocation8 + $0x1]]
    %s428 = sld [smem:[#allocation8 + $0x32]]
    %v429 = vld [vmem:[#allocation3] sm:$0xff]
    %v430 = vld [vmem:[#allocation3 + $0x8] sm:$0xff]
    %v431 = vld [vmem:[#allocation3 + $0x18] sm:$0xff]
    %v432 = vld [vmem:[#allocation3 + $0x20] sm:$0xff]
    %v433 = vld [vmem:[%s200] sm:$0xff]
    %v434 = vld [vmem:[%s200 + $0x8] sm:$0xff]
    %v435 = vld [vmem:[%s200 + $0x18] sm:$0xff]
    %v436 = vld [vmem:[%s200 + $0x20] sm:$0xff]
    %v437 = vstv %s427
    %v438 = vmul.f32 %v437, %v429
    %v439 = vmul.f32 %v437, %v430
    %v440 = vmul.f32 %v437, %v431
    %v441 = vmul.f32 %v437, %v432
    %v442 = vstv %s428
    %v443 = vmul.f32 %v442, %v433
    %v444 = vmul.f32 %v442, %v434
    %v445 = vmul.f32 %v442, %v435
    %v446 = vmul.f32 %v442, %v436
    %v447 = vadd.f32 %v438, %v443
    %v448 = vadd.f32 %v439, %v444
    %v449 = vadd.f32 %v440, %v445
    %v450 = vadd.f32 %v441, %v446
    %v451 = vadd.f32 %v387, %v447
    %v452 = vadd.f32 %v388, %v448
    %v453 = vadd.f32 %v389, %v449
    %v454 = vadd.f32 %v390, %v450
    %s455 = sld [smem:[#allocation8 + $0x8]]
    %s456 = sld [smem:[#allocation8 + $0x39]]
    %v457 = vld [vmem:[#allocation3 + $0x1] sm:$0xff]
    %v458 = vld [vmem:[#allocation3 + $0x9] sm:$0xff]
    %v459 = vld [vmem:[#allocation3 + $0x19] sm:$0xff]
    %v460 = vld [vmem:[#allocation3 + $0x21] sm:$0xff]
    %v461 = vld [vmem:[%s200 + $0x1] sm:$0xff]
    %v462 = vld [vmem:[%s200 + $0x9] sm:$0xff]
    %v463 = vld [vmem:[%s200 + $0x19] sm:$0xff]
    %v464 = vld [vmem:[%s200 + $0x21] sm:$0xff]
    %v465 = vstv %s455
    %v466 = vmul.f32 %v465, %v457
    %v467 = vmul.f32 %v465, %v458
    %v468 = vmul.f32 %v465, %v459
    %v469 = vmul.f32 %v465, %v460
    %v470 = vstv %s456
    %v471 = vmul.f32 %v470, %v461
    %v472 = vmul.f32 %v470, %v462
    %v473 = vmul.f32 %v470, %v463
    %v474 = vmul.f32 %v470, %v464
    %v475 = vadd.f32 %v466, %v471
    %v476 = vadd.f32 %v467, %v472
    %v477 = vadd.f32 %v468, %v473
    %v478 = vadd.f32 %v469, %v474
    %v479 = vadd.f32 %v451, %v475
    %v480 = vadd.f32 %v452, %v476
    %v481 = vadd.f32 %v453, %v477
    %v482 = vadd.f32 %v454, %v478
    %s483 = sld [smem:[#allocation8 + $0xf]]
    %s484 = sld [smem:[#allocation8 + $0x40]]
    %v485 = vld [vmem:[#allocation3 + $0x2] sm:$0xff]
    %v486 = vld [vmem:[#allocation3 + $0xa] sm:$0xff]
    %v487 = vld [vmem:[#allocation3 + $0x1a] sm:$0xff]
    %v488 = vld [vmem:[#allocation3 + $0x22] sm:$0xff]
    %v489 = vld [vmem:[%s200 + $0x2] sm:$0xff]
    %v490 = vld [vmem:[%s200 + $0xa] sm:$0xff]
    %v491 = vld [vmem:[%s200 + $0x1a] sm:$0xff]
    %v492 = vld [vmem:[%s200 + $0x22] sm:$0xff]
    %v493 = vstv %s483
    %v494 = vmul.f32 %v493, %v485
    %v495 = vmul.f32 %v493, %v486
    %v496 = vmul.f32 %v493, %v487
    %v497 = vmul.f32 %v493, %v488
    %v498 = vstv %s484
    %v499 = vmul.f32 %v498, %v489
    %v500 = vmul.f32 %v498, %v490
    %v501 = vmul.f32 %v498, %v491
    %v502 = vmul.f32 %v498, %v492
    %v503 = vadd.f32 %v494, %v499
    %v504 = vadd.f32 %v495, %v500
    %v505 = vadd.f32 %v496, %v501
    %v506 = vadd.f32 %v497, %v502
    %v507 = vadd.f32 %v479, %v503
    %v508 = vadd.f32 %v480, %v504
    %v509 = vadd.f32 %v481, %v505
    %v510 = vadd.f32 %v482, %v506
    %s511 = sld [smem:[#allocation8 + $0x16]]
    %s512 = sld [smem:[#allocation8 + $0x47]]
    %v513 = vld [vmem:[#allocation3 + $0x3] sm:$0xff]
    %v514 = vld [vmem:[#allocation3 + $0xb] sm:$0xff]
    %v515 = vld [vmem:[#allocation3 + $0x1b] sm:$0xff]
    %v516 = vld [vmem:[#allocation3 + $0x23] sm:$0xff]
    %v517 = vld [vmem:[%s200 + $0x3] sm:$0xff]
    %v518 = vld [vmem:[%s200 + $0xb] sm:$0xff]
    %v519 = vld [vmem:[%s200 + $0x1b] sm:$0xff]
    %v520 = vld [vmem:[%s200 + $0x23] sm:$0xff]
    %v521 = vstv %s511
    %v522 = vmul.f32 %v521, %v513
    %v523 = vmul.f32 %v521, %v514
    %v524 = vmul.f32 %v521, %v515
    %v525 = vmul.f32 %v521, %v516
    %v526 = vstv %s512
    %v527 = vmul.f32 %v526, %v517
    %v528 = vmul.f32 %v526, %v518
    %v529 = vmul.f32 %v526, %v519
    %v530 = vmul.f32 %v526, %v520
    %v531 = vadd.f32 %v522, %v527
    %v532 = vadd.f32 %v523, %v528
    %v533 = vadd.f32 %v524, %v529
    %v534 = vadd.f32 %v525, %v530
    %v535 = vadd.f32 %v507, %v531
    %v536 = vadd.f32 %v508, %v532
    %v537 = vadd.f32 %v509, %v533
    %v538 = vadd.f32 %v510, %v534
    %s539 = sld [smem:[#allocation8 + $0x1d]]
    %s540 = sld [smem:[#allocation8 + $0x4e]]
    %v541 = vld [vmem:[#allocation3 + $0x4] sm:$0xff]
    %v542 = vld [vmem:[#allocation3 + $0xc] sm:$0xff]
    %v543 = vld [vmem:[#allocation3 + $0x1c] sm:$0xff]
    %v544 = vld [vmem:[#allocation3 + $0x24] sm:$0xff]
    %v545 = vld [vmem:[%s200 + $0x4] sm:$0xff]
    %v546 = vld [vmem:[%s200 + $0xc] sm:$0xff]
    %v547 = vld [vmem:[%s200 + $0x1c] sm:$0xff]
    %v548 = vld [vmem:[%s200 + $0x24] sm:$0xff]
    %v549 = vstv %s539
    %v550 = vmul.f32 %v549, %v541
    %v551 = vmul.f32 %v549, %v542
    %v552 = vmul.f32 %v549, %v543
    %v553 = vmul.f32 %v549, %v544
    %v554 = vstv %s540
    %v555 = vmul.f32 %v554, %v545
    %v556 = vmul.f32 %v554, %v546
    %v557 = vmul.f32 %v554, %v547
    %v558 = vmul.f32 %v554, %v548
    %v559 = vadd.f32 %v550, %v555
    %v560 = vadd.f32 %v551, %v556
    %v561 = vadd.f32 %v552, %v557
    %v562 = vadd.f32 %v553, %v558
    %v563 = vadd.f32 %v535, %v559
    %v564 = vadd.f32 %v536, %v560
    %v565 = vadd.f32 %v537, %v561
    %v566 = vadd.f32 %v538, %v562
    %s567 = sld [smem:[#allocation8 + $0x24]]
    %s568 = sld [smem:[#allocation8 + $0x55]]
    %v569 = vld [vmem:[#allocation3 + $0x5] sm:$0xff]
    %v570 = vld [vmem:[#allocation3 + $0xd] sm:$0xff]
    %v571 = vld [vmem:[#allocation3 + $0x1d] sm:$0xff]
    %v572 = vld [vmem:[#allocation3 + $0x25] sm:$0xff]
    %v573 = vld [vmem:[%s200 + $0x5] sm:$0xff]
    %v574 = vld [vmem:[%s200 + $0xd] sm:$0xff]
    %v575 = vld [vmem:[%s200 + $0x1d] sm:$0xff]
    %v576 = vld [vmem:[%s200 + $0x25] sm:$0xff]
    %v577 = vstv %s567
    %v578 = vmul.f32 %v577, %v569
    %v579 = vmul.f32 %v577, %v570
    %v580 = vmul.f32 %v577, %v571
    %v581 = vmul.f32 %v577, %v572
    %v582 = vstv %s568
    %v583 = vmul.f32 %v582, %v573
    %v584 = vmul.f32 %v582, %v574
    %v585 = vmul.f32 %v582, %v575
    %v586 = vmul.f32 %v582, %v576
    %v587 = vadd.f32 %v578, %v583
    %v588 = vadd.f32 %v579, %v584
    %v589 = vadd.f32 %v580, %v585
    %v590 = vadd.f32 %v581, %v586
    %v591 = vadd.f32 %v563, %v587
    %v592 = vadd.f32 %v564, %v588
    %v593 = vadd.f32 %v565, %v589
    %v594 = vadd.f32 %v566, %v590
    %s595 = sld [smem:[#allocation8 + $0x2b]]
    %s596 = sld [smem:[#allocation8 + $0x5c]]
    %v597 = vld [vmem:[#allocation3 + $0x6] sm:$0xff]
    %v598 = vld [vmem:[#allocation3 + $0xe] sm:$0xff]
    %v599 = vld [vmem:[#allocation3 + $0x1e] sm:$0xff]
    %v600 = vld [vmem:[#allocation3 + $0x26] sm:$0xff]
    %v601 = vld [vmem:[%s200 + $0x6] sm:$0xff]
    %v602 = vld [vmem:[%s200 + $0xe] sm:$0xff]
    %v603 = vld [vmem:[%s200 + $0x1e] sm:$0xff]
    %v604 = vld [vmem:[%s200 + $0x26] sm:$0xff]
    %v605 = vstv %s595
    %v606 = vmul.f32 %v605, %v597
    %v607 = vmul.f32 %v605, %v598
    %v608 = vmul.f32 %v605, %v599
    %v609 = vmul.f32 %v605, %v600
    %v610 = vstv %s596
    %v611 = vmul.f32 %v610, %v601
    %v612 = vmul.f32 %v610, %v602
    %v613 = vmul.f32 %v610, %v603
    %v614 = vmul.f32 %v610, %v604
    %v615 = vadd.f32 %v606, %v611
    %v616 = vadd.f32 %v607, %v612
    %v617 = vadd.f32 %v608, %v613
    %v618 = vadd.f32 %v609, %v614
    %v619 = vadd.f32 %v591, %v615
    %v620 = vadd.f32 %v592, %v616
    %v621 = vadd.f32 %v593, %v617
    %v622 = vadd.f32 %v594, %v618
    %623 = vrot.lane.b32.xlu0 %v146, 1
    %v624 = vpop.permute.xlu0 %623
    %625 = vrot.lane.b32.xlu0 %v147, 1
    %v626 = vpop.permute.xlu0 %625
    %627 = vrot.lane.b32.xlu0 %v148, 1
    %v628 = vpop.permute.xlu0 %627
    %629 = vrot.lane.b32.xlu0 %v149, 1
    %v630 = vpop.permute.xlu0 %629
    %631 = vrot.lane.b32.xlu0 %v150, 1
    %v632 = vpop.permute.xlu0 %631
    %633 = vrot.lane.b32.xlu0 %v151, 1
    %v634 = vpop.permute.xlu0 %633
    %635 = vrot.lane.b32.xlu0 %v152, 1
    %v636 = vpop.permute.xlu0 %635
    %637 = vrot.lane.b32.xlu0 %v153, 1
    %v638 = vpop.permute.xlu0 %637
    %639 = vrot.lane.b32.xlu0 %v154, 1
    %v640 = vpop.permute.xlu0 %639
    %641 = vrot.lane.b32.xlu0 %v155, 1
    %v642 = vpop.permute.xlu0 %641
    %643 = vrot.lane.b32.xlu0 %v156, 1
    %v644 = vpop.permute.xlu0 %643
    %645 = vrot.lane.b32.xlu0 %v157, 1
    %v646 = vpop.permute.xlu0 %645
    %647 = vst [vmem:[#allocation3] sm:$0xff] %v624
    %648 = vst [vmem:[#allocation3 + $0x8] sm:$0xff] %v626
    %649 = vst [vmem:[#allocation3 + $0x10] sm:$0xff] %v628
    %650 = vst [vmem:[#allocation3 + $0x18] sm:$0xff] %v630
    %651 = vst [vmem:[#allocation3 + $0x20] sm:$0xff] %v632
    %652 = vst [vmem:[#allocation3 + $0x28] sm:$0xff] %v634
    %653 = vst [vmem:[#allocation3 + $0x30] sm:$0xff] %v636
    %654 = vst [vmem:[#allocation3 + $0x38] sm:$0xff] %v638
    %655 = vst [vmem:[#allocation3 + $0x40] sm:$0xff] %v640
    %656 = vst [vmem:[#allocation3 + $0x48] sm:$0xff] %v642
    %657 = vst [vmem:[#allocation3 + $0x50] sm:$0xff] %v644
    %658 = vst [vmem:[#allocation3 + $0x58] sm:$0xff] %v646
    %s659 = sld [smem:[#allocation8 + $0x2]]
    %s660 = sld [smem:[#allocation8 + $0x33]]
    %v661 = vld [vmem:[#allocation3] sm:$0xff]
    %v662 = vld [vmem:[#allocation3 + $0x8] sm:$0xff]
    %v663 = vld [vmem:[#allocation3 + $0x18] sm:$0xff]
    %v664 = vld [vmem:[#allocation3 + $0x20] sm:$0xff]
    %v665 = vld [vmem:[%s200] sm:$0xff]
    %v666 = vld [vmem:[%s200 + $0x8] sm:$0xff]
    %v667 = vld [vmem:[%s200 + $0x18] sm:$0xff]
    %v668 = vld [vmem:[%s200 + $0x20] sm:$0xff]
    %v669 = vstv %s659
    %v670 = vmul.f32 %v669, %v661
    %v671 = vmul.f32 %v669, %v662
    %v672 = vmul.f32 %v669, %v663
    %v673 = vmul.f32 %v669, %v664
    %v674 = vstv %s660
    %v675 = vmul.f32 %v674, %v665
    %v676 = vmul.f32 %v674, %v666
    %v677 = vmul.f32 %v674, %v667
    %v678 = vmul.f32 %v674, %v668
    %v679 = vadd.f32 %v670, %v675
    %v680 = vadd.f32 %v671, %v676
    %v681 = vadd.f32 %v672, %v677
    %v682 = vadd.f32 %v673, %v678
    %v683 = vadd.f32 %v619, %v679
    %v684 = vadd.f32 %v620, %v680
    %v685 = vadd.f32 %v621, %v681
    %v686 = vadd.f32 %v622, %v682
    %s687 = sld [smem:[#allocation8 + $0x9]]
    %s688 = sld [smem:[#allocation8 + $0x3a]]
    %v689 = vld [vmem:[#allocation3 + $0x1] sm:$0xff]
    %v690 = vld [vmem:[#allocation3 + $0x9] sm:$0xff]
    %v691 = vld [vmem:[#allocation3 + $0x19] sm:$0xff]
    %v692 = vld [vmem:[#allocation3 + $0x21] sm:$0xff]
    %v693 = vld [vmem:[%s200 + $0x1] sm:$0xff]
    %v694 = vld [vmem:[%s200 + $0x9] sm:$0xff]
    %v695 = vld [vmem:[%s200 + $0x19] sm:$0xff]
    %v696 = vld [vmem:[%s200 + $0x21] sm:$0xff]
    %v697 = vstv %s687
    %v698 = vmul.f32 %v697, %v689
    %v699 = vmul.f32 %v697, %v690
    %v700 = vmul.f32 %v697, %v691
    %v701 = vmul.f32 %v697, %v692
    %v702 = vstv %s688
    %v703 = vmul.f32 %v702, %v693
    %v704 = vmul.f32 %v702, %v694
    %v705 = vmul.f32 %v702, %v695
    %v706 = vmul.f32 %v702, %v696
    %v707 = vadd.f32 %v698, %v703
    %v708 = vadd.f32 %v699, %v704
    %v709 = vadd.f32 %v700, %v705
    %v710 = vadd.f32 %v701, %v706
    %v711 = vadd.f32 %v683, %v707
    %v712 = vadd.f32 %v684, %v708
    %v713 = vadd.f32 %v685, %v709
    %v714 = vadd.f32 %v686, %v710
    %s715 = sld [smem:[#allocation8 + $0x10]]
    %s716 = sld [smem:[#allocation8 + $0x41]]
    %v717 = vld [vmem:[#allocation3 + $0x2] sm:$0xff]
    %v718 = vld [vmem:[#allocation3 + $0xa] sm:$0xff]
    %v719 = vld [vmem:[#allocation3 + $0x1a] sm:$0xff]
    %v720 = vld [vmem:[#allocation3 + $0x22] sm:$0xff]
    %v721 = vld [vmem:[%s200 + $0x2] sm:$0xff]
    %v722 = vld [vmem:[%s200 + $0xa] sm:$0xff]
    %v723 = vld [vmem:[%s200 + $0x1a] sm:$0xff]
    %v724 = vld [vmem:[%s200 + $0x22] sm:$0xff]
    %v725 = vstv %s715
    %v726 = vmul.f32 %v725, %v717
    %v727 = vmul.f32 %v725, %v718
    %v728 = vmul.f32 %v725, %v719
    %v729 = vmul.f32 %v725, %v720
    %v730 = vstv %s716
    %v731 = vmul.f32 %v730, %v721
    %v732 = vmul.f32 %v730, %v722
    %v733 = vmul.f32 %v730, %v723
    %v734 = vmul.f32 %v730, %v724
    %v735 = vadd.f32 %v726, %v731
    %v736 = vadd.f32 %v727, %v732
    %v737 = vadd.f32 %v728, %v733
    %v738 = vadd.f32 %v729, %v734
    %v739 = vadd.f32 %v711, %v735
    %v740 = vadd.f32 %v712, %v736
    %v741 = vadd.f32 %v713, %v737
    %v742 = vadd.f32 %v714, %v738
    %s743 = sld [smem:[#allocation8 + $0x17]]
    %s744 = sld [smem:[#allocation8 + $0x48]]
    %v745 = vld [vmem:[#allocation3 + $0x3] sm:$0xff]
    %v746 = vld [vmem:[#allocation3 + $0xb] sm:$0xff]
    %v747 = vld [vmem:[#allocation3 + $0x1b] sm:$0xff]
    %v748 = vld [vmem:[#allocation3 + $0x23] sm:$0xff]
    %v749 = vld [vmem:[%s200 + $0x3] sm:$0xff]
    %v750 = vld [vmem:[%s200 + $0xb] sm:$0xff]
    %v751 = vld [vmem:[%s200 + $0x1b] sm:$0xff]
    %v752 = vld [vmem:[%s200 + $0x23] sm:$0xff]
    %v753 = vstv %s743
    %v754 = vmul.f32 %v753, %v745
    %v755 = vmul.f32 %v753, %v746
    %v756 = vmul.f32 %v753, %v747
    %v757 = vmul.f32 %v753, %v748
    %v758 = vstv %s744
    %v759 = vmul.f32 %v758, %v749
    %v760 = vmul.f32 %v758, %v750
    %v761 = vmul.f32 %v758, %v751
    %v762 = vmul.f32 %v758, %v752
    %v763 = vadd.f32 %v754, %v759
    %v764 = vadd.f32 %v755, %v760
    %v765 = vadd.f32 %v756, %v761
    %v766 = vadd.f32 %v757, %v762
    %v767 = vadd.f32 %v739, %v763
    %v768 = vadd.f32 %v740, %v764
    %v769 = vadd.f32 %v741, %v765
    %v770 = vadd.f32 %v742, %v766
    %s771 = sld [smem:[#allocation8 + $0x1e]]
    %s772 = sld [smem:[#allocation8 + $0x4f]]
    %v773 = vld [vmem:[#allocation3 + $0x4] sm:$0xff]
    %v774 = vld [vmem:[#allocation3 + $0xc] sm:$0xff]
    %v775 = vld [vmem:[#allocation3 + $0x1c] sm:$0xff]
    %v776 = vld [vmem:[#allocation3 + $0x24] sm:$0xff]
    %v777 = vld [vmem:[%s200 + $0x4] sm:$0xff]
    %v778 = vld [vmem:[%s200 + $0xc] sm:$0xff]
    %v779 = vld [vmem:[%s200 + $0x1c] sm:$0xff]
    %v780 = vld [vmem:[%s200 + $0x24] sm:$0xff]
    %v781 = vstv %s771
    %v782 = vmul.f32 %v781, %v773
    %v783 = vmul.f32 %v781, %v774
    %v784 = vmul.f32 %v781, %v775
    %v785 = vmul.f32 %v781, %v776
    %v786 = vstv %s772
    %v787 = vmul.f32 %v786, %v777
    %v788 = vmul.f32 %v786, %v778
    %v789 = vmul.f32 %v786, %v779
    %v790 = vmul.f32 %v786, %v780
    %v791 = vadd.f32 %v782, %v787
    %v792 = vadd.f32 %v783, %v788
    %v793 = vadd.f32 %v784, %v789
    %v794 = vadd.f32 %v785, %v790
    %v795 = vadd.f32 %v767, %v791
    %v796 = vadd.f32 %v768, %v792
    %v797 = vadd.f32 %v769, %v793
    %v798 = vadd.f32 %v770, %v794
    %s799 = sld [smem:[#allocation8 + $0x25]]
    %s800 = sld [smem:[#allocation8 + $0x56]]
    %v801 = vld [vmem:[#allocation3 + $0x5] sm:$0xff]
    %v802 = vld [vmem:[#allocation3 + $0xd] sm:$0xff]
    %v803 = vld [vmem:[#allocation3 + $0x1d] sm:$0xff]
    %v804 = vld [vmem:[#allocation3 + $0x25] sm:$0xff]
    %v805 = vld [vmem:[%s200 + $0x5] sm:$0xff]
    %v806 = vld [vmem:[%s200 + $0xd] sm:$0xff]
    %v807 = vld [vmem:[%s200 + $0x1d] sm:$0xff]
    %v808 = vld [vmem:[%s200 + $0x25] sm:$0xff]
    %v809 = vstv %s799
    %v810 = vmul.f32 %v809, %v801
    %v811 = vmul.f32 %v809, %v802
    %v812 = vmul.f32 %v809, %v803
    %v813 = vmul.f32 %v809, %v804
    %v814 = vstv %s800
    %v815 = vmul.f32 %v814, %v805
    %v816 = vmul.f32 %v814, %v806
    %v817 = vmul.f32 %v814, %v807
    %v818 = vmul.f32 %v814, %v808
    %v819 = vadd.f32 %v810, %v815
    %v820 = vadd.f32 %v811, %v816
    %v821 = vadd.f32 %v812, %v817
    %v822 = vadd.f32 %v813, %v818
    %v823 = vadd.f32 %v795, %v819
    %v824 = vadd.f32 %v796, %v820
    %v825 = vadd.f32 %v797, %v821
    %v826 = vadd.f32 %v798, %v822
    %s827 = sld [smem:[#allocation8 + $0x2c]]
    %s828 = sld [smem:[#allocation8 + $0x5d]]
    %v829 = vld [vmem:[#allocation3 + $0x6] sm:$0xff]
    %v830 = vld [vmem:[#allocation3 + $0xe] sm:$0xff]
    %v831 = vld [vmem:[#allocation3 + $0x1e] sm:$0xff]
    %v832 = vld [vmem:[#allocation3 + $0x26] sm:$0xff]
    %v833 = vld [vmem:[%s200 + $0x6] sm:$0xff]
    %v834 = vld [vmem:[%s200 + $0xe] sm:$0xff]
    %v835 = vld [vmem:[%s200 + $0x1e] sm:$0xff]
    %v836 = vld [vmem:[%s200 + $0x26] sm:$0xff]
    %v837 = vstv %s827
    %v838 = vmul.f32 %v837, %v829
    %v839 = vmul.f32 %v837, %v830
    %v840 = vmul.f32 %v837, %v831
    %v841 = vmul.f32 %v837, %v832
    %v842 = vstv %s828
    %v843 = vmul.f32 %v842, %v833
    %v844 = vmul.f32 %v842, %v834
    %v845 = vmul.f32 %v842, %v835
    %v846 = vmul.f32 %v842, %v836
    %v847 = vadd.f32 %v838, %v843
    %v848 = vadd.f32 %v839, %v844
    %v849 = vadd.f32 %v840, %v845
    %v850 = vadd.f32 %v841, %v846
    %v851 = vadd.f32 %v823, %v847
    %v852 = vadd.f32 %v824, %v848
    %v853 = vadd.f32 %v825, %v849
    %v854 = vadd.f32 %v826, %v850
    %855 = vst [vmem:[#allocation3] sm:$0xff] %v146
    %856 = vst [vmem:[#allocation3 + $0x8] sm:$0xff] %v147
    %857 = vst [vmem:[#allocation3 + $0x10] sm:$0xff] %v148
    %858 = vst [vmem:[#allocation3 + $0x18] sm:$0xff] %v149
    %859 = vst [vmem:[#allocation3 + $0x20] sm:$0xff] %v150
    %860 = vst [vmem:[#allocation3 + $0x28] sm:$0xff] %v151
    %861 = vst [vmem:[#allocation3 + $0x30] sm:$0xff] %v152
    %862 = vst [vmem:[#allocation3 + $0x38] sm:$0xff] %v153
    %863 = vst [vmem:[#allocation3 + $0x40] sm:$0xff] %v154
    %864 = vst [vmem:[#allocation3 + $0x48] sm:$0xff] %v155
    %865 = vst [vmem:[#allocation3 + $0x50] sm:$0xff] %v156
    %866 = vst [vmem:[#allocation3 + $0x58] sm:$0xff] %v157
    %s867 = sld [smem:[#allocation8 + $0x3]]
    %s868 = sld [smem:[#allocation8 + $0x34]]
    %v869 = vld [vmem:[#allocation3] sm:$0xff]
    %v870 = vld [vmem:[#allocation3 + $0x8] sm:$0xff]
    %v871 = vld [vmem:[#allocation3 + $0x18] sm:$0xff]
    %v872 = vld [vmem:[#allocation3 + $0x20] sm:$0xff]
    %v873 = vld [vmem:[%s200] sm:$0xff]
    %v874 = vld [vmem:[%s200 + $0x8] sm:$0xff]
    %v875 = vld [vmem:[%s200 + $0x18] sm:$0xff]
    %v876 = vld [vmem:[%s200 + $0x20] sm:$0xff]
    %v877 = vstv %s867
    %v878 = vmul.f32 %v877, %v869
    %v879 = vmul.f32 %v877, %v870
    %v880 = vmul.f32 %v877, %v871
    %v881 = vmul.f32 %v877, %v872
    %v882 = vstv %s868
    %v883 = vmul.f32 %v882, %v873
    %v884 = vmul.f32 %v882, %v874
    %v885 = vmul.f32 %v882, %v875
    %v886 = vmul.f32 %v882, %v876
    %v887 = vadd.f32 %v878, %v883
    %v888 = vadd.f32 %v879, %v884
    %v889 = vadd.f32 %v880, %v885
    %v890 = vadd.f32 %v881, %v886
    %v891 = vadd.f32 %v851, %v887
    %v892 = vadd.f32 %v852, %v888
    %v893 = vadd.f32 %v853, %v889
    %v894 = vadd.f32 %v854, %v890
    %s895 = sld [smem:[#allocation8 + $0xa]]
    %s896 = sld [smem:[#allocation8 + $0x3b]]
    %v897 = vld [vmem:[#allocation3 + $0x1] sm:$0xff]
    %v898 = vld [vmem:[#allocation3 + $0x9] sm:$0xff]
    %v899 = vld [vmem:[#allocation3 + $0x19] sm:$0xff]
    %v900 = vld [vmem:[#allocation3 + $0x21] sm:$0xff]
    %v901 = vld [vmem:[%s200 + $0x1] sm:$0xff]
    %v902 = vld [vmem:[%s200 + $0x9] sm:$0xff]
    %v903 = vld [vmem:[%s200 + $0x19] sm:$0xff]
    %v904 = vld [vmem:[%s200 + $0x21] sm:$0xff]
    %v905 = vstv %s895
    %v906 = vmul.f32 %v905, %v897
    %v907 = vmul.f32 %v905, %v898
    %v908 = vmul.f32 %v905, %v899
    %v909 = vmul.f32 %v905, %v900
    %v910 = vstv %s896
    %v911 = vmul.f32 %v910, %v901
    %v912 = vmul.f32 %v910, %v902
    %v913 = vmul.f32 %v910, %v903
    %v914 = vmul.f32 %v910, %v904
    %v915 = vadd.f32 %v906, %v911
    %v916 = vadd.f32 %v907, %v912
    %v917 = vadd.f32 %v908, %v913
    %v918 = vadd.f32 %v909, %v914
    %v919 = vadd.f32 %v891, %v915
    %v920 = vadd.f32 %v892, %v916
    %v921 = vadd.f32 %v893, %v917
    %v922 = vadd.f32 %v894, %v918
    %s923 = sld [smem:[#allocation8 + $0x11]]
    %s924 = sld [smem:[#allocation8 + $0x42]]
    %v925 = vld [vmem:[#allocation3 + $0x2] sm:$0xff]
    %v926 = vld [vmem:[#allocation3 + $0xa] sm:$0xff]
    %v927 = vld [vmem:[#allocation3 + $0x1a] sm:$0xff]
    %v928 = vld [vmem:[#allocation3 + $0x22] sm:$0xff]
    %v929 = vld [vmem:[%s200 + $0x2] sm:$0xff]
    %v930 = vld [vmem:[%s200 + $0xa] sm:$0xff]
    %v931 = vld [vmem:[%s200 + $0x1a] sm:$0xff]
    %v932 = vld [vmem:[%s200 + $0x22] sm:$0xff]
    %v933 = vstv %s923
    %v934 = vmul.f32 %v933, %v925
    %v935 = vmul.f32 %v933, %v926
    %v936 = vmul.f32 %v933, %v927
    %v937 = vmul.f32 %v933, %v928
    %v938 = vstv %s924
    %v939 = vmul.f32 %v938, %v929
    %v940 = vmul.f32 %v938, %v930
    %v941 = vmul.f32 %v938, %v931
    %v942 = vmul.f32 %v938, %v932
    %v943 = vadd.f32 %v934, %v939
    %v944 = vadd.f32 %v935, %v940
    %v945 = vadd.f32 %v936, %v941
    %v946 = vadd.f32 %v937, %v942
    %v947 = vadd.f32 %v919, %v943
    %v948 = vadd.f32 %v920, %v944
    %v949 = vadd.f32 %v921, %v945
    %v950 = vadd.f32 %v922, %v946
    %s951 = sld [smem:[#allocation8 + $0x18]]
    %s952 = sld [smem:[#allocation8 + $0x49]]
    %v953 = vld [vmem:[#allocation3 + $0x3] sm:$0xff]
    %v954 = vld [vmem:[#allocation3 + $0xb] sm:$0xff]
    %v955 = vld [vmem:[#allocation3 + $0x1b] sm:$0xff]
    %v956 = vld [vmem:[#allocation3 + $0x23] sm:$0xff]
    %v957 = vld [vmem:[%s200 + $0x3] sm:$0xff]
    %v958 = vld [vmem:[%s200 + $0xb] sm:$0xff]
    %v959 = vld [vmem:[%s200 + $0x1b] sm:$0xff]
    %v960 = vld [vmem:[%s200 + $0x23] sm:$0xff]
    %v961 = vstv %s951
    %v962 = vmul.f32 %v961, %v953
    %v963 = vmul.f32 %v961, %v954
    %v964 = vmul.f32 %v961, %v955
    %v965 = vmul.f32 %v961, %v956
    %v966 = vstv %s952
    %v967 = vmul.f32 %v966, %v957
    %v968 = vmul.f32 %v966, %v958
    %v969 = vmul.f32 %v966, %v959
    %v970 = vmul.f32 %v966, %v960
    %v971 = vadd.f32 %v962, %v967
    %v972 = vadd.f32 %v963, %v968
    %v973 = vadd.f32 %v964, %v969
    %v974 = vadd.f32 %v965, %v970
    %v975 = vadd.f32 %v947, %v971
    %v976 = vadd.f32 %v948, %v972
    %v977 = vadd.f32 %v949, %v973
    %v978 = vadd.f32 %v950, %v974
    %s979 = sld [smem:[#allocation8 + $0x1f]]
    %s980 = sld [smem:[#allocation8 + $0x50]]
    %v981 = vld [vmem:[#allocation3 + $0x4] sm:$0xff]
    %v982 = vld [vmem:[#allocation3 + $0xc] sm:$0xff]
    %v983 = vld [vmem:[#allocation3 + $0x1c] sm:$0xff]
    %v984 = vld [vmem:[#allocation3 + $0x24] sm:$0xff]
    %v985 = vld [vmem:[%s200 + $0x4] sm:$0xff]
    %v986 = vld [vmem:[%s200 + $0xc] sm:$0xff]
    %v987 = vld [vmem:[%s200 + $0x1c] sm:$0xff]
    %v988 = vld [vmem:[%s200 + $0x24] sm:$0xff]
    %v989 = vstv %s979
    %v990 = vmul.f32 %v989, %v981
    %v991 = vmul.f32 %v989, %v982
    %v992 = vmul.f32 %v989, %v983
    %v993 = vmul.f32 %v989, %v984
    %v994 = vstv %s980
    %v995 = vmul.f32 %v994, %v985
    %v996 = vmul.f32 %v994, %v986
    %v997 = vmul.f32 %v994, %v987
    %v998 = vmul.f32 %v994, %v988
    %v999 = vadd.f32 %v990, %v995
    %v1000 = vadd.f32 %v991, %v996
    %v1001 = vadd.f32 %v992, %v997
    %v1002 = vadd.f32 %v993, %v998
    %v1003 = vadd.f32 %v975, %v999
    %v1004 = vadd.f32 %v976, %v1000
    %v1005 = vadd.f32 %v977, %v1001
    %v1006 = vadd.f32 %v978, %v1002
    %s1007 = sld [smem:[#allocation8 + $0x26]]
    %s1008 = sld [smem:[#allocation8 + $0x57]]
    %v1009 = vld [vmem:[#allocation3 + $0x5] sm:$0xff]
    %v1010 = vld [vmem:[#allocation3 + $0xd] sm:$0xff]
    %v1011 = vld [vmem:[#allocation3 + $0x1d] sm:$0xff]
    %v1012 = vld [vmem:[#allocation3 + $0x25] sm:$0xff]
    %v1013 = vld [vmem:[%s200 + $0x5] sm:$0xff]
    %v1014 = vld [vmem:[%s200 + $0xd] sm:$0xff]
    %v1015 = vld [vmem:[%s200 + $0x1d] sm:$0xff]
    %v1016 = vld [vmem:[%s200 + $0x25] sm:$0xff]
    %v1017 = vstv %s1007
    %v1018 = vmul.f32 %v1017, %v1009
    %v1019 = vmul.f32 %v1017, %v1010
    %v1020 = vmul.f32 %v1017, %v1011
    %v1021 = vmul.f32 %v1017, %v1012
    %v1022 = vstv %s1008
    %v1023 = vmul.f32 %v1022, %v1013
    %v1024 = vmul.f32 %v1022, %v1014
    %v1025 = vmul.f32 %v1022, %v1015
    %v1026 = vmul.f32 %v1022, %v1016
    %v1027 = vadd.f32 %v1018, %v1023
    %v1028 = vadd.f32 %v1019, %v1024
    %v1029 = vadd.f32 %v1020, %v1025
    %v1030 = vadd.f32 %v1021, %v1026
    %v1031 = vadd.f32 %v1003, %v1027
    %v1032 = vadd.f32 %v1004, %v1028
    %v1033 = vadd.f32 %v1005, %v1029
    %v1034 = vadd.f32 %v1006, %v1030
    %s1035 = sld [smem:[#allocation8 + $0x2d]]
    %s1036 = sld [smem:[#allocation8 + $0x5e]]
    %v1037 = vld [vmem:[#allocation3 + $0x6] sm:$0xff]
    %v1038 = vld [vmem:[#allocation3 + $0xe] sm:$0xff]
    %v1039 = vld [vmem:[#allocation3 + $0x1e] sm:$0xff]
    %v1040 = vld [vmem:[#allocation3 + $0x26] sm:$0xff]
    %v1041 = vld [vmem:[%s200 + $0x6] sm:$0xff]
    %v1042 = vld [vmem:[%s200 + $0xe] sm:$0xff]
    %v1043 = vld [vmem:[%s200 + $0x1e] sm:$0xff]
    %v1044 = vld [vmem:[%s200 + $0x26] sm:$0xff]
    %v1045 = vstv %s1035
    %v1046 = vmul.f32 %v1045, %v1037
    %v1047 = vmul.f32 %v1045, %v1038
    %v1048 = vmul.f32 %v1045, %v1039
    %v1049 = vmul.f32 %v1045, %v1040
    %v1050 = vstv %s1036
    %v1051 = vmul.f32 %v1050, %v1041
    %v1052 = vmul.f32 %v1050, %v1042
    %v1053 = vmul.f32 %v1050, %v1043
    %v1054 = vmul.f32 %v1050, %v1044
    %v1055 = vadd.f32 %v1046, %v1051
    %v1056 = vadd.f32 %v1047, %v1052
    %v1057 = vadd.f32 %v1048, %v1053
    %v1058 = vadd.f32 %v1049, %v1054
    %v1059 = vadd.f32 %v1031, %v1055
    %v1060 = vadd.f32 %v1032, %v1056
    %v1061 = vadd.f32 %v1033, %v1057
    %v1062 = vadd.f32 %v1034, %v1058
    %1063 = vrot.lane.b32.xlu0 %v146, 127
    %v1064 = vpop.permute.xlu0 %1063
    %1065 = vrot.lane.b32.xlu0 %v147, 127
    %v1066 = vpop.permute.xlu0 %1065
    %1067 = vrot.lane.b32.xlu0 %v148, 127
    %v1068 = vpop.permute.xlu0 %1067
    %1069 = vrot.lane.b32.xlu0 %v149, 127
    %v1070 = vpop.permute.xlu0 %1069
    %1071 = vrot.lane.b32.xlu0 %v150, 127
    %v1072 = vpop.permute.xlu0 %1071
    %1073 = vrot.lane.b32.xlu0 %v151, 127
    %v1074 = vpop.permute.xlu0 %1073
    %1075 = vrot.lane.b32.xlu0 %v152, 127
    %v1076 = vpop.permute.xlu0 %1075
    %1077 = vrot.lane.b32.xlu0 %v153, 127
    %v1078 = vpop.permute.xlu0 %1077
    %1079 = vrot.lane.b32.xlu0 %v154, 127
    %v1080 = vpop.permute.xlu0 %1079
    %1081 = vrot.lane.b32.xlu0 %v155, 127
    %v1082 = vpop.permute.xlu0 %1081
    %1083 = vrot.lane.b32.xlu0 %v156, 127
    %v1084 = vpop.permute.xlu0 %1083
    %1085 = vrot.lane.b32.xlu0 %v157, 127
    %v1086 = vpop.permute.xlu0 %1085
    %1087 = vst [vmem:[#allocation3] sm:$0xff] %v1064
    %1088 = vst [vmem:[#allocation3 + $0x8] sm:$0xff] %v1066
    %1089 = vst [vmem:[#allocation3 + $0x10] sm:$0xff] %v1068
    %1090 = vst [vmem:[#allocation3 + $0x18] sm:$0xff] %v1070
    %1091 = vst [vmem:[#allocation3 + $0x20] sm:$0xff] %v1072
    %1092 = vst [vmem:[#allocation3 + $0x28] sm:$0xff] %v1074
    %1093 = vst [vmem:[#allocation3 + $0x30] sm:$0xff] %v1076
    %1094 = vst [vmem:[#allocation3 + $0x38] sm:$0xff] %v1078
    %1095 = vst [vmem:[#allocation3 + $0x40] sm:$0xff] %v1080
    %1096 = vst [vmem:[#allocation3 + $0x48] sm:$0xff] %v1082
    %1097 = vst [vmem:[#allocation3 + $0x50] sm:$0xff] %v1084
    %1098 = vst [vmem:[#allocation3 + $0x58] sm:$0xff] %v1086
    %s1099 = sld [smem:[#allocation8 + $0x4]]
    %s1100 = sld [smem:[#allocation8 + $0x35]]
    %v1101 = vld [vmem:[#allocation3] sm:$0xff]
    %v1102 = vld [vmem:[#allocation3 + $0x8] sm:$0xff]
    %v1103 = vld [vmem:[#allocation3 + $0x18] sm:$0xff]
    %v1104 = vld [vmem:[#allocation3 + $0x20] sm:$0xff]
    %v1105 = vld [vmem:[%s200] sm:$0xff]
    %v1106 = vld [vmem:[%s200 + $0x8] sm:$0xff]
    %v1107 = vld [vmem:[%s200 + $0x18] sm:$0xff]
    %v1108 = vld [vmem:[%s200 + $0x20] sm:$0xff]
    %v1109 = vstv %s1099
    %v1110 = vmul.f32 %v1109, %v1101
    %v1111 = vmul.f32 %v1109, %v1102
    %v1112 = vmul.f32 %v1109, %v1103
    %v1113 = vmul.f32 %v1109, %v1104
    %v1114 = vstv %s1100
    %v1115 = vmul.f32 %v1114, %v1105
    %v1116 = vmul.f32 %v1114, %v1106
    %v1117 = vmul.f32 %v1114, %v1107
    %v1118 = vmul.f32 %v1114, %v1108
    %v1119 = vadd.f32 %v1110, %v1115
    %v1120 = vadd.f32 %v1111, %v1116
    %v1121 = vadd.f32 %v1112, %v1117
    %v1122 = vadd.f32 %v1113, %v1118
    %v1123 = vadd.f32 %v1059, %v1119
    %v1124 = vadd.f32 %v1060, %v1120
    %v1125 = vadd.f32 %v1061, %v1121
    %v1126 = vadd.f32 %v1062, %v1122
    %s1127 = sld [smem:[#allocation8 + $0xb]]
    %s1128 = sld [smem:[#allocation8 + $0x3c]]
    %v1129 = vld [vmem:[#allocation3 + $0x1] sm:$0xff]
    %v1130 = vld [vmem:[#allocation3 + $0x9] sm:$0xff]
    %v1131 = vld [vmem:[#allocation3 + $0x19] sm:$0xff]
    %v1132 = vld [vmem:[#allocation3 + $0x21] sm:$0xff]
    %v1133 = vld [vmem:[%s200 + $0x1] sm:$0xff]
    %v1134 = vld [vmem:[%s200 + $0x9] sm:$0xff]
    %v1135 = vld [vmem:[%s200 + $0x19] sm:$0xff]
    %v1136 = vld [vmem:[%s200 + $0x21] sm:$0xff]
    %v1137 = vstv %s1127
    %v1138 = vmul.f32 %v1137, %v1129
    %v1139 = vmul.f32 %v1137, %v1130
    %v1140 = vmul.f32 %v1137, %v1131
    %v1141 = vmul.f32 %v1137, %v1132
    %v1142 = vstv %s1128
    %v1143 = vmul.f32 %v1142, %v1133
    %v1144 = vmul.f32 %v1142, %v1134
    %v1145 = vmul.f32 %v1142, %v1135
    %v1146 = vmul.f32 %v1142, %v1136
    %v1147 = vadd.f32 %v1138, %v1143
    %v1148 = vadd.f32 %v1139, %v1144
    %v1149 = vadd.f32 %v1140, %v1145
    %v1150 = vadd.f32 %v1141, %v1146
    %v1151 = vadd.f32 %v1123, %v1147
    %v1152 = vadd.f32 %v1124, %v1148
    %v1153 = vadd.f32 %v1125, %v1149
    %v1154 = vadd.f32 %v1126, %v1150
    %s1155 = sld [smem:[#allocation8 + $0x12]]
    %s1156 = sld [smem:[#allocation8 + $0x43]]
    %v1157 = vld [vmem:[#allocation3 + $0x2] sm:$0xff]
    %v1158 = vld [vmem:[#allocation3 + $0xa] sm:$0xff]
    %v1159 = vld [vmem:[#allocation3 + $0x1a] sm:$0xff]
    %v1160 = vld [vmem:[#allocation3 + $0x22] sm:$0xff]
    %v1161 = vld [vmem:[%s200 + $0x2] sm:$0xff]
    %v1162 = vld [vmem:[%s200 + $0xa] sm:$0xff]
    %v1163 = vld [vmem:[%s200 + $0x1a] sm:$0xff]
    %v1164 = vld [vmem:[%s200 + $0x22] sm:$0xff]
    %v1165 = vstv %s1155
    %v1166 = vmul.f32 %v1165, %v1157
    %v1167 = vmul.f32 %v1165, %v1158
    %v1168 = vmul.f32 %v1165, %v1159
    %v1169 = vmul.f32 %v1165, %v1160
    %v1170 = vstv %s1156
    %v1171 = vmul.f32 %v1170, %v1161
    %v1172 = vmul.f32 %v1170, %v1162
    %v1173 = vmul.f32 %v1170, %v1163
    %v1174 = vmul.f32 %v1170, %v1164
    %v1175 = vadd.f32 %v1166, %v1171
    %v1176 = vadd.f32 %v1167, %v1172
    %v1177 = vadd.f32 %v1168, %v1173
    %v1178 = vadd.f32 %v1169, %v1174
    %v1179 = vadd.f32 %v1151, %v1175
    %v1180 = vadd.f32 %v1152, %v1176
    %v1181 = vadd.f32 %v1153, %v1177
    %v1182 = vadd.f32 %v1154, %v1178
    %s1183 = sld [smem:[#allocation8 + $0x19]]
    %s1184 = sld [smem:[#allocation8 + $0x4a]]
    %v1185 = vld [vmem:[#allocation3 + $0x3] sm:$0xff]
    %v1186 = vld [vmem:[#allocation3 + $0xb] sm:$0xff]
    %v1187 = vld [vmem:[#allocation3 + $0x1b] sm:$0xff]
    %v1188 = vld [vmem:[#allocation3 + $0x23] sm:$0xff]
    %v1189 = vld [vmem:[%s200 + $0x3] sm:$0xff]
    %v1190 = vld [vmem:[%s200 + $0xb] sm:$0xff]
    %v1191 = vld [vmem:[%s200 + $0x1b] sm:$0xff]
    %v1192 = vld [vmem:[%s200 + $0x23] sm:$0xff]
    %v1193 = vstv %s1183
    %v1194 = vmul.f32 %v1193, %v1185
    %v1195 = vmul.f32 %v1193, %v1186
    %v1196 = vmul.f32 %v1193, %v1187
    %v1197 = vmul.f32 %v1193, %v1188
    %v1198 = vstv %s1184
    %v1199 = vmul.f32 %v1198, %v1189
    %v1200 = vmul.f32 %v1198, %v1190
    %v1201 = vmul.f32 %v1198, %v1191
    %v1202 = vmul.f32 %v1198, %v1192
    %v1203 = vadd.f32 %v1194, %v1199
    %v1204 = vadd.f32 %v1195, %v1200
    %v1205 = vadd.f32 %v1196, %v1201
    %v1206 = vadd.f32 %v1197, %v1202
    %v1207 = vadd.f32 %v1179, %v1203
    %v1208 = vadd.f32 %v1180, %v1204
    %v1209 = vadd.f32 %v1181, %v1205
    %v1210 = vadd.f32 %v1182, %v1206
    %s1211 = sld [smem:[#allocation8 + $0x20]]
    %s1212 = sld [smem:[#allocation8 + $0x51]]
    %v1213 = vld [vmem:[#allocation3 + $0x4] sm:$0xff]
    %v1214 = vld [vmem:[#allocation3 + $0xc] sm:$0xff]
    %v1215 = vld [vmem:[#allocation3 + $0x1c] sm:$0xff]
    %v1216 = vld [vmem:[#allocation3 + $0x24] sm:$0xff]
    %v1217 = vld [vmem:[%s200 + $0x4] sm:$0xff]
    %v1218 = vld [vmem:[%s200 + $0xc] sm:$0xff]
    %v1219 = vld [vmem:[%s200 + $0x1c] sm:$0xff]
    %v1220 = vld [vmem:[%s200 + $0x24] sm:$0xff]
    %v1221 = vstv %s1211
    %v1222 = vmul.f32 %v1221, %v1213
    %v1223 = vmul.f32 %v1221, %v1214
    %v1224 = vmul.f32 %v1221, %v1215
    %v1225 = vmul.f32 %v1221, %v1216
    %v1226 = vstv %s1212
    %v1227 = vmul.f32 %v1226, %v1217
    %v1228 = vmul.f32 %v1226, %v1218
    %v1229 = vmul.f32 %v1226, %v1219
    %v1230 = vmul.f32 %v1226, %v1220
    %v1231 = vadd.f32 %v1222, %v1227
    %v1232 = vadd.f32 %v1223, %v1228
    %v1233 = vadd.f32 %v1224, %v1229
    %v1234 = vadd.f32 %v1225, %v1230
    %v1235 = vadd.f32 %v1207, %v1231
    %v1236 = vadd.f32 %v1208, %v1232
    %v1237 = vadd.f32 %v1209, %v1233
    %v1238 = vadd.f32 %v1210, %v1234
    %s1239 = sld [smem:[#allocation8 + $0x27]]
    %s1240 = sld [smem:[#allocation8 + $0x58]]
    %v1241 = vld [vmem:[#allocation3 + $0x5] sm:$0xff]
    %v1242 = vld [vmem:[#allocation3 + $0xd] sm:$0xff]
    %v1243 = vld [vmem:[#allocation3 + $0x1d] sm:$0xff]
    %v1244 = vld [vmem:[#allocation3 + $0x25] sm:$0xff]
    %v1245 = vld [vmem:[%s200 + $0x5] sm:$0xff]
    %v1246 = vld [vmem:[%s200 + $0xd] sm:$0xff]
    %v1247 = vld [vmem:[%s200 + $0x1d] sm:$0xff]
    %v1248 = vld [vmem:[%s200 + $0x25] sm:$0xff]
    %v1249 = vstv %s1239
    %v1250 = vmul.f32 %v1249, %v1241
    %v1251 = vmul.f32 %v1249, %v1242
    %v1252 = vmul.f32 %v1249, %v1243
    %v1253 = vmul.f32 %v1249, %v1244
    %v1254 = vstv %s1240
    %v1255 = vmul.f32 %v1254, %v1245
    %v1256 = vmul.f32 %v1254, %v1246
    %v1257 = vmul.f32 %v1254, %v1247
    %v1258 = vmul.f32 %v1254, %v1248
    %v1259 = vadd.f32 %v1250, %v1255
    %v1260 = vadd.f32 %v1251, %v1256
    %v1261 = vadd.f32 %v1252, %v1257
    %v1262 = vadd.f32 %v1253, %v1258
    %v1263 = vadd.f32 %v1235, %v1259
    %v1264 = vadd.f32 %v1236, %v1260
    %v1265 = vadd.f32 %v1237, %v1261
    %v1266 = vadd.f32 %v1238, %v1262
    %s1267 = sld [smem:[#allocation8 + $0x2e]]
    %s1268 = sld [smem:[#allocation8 + $0x5f]]
    %v1269 = vld [vmem:[#allocation3 + $0x6] sm:$0xff]
    %v1270 = vld [vmem:[#allocation3 + $0xe] sm:$0xff]
    %v1271 = vld [vmem:[#allocation3 + $0x1e] sm:$0xff]
    %v1272 = vld [vmem:[#allocation3 + $0x26] sm:$0xff]
    %v1273 = vld [vmem:[%s200 + $0x6] sm:$0xff]
    %v1274 = vld [vmem:[%s200 + $0xe] sm:$0xff]
    %v1275 = vld [vmem:[%s200 + $0x1e] sm:$0xff]
    %v1276 = vld [vmem:[%s200 + $0x26] sm:$0xff]
    %v1277 = vstv %s1267
    %v1278 = vmul.f32 %v1277, %v1269
    %v1279 = vmul.f32 %v1277, %v1270
    %v1280 = vmul.f32 %v1277, %v1271
    %v1281 = vmul.f32 %v1277, %v1272
    %v1282 = vstv %s1268
    %v1283 = vmul.f32 %v1282, %v1273
    %v1284 = vmul.f32 %v1282, %v1274
    %v1285 = vmul.f32 %v1282, %v1275
    %v1286 = vmul.f32 %v1282, %v1276
    %v1287 = vadd.f32 %v1278, %v1283
    %v1288 = vadd.f32 %v1279, %v1284
    %v1289 = vadd.f32 %v1280, %v1285
    %v1290 = vadd.f32 %v1281, %v1286
    %v1291 = vadd.f32 %v1263, %v1287
    %v1292 = vadd.f32 %v1264, %v1288
    %v1293 = vadd.f32 %v1265, %v1289
    %v1294 = vadd.f32 %v1266, %v1290
    %1295 = vrot.lane.b32.xlu0 %v146, 126
    %v1296 = vpop.permute.xlu0 %1295
    %1297 = vrot.lane.b32.xlu0 %v147, 126
    %v1298 = vpop.permute.xlu0 %1297
    %1299 = vrot.lane.b32.xlu0 %v148, 126
    %v1300 = vpop.permute.xlu0 %1299
    %1301 = vrot.lane.b32.xlu0 %v149, 126
    %v1302 = vpop.permute.xlu0 %1301
    %1303 = vrot.lane.b32.xlu0 %v150, 126
    %v1304 = vpop.permute.xlu0 %1303
    %1305 = vrot.lane.b32.xlu0 %v151, 126
    %v1306 = vpop.permute.xlu0 %1305
    %1307 = vrot.lane.b32.xlu0 %v152, 126
    %v1308 = vpop.permute.xlu0 %1307
    %1309 = vrot.lane.b32.xlu0 %v153, 126
    %v1310 = vpop.permute.xlu0 %1309
    %1311 = vrot.lane.b32.xlu0 %v154, 126
    %v1312 = vpop.permute.xlu0 %1311
    %1313 = vrot.lane.b32.xlu0 %v155, 126
    %v1314 = vpop.permute.xlu0 %1313
    %1315 = vrot.lane.b32.xlu0 %v156, 126
    %v1316 = vpop.permute.xlu0 %1315
    %1317 = vrot.lane.b32.xlu0 %v157, 126
    %v1318 = vpop.permute.xlu0 %1317
    %1319 = vst [vmem:[#allocation3] sm:$0xff] %v1296
    %1320 = vst [vmem:[#allocation3 + $0x8] sm:$0xff] %v1298
    %1321 = vst [vmem:[#allocation3 + $0x10] sm:$0xff] %v1300
    %1322 = vst [vmem:[#allocation3 + $0x18] sm:$0xff] %v1302
    %1323 = vst [vmem:[#allocation3 + $0x20] sm:$0xff] %v1304
    %1324 = vst [vmem:[#allocation3 + $0x28] sm:$0xff] %v1306
    %1325 = vst [vmem:[#allocation3 + $0x30] sm:$0xff] %v1308
    %1326 = vst [vmem:[#allocation3 + $0x38] sm:$0xff] %v1310
    %1327 = vst [vmem:[#allocation3 + $0x40] sm:$0xff] %v1312
    %1328 = vst [vmem:[#allocation3 + $0x48] sm:$0xff] %v1314
    %1329 = vst [vmem:[#allocation3 + $0x50] sm:$0xff] %v1316
    %1330 = vst [vmem:[#allocation3 + $0x58] sm:$0xff] %v1318
    %s1331 = sld [smem:[#allocation8 + $0x5]]
    %s1332 = sld [smem:[#allocation8 + $0x36]]
    %v1333 = vld [vmem:[#allocation3] sm:$0xff]
    %v1334 = vld [vmem:[#allocation3 + $0x8] sm:$0xff]
    %v1335 = vld [vmem:[#allocation3 + $0x18] sm:$0xff]
    %v1336 = vld [vmem:[#allocation3 + $0x20] sm:$0xff]
    %v1337 = vld [vmem:[%s200] sm:$0xff]
    %v1338 = vld [vmem:[%s200 + $0x8] sm:$0xff]
    %v1339 = vld [vmem:[%s200 + $0x18] sm:$0xff]
    %v1340 = vld [vmem:[%s200 + $0x20] sm:$0xff]
    %v1341 = vstv %s1331
    %v1342 = vmul.f32 %v1341, %v1333
    %v1343 = vmul.f32 %v1341, %v1334
    %v1344 = vmul.f32 %v1341, %v1335
    %v1345 = vmul.f32 %v1341, %v1336
    %v1346 = vstv %s1332
    %v1347 = vmul.f32 %v1346, %v1337
    %v1348 = vmul.f32 %v1346, %v1338
    %v1349 = vmul.f32 %v1346, %v1339
    %v1350 = vmul.f32 %v1346, %v1340
    %v1351 = vadd.f32 %v1342, %v1347
    %v1352 = vadd.f32 %v1343, %v1348
    %v1353 = vadd.f32 %v1344, %v1349
    %v1354 = vadd.f32 %v1345, %v1350
    %v1355 = vadd.f32 %v1291, %v1351
    %v1356 = vadd.f32 %v1292, %v1352
    %v1357 = vadd.f32 %v1293, %v1353
    %v1358 = vadd.f32 %v1294, %v1354
    %s1359 = sld [smem:[#allocation8 + $0xc]]
    %s1360 = sld [smem:[#allocation8 + $0x3d]]
    %v1361 = vld [vmem:[#allocation3 + $0x1] sm:$0xff]
    %v1362 = vld [vmem:[#allocation3 + $0x9] sm:$0xff]
    %v1363 = vld [vmem:[#allocation3 + $0x19] sm:$0xff]
    %v1364 = vld [vmem:[#allocation3 + $0x21] sm:$0xff]
    %v1365 = vld [vmem:[%s200 + $0x1] sm:$0xff]
    %v1366 = vld [vmem:[%s200 + $0x9] sm:$0xff]
    %v1367 = vld [vmem:[%s200 + $0x19] sm:$0xff]
    %v1368 = vld [vmem:[%s200 + $0x21] sm:$0xff]
    %v1369 = vstv %s1359
    %v1370 = vmul.f32 %v1369, %v1361
    %v1371 = vmul.f32 %v1369, %v1362
    %v1372 = vmul.f32 %v1369, %v1363
    %v1373 = vmul.f32 %v1369, %v1364
    %v1374 = vstv %s1360
    %v1375 = vmul.f32 %v1374, %v1365
    %v1376 = vmul.f32 %v1374, %v1366
    %v1377 = vmul.f32 %v1374, %v1367
    %v1378 = vmul.f32 %v1374, %v1368
    %v1379 = vadd.f32 %v1370, %v1375
    %v1380 = vadd.f32 %v1371, %v1376
    %v1381 = vadd.f32 %v1372, %v1377
    %v1382 = vadd.f32 %v1373, %v1378
    %v1383 = vadd.f32 %v1355, %v1379
    %v1384 = vadd.f32 %v1356, %v1380
    %v1385 = vadd.f32 %v1357, %v1381
    %v1386 = vadd.f32 %v1358, %v1382
    %s1387 = sld [smem:[#allocation8 + $0x13]]
    %s1388 = sld [smem:[#allocation8 + $0x44]]
    %v1389 = vld [vmem:[#allocation3 + $0x2] sm:$0xff]
    %v1390 = vld [vmem:[#allocation3 + $0xa] sm:$0xff]
    %v1391 = vld [vmem:[#allocation3 + $0x1a] sm:$0xff]
    %v1392 = vld [vmem:[#allocation3 + $0x22] sm:$0xff]
    %v1393 = vld [vmem:[%s200 + $0x2] sm:$0xff]
    %v1394 = vld [vmem:[%s200 + $0xa] sm:$0xff]
    %v1395 = vld [vmem:[%s200 + $0x1a] sm:$0xff]
    %v1396 = vld [vmem:[%s200 + $0x22] sm:$0xff]
    %v1397 = vstv %s1387
    %v1398 = vmul.f32 %v1397, %v1389
    %v1399 = vmul.f32 %v1397, %v1390
    %v1400 = vmul.f32 %v1397, %v1391
    %v1401 = vmul.f32 %v1397, %v1392
    %v1402 = vstv %s1388
    %v1403 = vmul.f32 %v1402, %v1393
    %v1404 = vmul.f32 %v1402, %v1394
    %v1405 = vmul.f32 %v1402, %v1395
    %v1406 = vmul.f32 %v1402, %v1396
    %v1407 = vadd.f32 %v1398, %v1403
    %v1408 = vadd.f32 %v1399, %v1404
    %v1409 = vadd.f32 %v1400, %v1405
    %v1410 = vadd.f32 %v1401, %v1406
    %v1411 = vadd.f32 %v1383, %v1407
    %v1412 = vadd.f32 %v1384, %v1408
    %v1413 = vadd.f32 %v1385, %v1409
    %v1414 = vadd.f32 %v1386, %v1410
    %s1415 = sld [smem:[#allocation8 + $0x1a]]
    %s1416 = sld [smem:[#allocation8 + $0x4b]]
    %v1417 = vld [vmem:[#allocation3 + $0x3] sm:$0xff]
    %v1418 = vld [vmem:[#allocation3 + $0xb] sm:$0xff]
    %v1419 = vld [vmem:[#allocation3 + $0x1b] sm:$0xff]
    %v1420 = vld [vmem:[#allocation3 + $0x23] sm:$0xff]
    %v1421 = vld [vmem:[%s200 + $0x3] sm:$0xff]
    %v1422 = vld [vmem:[%s200 + $0xb] sm:$0xff]
    %v1423 = vld [vmem:[%s200 + $0x1b] sm:$0xff]
    %v1424 = vld [vmem:[%s200 + $0x23] sm:$0xff]
    %v1425 = vstv %s1415
    %v1426 = vmul.f32 %v1425, %v1417
    %v1427 = vmul.f32 %v1425, %v1418
    %v1428 = vmul.f32 %v1425, %v1419
    %v1429 = vmul.f32 %v1425, %v1420
    %v1430 = vstv %s1416
    %v1431 = vmul.f32 %v1430, %v1421
    %v1432 = vmul.f32 %v1430, %v1422
    %v1433 = vmul.f32 %v1430, %v1423
    %v1434 = vmul.f32 %v1430, %v1424
    %v1435 = vadd.f32 %v1426, %v1431
    %v1436 = vadd.f32 %v1427, %v1432
    %v1437 = vadd.f32 %v1428, %v1433
    %v1438 = vadd.f32 %v1429, %v1434
    %v1439 = vadd.f32 %v1411, %v1435
    %v1440 = vadd.f32 %v1412, %v1436
    %v1441 = vadd.f32 %v1413, %v1437
    %v1442 = vadd.f32 %v1414, %v1438
    %s1443 = sld [smem:[#allocation8 + $0x21]]
    %s1444 = sld [smem:[#allocation8 + $0x52]]
    %v1445 = vld [vmem:[#allocation3 + $0x4] sm:$0xff]
    %v1446 = vld [vmem:[#allocation3 + $0xc] sm:$0xff]
    %v1447 = vld [vmem:[#allocation3 + $0x1c] sm:$0xff]
    %v1448 = vld [vmem:[#allocation3 + $0x24] sm:$0xff]
    %v1449 = vld [vmem:[%s200 + $0x4] sm:$0xff]
    %v1450 = vld [vmem:[%s200 + $0xc] sm:$0xff]
    %v1451 = vld [vmem:[%s200 + $0x1c] sm:$0xff]
    %v1452 = vld [vmem:[%s200 + $0x24] sm:$0xff]
    %v1453 = vstv %s1443
    %v1454 = vmul.f32 %v1453, %v1445
    %v1455 = vmul.f32 %v1453, %v1446
    %v1456 = vmul.f32 %v1453, %v1447
    %v1457 = vmul.f32 %v1453, %v1448
    %v1458 = vstv %s1444
    %v1459 = vmul.f32 %v1458, %v1449
    %v1460 = vmul.f32 %v1458, %v1450
    %v1461 = vmul.f32 %v1458, %v1451
    %v1462 = vmul.f32 %v1458, %v1452
    %v1463 = vadd.f32 %v1454, %v1459
    %v1464 = vadd.f32 %v1455, %v1460
    %v1465 = vadd.f32 %v1456, %v1461
    %v1466 = vadd.f32 %v1457, %v1462
    %v1467 = vadd.f32 %v1439, %v1463
    %v1468 = vadd.f32 %v1440, %v1464
    %v1469 = vadd.f32 %v1441, %v1465
    %v1470 = vadd.f32 %v1442, %v1466
    %s1471 = sld [smem:[#allocation8 + $0x28]]
    %s1472 = sld [smem:[#allocation8 + $0x59]]
    %v1473 = vld [vmem:[#allocation3 + $0x5] sm:$0xff]
    %v1474 = vld [vmem:[#allocation3 + $0xd] sm:$0xff]
    %v1475 = vld [vmem:[#allocation3 + $0x1d] sm:$0xff]
    %v1476 = vld [vmem:[#allocation3 + $0x25] sm:$0xff]
    %v1477 = vld [vmem:[%s200 + $0x5] sm:$0xff]
    %v1478 = vld [vmem:[%s200 + $0xd] sm:$0xff]
    %v1479 = vld [vmem:[%s200 + $0x1d] sm:$0xff]
    %v1480 = vld [vmem:[%s200 + $0x25] sm:$0xff]
    %v1481 = vstv %s1471
    %v1482 = vmul.f32 %v1481, %v1473
    %v1483 = vmul.f32 %v1481, %v1474
    %v1484 = vmul.f32 %v1481, %v1475
    %v1485 = vmul.f32 %v1481, %v1476
    %v1486 = vstv %s1472
    %v1487 = vmul.f32 %v1486, %v1477
    %v1488 = vmul.f32 %v1486, %v1478
    %v1489 = vmul.f32 %v1486, %v1479
    %v1490 = vmul.f32 %v1486, %v1480
    %v1491 = vadd.f32 %v1482, %v1487
    %v1492 = vadd.f32 %v1483, %v1488
    %v1493 = vadd.f32 %v1484, %v1489
    %v1494 = vadd.f32 %v1485, %v1490
    %v1495 = vadd.f32 %v1467, %v1491
    %v1496 = vadd.f32 %v1468, %v1492
    %v1497 = vadd.f32 %v1469, %v1493
    %v1498 = vadd.f32 %v1470, %v1494
    %s1499 = sld [smem:[#allocation8 + $0x2f]]
    %s1500 = sld [smem:[#allocation8 + $0x60]]
    %v1501 = vld [vmem:[#allocation3 + $0x6] sm:$0xff]
    %v1502 = vld [vmem:[#allocation3 + $0xe] sm:$0xff]
    %v1503 = vld [vmem:[#allocation3 + $0x1e] sm:$0xff]
    %v1504 = vld [vmem:[#allocation3 + $0x26] sm:$0xff]
    %v1505 = vld [vmem:[%s200 + $0x6] sm:$0xff]
    %v1506 = vld [vmem:[%s200 + $0xe] sm:$0xff]
    %v1507 = vld [vmem:[%s200 + $0x1e] sm:$0xff]
    %v1508 = vld [vmem:[%s200 + $0x26] sm:$0xff]
    %v1509 = vstv %s1499
    %v1510 = vmul.f32 %v1509, %v1501
    %v1511 = vmul.f32 %v1509, %v1502
    %v1512 = vmul.f32 %v1509, %v1503
    %v1513 = vmul.f32 %v1509, %v1504
    %v1514 = vstv %s1500
    %v1515 = vmul.f32 %v1514, %v1505
    %v1516 = vmul.f32 %v1514, %v1506
    %v1517 = vmul.f32 %v1514, %v1507
    %v1518 = vmul.f32 %v1514, %v1508
    %v1519 = vadd.f32 %v1510, %v1515
    %v1520 = vadd.f32 %v1511, %v1516
    %v1521 = vadd.f32 %v1512, %v1517
    %v1522 = vadd.f32 %v1513, %v1518
    %v1523 = vadd.f32 %v1495, %v1519
    %v1524 = vadd.f32 %v1496, %v1520
    %v1525 = vadd.f32 %v1497, %v1521
    %v1526 = vadd.f32 %v1498, %v1522
    %1527 = vrot.lane.b32.xlu0 %v146, 125
    %v1528 = vpop.permute.xlu0 %1527
    %1529 = vrot.lane.b32.xlu0 %v147, 125
    %v1530 = vpop.permute.xlu0 %1529
    %1531 = vrot.lane.b32.xlu0 %v148, 125
    %v1532 = vpop.permute.xlu0 %1531
    %1533 = vrot.lane.b32.xlu0 %v149, 125
    %v1534 = vpop.permute.xlu0 %1533
    %1535 = vrot.lane.b32.xlu0 %v150, 125
    %v1536 = vpop.permute.xlu0 %1535
    %1537 = vrot.lane.b32.xlu0 %v151, 125
    %v1538 = vpop.permute.xlu0 %1537
    %1539 = vrot.lane.b32.xlu0 %v152, 125
    %v1540 = vpop.permute.xlu0 %1539
    %1541 = vrot.lane.b32.xlu0 %v153, 125
    %v1542 = vpop.permute.xlu0 %1541
    %1543 = vrot.lane.b32.xlu0 %v154, 125
    %v1544 = vpop.permute.xlu0 %1543
    %1545 = vrot.lane.b32.xlu0 %v155, 125
    %v1546 = vpop.permute.xlu0 %1545
    %1547 = vrot.lane.b32.xlu0 %v156, 125
    %v1548 = vpop.permute.xlu0 %1547
    %1549 = vrot.lane.b32.xlu0 %v157, 125
    %v1550 = vpop.permute.xlu0 %1549
    %1551 = vst [vmem:[#allocation3] sm:$0xff] %v1528
    %1552 = vst [vmem:[#allocation3 + $0x8] sm:$0xff] %v1530
    %1553 = vst [vmem:[#allocation3 + $0x10] sm:$0xff] %v1532
    %1554 = vst [vmem:[#allocation3 + $0x18] sm:$0xff] %v1534
    %1555 = vst [vmem:[#allocation3 + $0x20] sm:$0xff] %v1536
    %1556 = vst [vmem:[#allocation3 + $0x28] sm:$0xff] %v1538
    %1557 = vst [vmem:[#allocation3 + $0x30] sm:$0xff] %v1540
    %1558 = vst [vmem:[#allocation3 + $0x38] sm:$0xff] %v1542
    %1559 = vst [vmem:[#allocation3 + $0x40] sm:$0xff] %v1544
    %1560 = vst [vmem:[#allocation3 + $0x48] sm:$0xff] %v1546
    %1561 = vst [vmem:[#allocation3 + $0x50] sm:$0xff] %v1548
    %1562 = vst [vmem:[#allocation3 + $0x58] sm:$0xff] %v1550
    %s1563 = sld [smem:[#allocation8 + $0x6]]
    %s1564 = sld [smem:[#allocation8 + $0x37]]
    %v1565 = vld [vmem:[#allocation3] sm:$0xff]
    %v1566 = vld [vmem:[#allocation3 + $0x8] sm:$0xff]
    %v1567 = vld [vmem:[#allocation3 + $0x18] sm:$0xff]
    %v1568 = vld [vmem:[#allocation3 + $0x20] sm:$0xff]
    %v1569 = vld [vmem:[%s200] sm:$0xff]
    %v1570 = vld [vmem:[%s200 + $0x8] sm:$0xff]
    %v1571 = vld [vmem:[%s200 + $0x18] sm:$0xff]
    %v1572 = vld [vmem:[%s200 + $0x20] sm:$0xff]
    %v1573 = vstv %s1563
    %v1574 = vmul.f32 %v1573, %v1565
    %v1575 = vmul.f32 %v1573, %v1566
    %v1576 = vmul.f32 %v1573, %v1567
    %v1577 = vmul.f32 %v1573, %v1568
    %v1578 = vstv %s1564
    %v1579 = vmul.f32 %v1578, %v1569
    %v1580 = vmul.f32 %v1578, %v1570
    %v1581 = vmul.f32 %v1578, %v1571
    %v1582 = vmul.f32 %v1578, %v1572
    %v1583 = vadd.f32 %v1574, %v1579
    %v1584 = vadd.f32 %v1575, %v1580
    %v1585 = vadd.f32 %v1576, %v1581
    %v1586 = vadd.f32 %v1577, %v1582
    %v1587 = vadd.f32 %v1523, %v1583
    %v1588 = vadd.f32 %v1524, %v1584
    %v1589 = vadd.f32 %v1525, %v1585
    %v1590 = vadd.f32 %v1526, %v1586
    %s1591 = sld [smem:[#allocation8 + $0xd]]
    %s1592 = sld [smem:[#allocation8 + $0x3e]]
    %v1593 = vld [vmem:[#allocation3 + $0x1] sm:$0xff]
    %v1594 = vld [vmem:[#allocation3 + $0x9] sm:$0xff]
    %v1595 = vld [vmem:[#allocation3 + $0x19] sm:$0xff]
    %v1596 = vld [vmem:[#allocation3 + $0x21] sm:$0xff]
    %v1597 = vld [vmem:[%s200 + $0x1] sm:$0xff]
    %v1598 = vld [vmem:[%s200 + $0x9] sm:$0xff]
    %v1599 = vld [vmem:[%s200 + $0x19] sm:$0xff]
    %v1600 = vld [vmem:[%s200 + $0x21] sm:$0xff]
    %v1601 = vstv %s1591
    %v1602 = vmul.f32 %v1601, %v1593
    %v1603 = vmul.f32 %v1601, %v1594
    %v1604 = vmul.f32 %v1601, %v1595
    %v1605 = vmul.f32 %v1601, %v1596
    %v1606 = vstv %s1592
    %v1607 = vmul.f32 %v1606, %v1597
    %v1608 = vmul.f32 %v1606, %v1598
    %v1609 = vmul.f32 %v1606, %v1599
    %v1610 = vmul.f32 %v1606, %v1600
    %v1611 = vadd.f32 %v1602, %v1607
    %v1612 = vadd.f32 %v1603, %v1608
    %v1613 = vadd.f32 %v1604, %v1609
    %v1614 = vadd.f32 %v1605, %v1610
    %v1615 = vadd.f32 %v1587, %v1611
    %v1616 = vadd.f32 %v1588, %v1612
    %v1617 = vadd.f32 %v1589, %v1613
    %v1618 = vadd.f32 %v1590, %v1614
    %s1619 = sld [smem:[#allocation8 + $0x14]]
    %s1620 = sld [smem:[#allocation8 + $0x45]]
    %v1621 = vld [vmem:[#allocation3 + $0x2] sm:$0xff]
    %v1622 = vld [vmem:[#allocation3 + $0xa] sm:$0xff]
    %v1623 = vld [vmem:[#allocation3 + $0x1a] sm:$0xff]
    %v1624 = vld [vmem:[#allocation3 + $0x22] sm:$0xff]
    %v1625 = vld [vmem:[%s200 + $0x2] sm:$0xff]
    %v1626 = vld [vmem:[%s200 + $0xa] sm:$0xff]
    %v1627 = vld [vmem:[%s200 + $0x1a] sm:$0xff]
    %v1628 = vld [vmem:[%s200 + $0x22] sm:$0xff]
    %v1629 = vstv %s1619
    %v1630 = vmul.f32 %v1629, %v1621
    %v1631 = vmul.f32 %v1629, %v1622
    %v1632 = vmul.f32 %v1629, %v1623
    %v1633 = vmul.f32 %v1629, %v1624
    %v1634 = vstv %s1620
    %v1635 = vmul.f32 %v1634, %v1625
    %v1636 = vmul.f32 %v1634, %v1626
    %v1637 = vmul.f32 %v1634, %v1627
    %v1638 = vmul.f32 %v1634, %v1628
    %v1639 = vadd.f32 %v1630, %v1635
    %v1640 = vadd.f32 %v1631, %v1636
    %v1641 = vadd.f32 %v1632, %v1637
    %v1642 = vadd.f32 %v1633, %v1638
    %v1643 = vadd.f32 %v1615, %v1639
    %v1644 = vadd.f32 %v1616, %v1640
    %v1645 = vadd.f32 %v1617, %v1641
    %v1646 = vadd.f32 %v1618, %v1642
    %s1647 = sld [smem:[#allocation8 + $0x1b]]
    %s1648 = sld [smem:[#allocation8 + $0x4c]]
    %v1649 = vld [vmem:[#allocation3 + $0x3] sm:$0xff]
    %v1650 = vld [vmem:[#allocation3 + $0xb] sm:$0xff]
    %v1651 = vld [vmem:[#allocation3 + $0x1b] sm:$0xff]
    %v1652 = vld [vmem:[#allocation3 + $0x23] sm:$0xff]
    %v1653 = vld [vmem:[%s200 + $0x3] sm:$0xff]
    %v1654 = vld [vmem:[%s200 + $0xb] sm:$0xff]
    %v1655 = vld [vmem:[%s200 + $0x1b] sm:$0xff]
    %v1656 = vld [vmem:[%s200 + $0x23] sm:$0xff]
    %v1657 = vstv %s1647
    %v1658 = vmul.f32 %v1657, %v1649
    %v1659 = vmul.f32 %v1657, %v1650
    %v1660 = vmul.f32 %v1657, %v1651
    %v1661 = vmul.f32 %v1657, %v1652
    %v1662 = vstv %s1648
    %v1663 = vmul.f32 %v1662, %v1653
    %v1664 = vmul.f32 %v1662, %v1654
    %v1665 = vmul.f32 %v1662, %v1655
    %v1666 = vmul.f32 %v1662, %v1656
    %v1667 = vadd.f32 %v1658, %v1663
    %v1668 = vadd.f32 %v1659, %v1664
    %v1669 = vadd.f32 %v1660, %v1665
    %v1670 = vadd.f32 %v1661, %v1666
    %v1671 = vadd.f32 %v1643, %v1667
    %v1672 = vadd.f32 %v1644, %v1668
    %v1673 = vadd.f32 %v1645, %v1669
    %v1674 = vadd.f32 %v1646, %v1670
    %s1675 = sld [smem:[#allocation8 + $0x22]]
    %s1676 = sld [smem:[#allocation8 + $0x53]]
    %v1677 = vld [vmem:[#allocation3 + $0x4] sm:$0xff]
    %v1678 = vld [vmem:[#allocation3 + $0xc] sm:$0xff]
    %v1679 = vld [vmem:[#allocation3 + $0x1c] sm:$0xff]
    %v1680 = vld [vmem:[#allocation3 + $0x24] sm:$0xff]
    %v1681 = vld [vmem:[%s200 + $0x4] sm:$0xff]
    %v1682 = vld [vmem:[%s200 + $0xc] sm:$0xff]
    %v1683 = vld [vmem:[%s200 + $0x1c] sm:$0xff]
    %v1684 = vld [vmem:[%s200 + $0x24] sm:$0xff]
    %v1685 = vstv %s1675
    %v1686 = vmul.f32 %v1685, %v1677
    %v1687 = vmul.f32 %v1685, %v1678
    %v1688 = vmul.f32 %v1685, %v1679
    %v1689 = vmul.f32 %v1685, %v1680
    %v1690 = vstv %s1676
    %v1691 = vmul.f32 %v1690, %v1681
    %v1692 = vmul.f32 %v1690, %v1682
    %v1693 = vmul.f32 %v1690, %v1683
    %v1694 = vmul.f32 %v1690, %v1684
    %v1695 = vadd.f32 %v1686, %v1691
    %v1696 = vadd.f32 %v1687, %v1692
    %v1697 = vadd.f32 %v1688, %v1693
    %v1698 = vadd.f32 %v1689, %v1694
    %v1699 = vadd.f32 %v1671, %v1695
    %v1700 = vadd.f32 %v1672, %v1696
    %v1701 = vadd.f32 %v1673, %v1697
    %v1702 = vadd.f32 %v1674, %v1698
    %s1703 = sld [smem:[#allocation8 + $0x29]]
    %s1704 = sld [smem:[#allocation8 + $0x5a]]
    %v1705 = vld [vmem:[#allocation3 + $0x5] sm:$0xff]
    %v1706 = vld [vmem:[#allocation3 + $0xd] sm:$0xff]
    %v1707 = vld [vmem:[#allocation3 + $0x1d] sm:$0xff]
    %v1708 = vld [vmem:[#allocation3 + $0x25] sm:$0xff]
    %v1709 = vld [vmem:[%s200 + $0x5] sm:$0xff]
    %v1710 = vld [vmem:[%s200 + $0xd] sm:$0xff]
    %v1711 = vld [vmem:[%s200 + $0x1d] sm:$0xff]
    %v1712 = vld [vmem:[%s200 + $0x25] sm:$0xff]
    %v1713 = vstv %s1703
    %v1714 = vmul.f32 %v1713, %v1705
    %v1715 = vmul.f32 %v1713, %v1706
    %v1716 = vmul.f32 %v1713, %v1707
    %v1717 = vmul.f32 %v1713, %v1708
    %v1718 = vstv %s1704
    %v1719 = vmul.f32 %v1718, %v1709
    %v1720 = vmul.f32 %v1718, %v1710
    %v1721 = vmul.f32 %v1718, %v1711
    %v1722 = vmul.f32 %v1718, %v1712
    %v1723 = vadd.f32 %v1714, %v1719
    %v1724 = vadd.f32 %v1715, %v1720
    %v1725 = vadd.f32 %v1716, %v1721
    %v1726 = vadd.f32 %v1717, %v1722
    %v1727 = vadd.f32 %v1699, %v1723
    %v1728 = vadd.f32 %v1700, %v1724
    %v1729 = vadd.f32 %v1701, %v1725
    %v1730 = vadd.f32 %v1702, %v1726
    %s1731 = sld [smem:[#allocation8 + $0x30]]
    %s1732 = sld [smem:[#allocation8 + $0x61]]
    %v1733 = vld [vmem:[#allocation3 + $0x6] sm:$0xff]
    %v1734 = vld [vmem:[#allocation3 + $0xe] sm:$0xff]
    %v1735 = vld [vmem:[#allocation3 + $0x1e] sm:$0xff]
    %v1736 = vld [vmem:[#allocation3 + $0x26] sm:$0xff]
    %v1737 = vld [vmem:[%s200 + $0x6] sm:$0xff]
    %v1738 = vld [vmem:[%s200 + $0xe] sm:$0xff]
    %v1739 = vld [vmem:[%s200 + $0x1e] sm:$0xff]
    %v1740 = vld [vmem:[%s200 + $0x26] sm:$0xff]
    %v1741 = vstv %s1731
    %v1742 = vmul.f32 %v1741, %v1733
    %v1743 = vmul.f32 %v1741, %v1734
    %v1744 = vmul.f32 %v1741, %v1735
    %v1745 = vmul.f32 %v1741, %v1736
    %v1746 = vstv %s1732
    %v1747 = vmul.f32 %v1746, %v1737
    %v1748 = vmul.f32 %v1746, %v1738
    %v1749 = vmul.f32 %v1746, %v1739
    %v1750 = vmul.f32 %v1746, %v1740
    %v1751 = vadd.f32 %v1742, %v1747
    %v1752 = vadd.f32 %v1743, %v1748
    %v1753 = vadd.f32 %v1744, %v1749
    %v1754 = vadd.f32 %v1745, %v1750
    %v1755 = vadd.f32 %v1727, %v1751
    %v1756 = vadd.f32 %v1728, %v1752
    %v1757 = vadd.f32 %v1729, %v1753
    %v1758 = vadd.f32 %v1730, %v1754
    %v1759 = vxor.u32 %v1755, 2147483648
    %v1760 = vxor.u32 %v1756, 2147483648
    %v1761 = vxor.u32 %v1757, 2147483648
    %v1762 = vxor.u32 %v1758, 2147483648
    %v1763 = vmul.f32 %v1759, 1.442695
    %v1764 = vpow.pop %v1763
    %v1765 = vmul.f32 %v1760, 1.442695
    %v1766 = vpow.pop %v1765
    %v1767 = vmul.f32 %v1761, 1.442695
    %v1768 = vpow.pop %v1767
    %v1769 = vmul.f32 %v1762, 1.442695
    %v1770 = vpow.pop %v1769
    %v1771 = vadd.f32 %v1764, 1.0
    %v1772 = vadd.f32 %v1766, 1.0
    %v1773 = vadd.f32 %v1768, 1.0
    %v1774 = vadd.f32 %v1770, 1.0
    %v1775 = vrcp.pop %v1771
    %v1776 = vmul.f32 %v1771, %v1775
    %v1777 = vsub.f32 1.0, %v1776
    %v1778 = vmul.f32 %v1775, %v1777
    %v1779 = vadd.f32 %v1775, %v1778
    %vm1780 = vweird.f32 %v1771
    %vm1781 = vweird.f32 %v1775
    %vm1782 = vmor %vm1780, %vm1781
    %v1783 = vsel %vm1782, %v1775, %v1779
    %v1784 = vand.u32 2147483647, %v1771
    %vm1785 = vcmp.eq.f32.partialorder %v1784, 8.507059e+37
    %v1786 = vand.u32 %v1771, 2147483648
    %v1787 = vor.u32 1.1754944e-38, %v1786
    %v1788 = vsel %vm1785, %v1787, %v1783
    %v1789 = vmul.f32 1.0, %v1788
    %v1790 = vrcp.pop %v1772
    %v1791 = vmul.f32 %v1772, %v1790
    %v1792 = vsub.f32 1.0, %v1791
    %v1793 = vmul.f32 %v1790, %v1792
    %v1794 = vadd.f32 %v1790, %v1793
    %vm1795 = vweird.f32 %v1772
    %vm1796 = vweird.f32 %v1790
    %vm1797 = vmor %vm1795, %vm1796
    %v1798 = vsel %vm1797, %v1790, %v1794
    %v1799 = vand.u32 2147483647, %v1772
    %vm1800 = vcmp.eq.f32.partialorder %v1799, 8.507059e+37
    %v1801 = vand.u32 %v1772, 2147483648
    %v1802 = vor.u32 1.1754944e-38, %v1801
    %v1803 = vsel %vm1800, %v1802, %v1798
    %v1804 = vmul.f32 1.0, %v1803
    %v1805 = vrcp.pop %v1773
    %v1806 = vmul.f32 %v1773, %v1805
    %v1807 = vsub.f32 1.0, %v1806
    %v1808 = vmul.f32 %v1805, %v1807
    %v1809 = vadd.f32 %v1805, %v1808
    %vm1810 = vweird.f32 %v1773
    %vm1811 = vweird.f32 %v1805
    %vm1812 = vmor %vm1810, %vm1811
    %v1813 = vsel %vm1812, %v1805, %v1809
    %v1814 = vand.u32 2147483647, %v1773
    %vm1815 = vcmp.eq.f32.partialorder %v1814, 8.507059e+37
    %v1816 = vand.u32 %v1773, 2147483648
    %v1817 = vor.u32 1.1754944e-38, %v1816
    %v1818 = vsel %vm1815, %v1817, %v1813
    %v1819 = vmul.f32 1.0, %v1818
    %v1820 = vrcp.pop %v1774
    %v1821 = vmul.f32 %v1774, %v1820
    %v1822 = vsub.f32 1.0, %v1821
    %v1823 = vmul.f32 %v1820, %v1822
    %v1824 = vadd.f32 %v1820, %v1823
    %vm1825 = vweird.f32 %v1774
    %vm1826 = vweird.f32 %v1820
    %vm1827 = vmor %vm1825, %vm1826
    %v1828 = vsel %vm1827, %v1820, %v1824
    %v1829 = vand.u32 2147483647, %v1774
    %vm1830 = vcmp.eq.f32.partialorder %v1829, 8.507059e+37
    %v1831 = vand.u32 %v1774, 2147483648
    %v1832 = vor.u32 1.1754944e-38, %v1831
    %v1833 = vsel %vm1830, %v1832, %v1828
    %v1834 = vmul.f32 1.0, %v1833
    %1835 = vst.msk [vmem:[#allocation9] sm:$0xff] %vm57, %v1789
    %1836 = vst.msk [vmem:[#allocation9 + $0x8] sm:$0xff] %vm57, %v1804
    %1837 = vst.msk [vmem:[#allocation9 + $0x10] sm:$0xff] %vm57, %v1819
    %1838 = vst.msk [vmem:[#allocation9 + $0x18] sm:$0xff] %vm57, %v1834
    // Predicated region
    $region18: #{tpu_custom_call.1} parent=1 // pred_check
      _
    $region19: #{tpu_custom_call.1} parent=1 // pred_check_branch
      %1840 = sbr.rel (0) target = $region21
    $region20: #{tpu_custom_call.1} parent=1 // pred_region
      %1842 = vsyncadd [#allocation6], 0
      %s1843 = sshll.u32 [#allocation9], 4
      %s1844 = int_to_ptr.vmem [resolvable:$true] %s1843
      %s1845 = sshll.u32 %s2, 4
      %s1846 = int_to_ptr.hbm [resolvable:$true] %s1845
      %1851 = dma.vmem_to_hbm [thread:$0]  %s1844, 512, %s1846, [#allocation6], 128, 128, 8
    $region21: #{tpu_custom_call.1} parent=1 // pred_fallthru
      _
    // Predicated region
    $region22: #{tpu_custom_call.1} parent=1 // pred_check
      _
    $region23: #{tpu_custom_call.1} parent=1 // pred_check_branch
      %1853 = sbr.rel (0) target = $region25
    $region24: #{tpu_custom_call.1} parent=1 // pred_region
      %1855 = dma.done [#allocation6], 512
    $region25: #{tpu_custom_call.1} parent=1 // pred_fallthru
      _
    %1856 = vsyncpa [#allocation5], 1
    %1857 = vsyncpa [#allocation6], 1
    %1858 = vsyncpa [#allocation7], 1

</llo_original>
